<compile_context>
chip_gen: v7x
topology: tpu7x:2x2x1
jax: 0.10.0
libtpu: 0.0.40
codegen_flags: <defaults>
</compile_context>

<pallas_src>
import jax
import jax.numpy as jnp
from jax import lax
from jax.experimental import pallas as pl
from jax.experimental.pallas import tpu as pltpu


def _make_kernel(T, BT, D, E, H):
    """Kernel for static dims; BT is the (sublane-padded) batch tile."""
    H2, H6 = 2 * H, 6 * H
    E2, E4 = 2 * E, 4 * E
    UNROLL = T if T <= 8 else 8           # cap unroll for large T (vreg pressure)

    def sigmoid(x):
        # Exact sigmoid, a single EUP op on the serial dependence chain.
        return 0.5 * jnp.tanh(0.5 * x) + 0.5

    def kernel(x_ref, len_ref, noise_ref,
               wih_ref, bgi_ref, wblk_ref, bhn_ref,
               wdec_ref, bdec_ref, wz_ref,
               packed_ref, ho_ref,
               gi_scr, h_scr, h_st, pre_a, pre_b, zprev):
        lens_i = len_ref[:, 0:1]                                   # (BT,1) int32
        lens_f = jnp.maximum(lens_i.astype(jnp.float32), 1.0)      # guard len==0 pads
        max_t = jnp.max(len_ref[:, 1:2])                           # GLOBAL max length

        # Hoisted lane-half masks (fwd lanes vs bwd lanes of the packed layout).
        lane2 = lax.broadcasted_iota(jnp.int32, (1, H2), 1)
        fwd2 = lane2 < H                                           # (1, 2H) bool
        lane6 = lax.broadcasted_iota(jnp.int32, (1, H6), 1)
        fwd6 = (lane6 % H2) < H                                    # (1, 6H) bool

        # ---- hoisted input projection, both directions, interleaved gates ----
        x2 = x_ref[...].reshape(T * BT, D)
        gi = (jnp.dot(x2, wih_ref[...], preferred_element_type=jnp.float32)
              + bgi_ref[...])                                      # (T*BT, 6H)
        gi_scr[...] = gi.reshape(T, BT, H6)

        wblk = wblk_ref[...]                                       # (2H, 6H) block-diag
        bhn = bhn_ref[...]                                         # (1, 2H)
        h_st[...] = jnp.zeros_like(h_st)

        # ---- fused fwd+bwd GRU recurrence: ONE MXU push / step, dense stores --
        def gru_body(t, carry):
            tb = T - 1 - t
            h = h_st[...]                                          # (BT, 2H) = [hf|hb]
            # merged input-proj row: fwd lanes from time t, bwd lanes from tb
            g = jnp.where(fwd6, gi_scr[t], gi_scr[tb])             # (BT, 6H)
            gh = jnp.dot(h, wblk, preferred_element_type=jnp.float32)  # (BT, 6H)
            r = sigmoid(g[:, 0:H2] + gh[:, 0:H2])
            z = sigmoid(g[:, H2:2 * H2] + gh[:, H2:2 * H2])
            n = jnp.tanh(g[:, 2 * H2:3 * H2]
                         + r * (gh[:, 2 * H2:3 * H2] + bhn))
            h_new = (1.0 - z) * n + z * h

            m_f = lens_i > t                                       # (BT,1) bool
            m_b = lens_i > tb
            mcat = jnp.logical_or(jnp.logical_and(fwd2, m_f),
                                  jnp.logical_and(jnp.logical_not(fwd2), m_b))
            h_st[...] = jnp.where(mcat, h_new, h)
            # pad_packed_sequence zero-pads: invalid lanes stored as zeros.
            h_scr[t] = jnp.where(mcat, h_new, jnp.zeros_like(h_new))
            return carry

        lax.fori_loop(0, T, gru_body, 0, unroll=UNROLL)

        # ---- length-normalized mean pool (sum is permutation-invariant) ------
        sums = jnp.sum(h_scr[...], axis=0)                         # (BT, 2H)
        ho_ref[...] = (sums[:, :H] + sums[:, H:]) / (2.0 * lens_f)

        # ---- hoisted decoder projection ---------------------------------------
        # h_scr rows are iteration-indexed [hf(t) | hb(T-1-t)]; with
        # wdec = [[Whf | 0], [0 | Whb]]:
        #   pre[:, :2E] = hf(t)     @ Whf + b_fc   (time-aligned)
        #   pre[:, 2E:] = hb(T-1-t) @ Whb          (time-reversed)
        hflat = h_scr[...].reshape(T * BT, H2)
        pre = (jnp.dot(hflat, wdec_ref[...], preferred_element_type=jnp.float32)
               + bdec_ref[...]).reshape(T, BT, E4)
        pre_a[...] = pre[:, :, :E2]
        pre_b[...] = pre[:, :, E2:]

        wz = wz_ref[...]                                            # (E, 2E)
        zprev[...] = jnp.zeros_like(zprev)

        # ---- recurrent decoder: one MXU push + one dense output store / step --
        def dec_body(t, carry):
            zp = zprev[...]                                         # (BT, E)
            out = (pre_a[t] + pre_b[T - 1 - t]
                   + jnp.dot(zp, wz, preferred_element_type=jnp.float32))  # (BT,2E)
            mean = out[:, :E]
            logv = out[:, E:]
            std = jnp.exp(0.5 * logv)
            zt = mean + noise_ref[t] * std
            valid = t < max_t                   # torch loop runs max(lengths) steps
            row = jnp.concatenate([out, zt, std], axis=-1)          # (BT, 4E) dense
            packed_ref[t] = jnp.where(valid, row, jnp.zeros_like(row))
            zprev[...] = zt
            return carry

        lax.fori_loop(0, T, dec_body, 0, unroll=UNROLL)

    return kernel


def _prep_kernel_weights(params, E, H):
    """PyTorch-layout params -> packed / block-diagonal kernel layouts."""

    def gate_t(w, g):   # rows [gH:(g+1)H] of a torch (3H, in) weight -> (in, H)
        return w[g * H:(g + 1) * H, :].T

    def bgate(b, g):
        return b[g * H:(g + 1) * H]

    w_ih_f, w_hh_f = params["w_ih_f"], params["w_hh_f"]
    w_ih_b, w_hh_b = params["w_ih_b"], params["w_hh_b"]
    b_ih_f, b_hh_f = params["b_ih_f"], params["b_hh_f"]
    b_ih_b, b_hh_b = params["b_ih_b"], params["b_hh_b"]

    # Input projection, interleaved gate columns [f_r|b_r|f_z|b_z|f_n|b_n].
    wih6 = jnp.concatenate(
        [gate_t(w_ih_f, 0), gate_t(w_ih_b, 0),
         gate_t(w_ih_f, 1), gate_t(w_ih_b, 1),
         gate_t(w_ih_f, 2), gate_t(w_ih_b, 2)], axis=1)              # (D, 6H)
    # Fold b_ih (+ b_hh for r/z); the n-gate hidden bias stays separate.
    bgi6 = jnp.concatenate(
        [bgate(b_ih_f, 0) + bgate(b_hh_f, 0), bgate(b_ih_b, 0) + bgate(b_hh_b, 0),
         bgate(b_ih_f, 1) + bgate(b_hh_f, 1), bgate(b_ih_b, 1) + bgate(b_hh_b, 1),
         bgate(b_ih_f, 2), bgate(b_ih_b, 2)]).reshape(1, 6 * H)

    # Block-diagonal recurrent weight: columns [r | z | n], each 2H wide.
    zhh = jnp.zeros((H, H), jnp.float32)

    def blk(g):
        top = jnp.concatenate([gate_t(w_hh_f, g), zhh], axis=1)     # rows 0:H
        bot = jnp.concatenate([zhh, gate_t(w_hh_b, g)], axis=1)     # rows H:2H
        return jnp.concatenate([top, bot], axis=0)                  # (2H, 2H)

    wblk = jnp.concatenate([blk(0), blk(1), blk(2)], axis=1)        # (2H, 6H)
    bhn = jnp.concatenate([bgate(b_hh_f, 2), bgate(b_hh_b, 2)]).reshape(1, 2 * H)

    # fc1_out: Linear(2H + E -> 2E), torch weight (2E, 2H+E), cat order [hf|hb|z].
    w_fc, b_fc = params["w_fc"], params["b_fc"]
    w_hf = w_fc[:, :H].T                     # (H, 2E)
    w_hb = w_fc[:, H:2 * H].T                # (H, 2E)
    z2 = jnp.zeros((H, 2 * E), jnp.float32)
    wdec = jnp.concatenate(
        [jnp.concatenate([w_hf, z2], axis=1),       # rows 0:H  -> [Whf | 0]
         jnp.concatenate([z2, w_hb], axis=1)],      # rows H:2H -> [0 | Whb]
        axis=0)                                      # (2H, 4E)
    bdec = jnp.concatenate([b_fc, jnp.zeros((2 * E,), jnp.float32)]).reshape(1, 4 * E)
    wz = w_fc[:, 2 * H:].T                   # (E, 2E)
    return (wih6, bgi6, wblk, bhn, wdec, bdec, wz)


def text_encoder_mask_forward(params, x_ids, lengths, noise_key, batch_tile=8):
    """JAX/Pallas equivalent of TextEncoderMask.forward (posHidden=None, use_pos=False)."""
    emb_table = params["emb"]
    B, T = x_ids.shape
    D = emb_table.shape[1]
    H = params["w_hh_f"].shape[1]
    E = params["b_fc"].shape[0] // 2

    # Pad the batch to a multiple of the batch tile; padded rows get length 0
    # and are dropped after the kernel.
    BT = batch_tile
    Bp = ((B + BT - 1) // BT) * BT
    pad = Bp - B
    x_ids_p = jnp.pad(x_ids, ((0, pad), (0, 0)))
    lens_p = jnp.pad(lengths.astype(jnp.int32), (0, pad))
    maxlen = jnp.max(lens_p)
    lens2 = jnp.concatenate(
        [lens_p.reshape(Bp, 1),
         jnp.broadcast_to(maxlen, (Bp, 1)).astype(jnp.int32)], axis=1)   # (Bp, 2)

    # Glue (plain JAX/XLA): time-major embedding gather + reparam noise.
    x_emb = jnp.take(emb_table, x_ids_p.T, axis=0)                 # (T, Bp, D), no transpose
    noise = jax.random.normal(noise_key, (T, Bp, E), dtype=jnp.float32)

    weights = _prep_kernel_weights(params, E, H)
    kernel = _make_kernel(T, BT, D, E, H)
    grid = (Bp // BT,)

    in_specs = [
        pl.BlockSpec((T, BT, D), lambda b: (0, b, 0)),             # x (time-major)
        pl.BlockSpec((BT, 2), lambda b: (b, 0)),                   # [len | global max]
        pl.BlockSpec((T, BT, E), lambda b: (0, b, 0)),             # noise
        pl.BlockSpec((D, 6 * H), lambda b: (0, 0)),                # wih6
        pl.BlockSpec((1, 6 * H), lambda b: (0, 0)),                # bgi6
        pl.BlockSpec((2 * H, 6 * H), lambda b: (0, 0)),            # wblk (block-diag)
        pl.BlockSpec((1, 2 * H), lambda b: (0, 0)),                # bhn
        pl.BlockSpec((2 * H, 4 * E), lambda b: (0, 0)),            # wdec
        pl.BlockSpec((1, 4 * E), lambda b: (0, 0)),                # bdec
        pl.BlockSpec((E, 2 * E), lambda b: (0, 0)),                # wz
    ]
    out_shapes = (
        jax.ShapeDtypeStruct((T, Bp, 4 * E), jnp.float32),         # packed [mean|logv|z|pad]
        jax.ShapeDtypeStruct((Bp, H), jnp.float32),                # hidden_o
    )
    out_specs = (
        pl.BlockSpec((T, BT, 4 * E), lambda b: (0, b, 0)),
        pl.BlockSpec((BT, H), lambda b: (b, 0)),
    )
    scratch = [
        pltpu.VMEM((T, BT, 6 * H), jnp.float32),   # gi (hoisted input proj)
        pltpu.VMEM((T, BT, 2 * H), jnp.float32),   # packed GRU outputs (iter-indexed)
        pltpu.VMEM((BT, 2 * H), jnp.float32),      # packed hidden carry
        pltpu.VMEM((T, BT, 2 * E), jnp.float32),   # decoder pre (fwd, time-aligned)
        pltpu.VMEM((T, BT, 2 * E), jnp.float32),   # decoder pre (bwd, time-reversed)
        pltpu.VMEM((BT, E), jnp.float32),          # z_{t-1} carry
    ]

    packed, hidden_o = pl.pallas_call(
        kernel,
        out_shape=out_shapes,
        grid=grid,
        in_specs=in_specs,
        out_specs=out_specs,
        scratch_shapes=scratch,
        compiler_params=pltpu.CompilerParams(
            dimension_semantics=("parallel",),
            vmem_limit_bytes=32 * 1024 * 1024),
    )(x_emb, lens2, noise, *weights)

    # Back to PyTorch batch_first layout, split the packed output, drop pad rows.
    packed_b = jnp.transpose(packed, (1, 0, 2))[:B]
    means = packed_b[:, :, :E]
    logs = packed_b[:, :, E:2 * E]
    z = packed_b[:, :, 2 * E:3 * E]
    return means, logs, z, hidden_o[:B]


def init_params(key, vocab_size, word_dim, embed_size, mask_hidden_size):
    """Deterministic synthetic parameters in PyTorch layouts (nn.Embedding/nn.GRU/nn.Linear)."""
    D, E, H = word_dim, embed_size, mask_hidden_size
    ks = jax.random.split(key, 12)
    s = 0.1

    def rnd(k, shape):
        return s * jax.random.normal(k, shape, dtype=jnp.float32)

    return {
        "emb": rnd(ks[0], (vocab_size, D)),
        # nn.GRU parameters, gate order (r, z, n), forward + reverse directions.
        "w_ih_f": rnd(ks[1], (3 * H, D)),
        "w_hh_f": rnd(ks[2], (3 * H, H)),
        "b_ih_f": rnd(ks[3], (3 * H,)),
        "b_hh_f": rnd(ks[4], (3 * H,)),
        "w_ih_b": rnd(ks[5], (3 * H, D)),
        "w_hh_b": rnd(ks[6], (3 * H, H)),
        "b_ih_b": rnd(ks[7], (3 * H,)),
        "b_hh_b": rnd(ks[8], (3 * H,)),
        # fc1_out (use_pos=False): Linear(E + 2H -> 2E); torch weight (2E, 2H+E),
        # input cat order [hidden_f | hidden_b | z_{t-1}].
        "w_fc": rnd(ks[9], (2 * E, 2 * H + E)),
        "b_fc": rnd(ks[10], (2 * E,)),
    }


if __name__ == "__main__":
    # Small shapes consistent with the module (2H == 128 lanes for H=64).
    VOCAB = 50
    WORD_DIM = 32       # word_dim
    EMBED = 32          # embed_size
    HID = 64            # mask_hidden_size
    MAXLEN = 8          # maxlength (== input seq length here)
    B = 4

    root = jax.random.PRNGKey(0)
    k_param, k_ids, k_noise = jax.random.split(root, 3)

    params = init_params(k_param, VOCAB, WORD_DIM, EMBED, HID)
    x_ids = jax.random.randint(k_ids, (B, MAXLEN), 0, VOCAB, dtype=jnp.int32)
    lengths = jnp.array([8, 5, 3, 6], dtype=jnp.int32)

    means, logs, z, hidden_o = text_encoder_mask_forward(params, x_ids, lengths, k_noise)
    jax.block_until_ready((means, logs, z, hidden_o))

    assert means.shape == (B, MAXLEN, EMBED)
    assert logs.shape == (B, MAXLEN, EMBED)
    assert z.shape == (B, MAXLEN, EMBED)
    assert hidden_o.shape == (B, HID)
    assert bool(jnp.all(jnp.isfinite(means)))
    assert bool(jnp.all(jnp.isfinite(logs)))
    assert bool(jnp.all(jnp.isfinite(z)))
    assert bool(jnp.all(jnp.isfinite(hidden_o)))

    print("KERNEL_OK")
</pallas_src>

<mosaic_0001>
module attributes {stable_mosaic.version = 11 : i64} {
  func.func @kernel(%arg0: i32, %arg1: memref<8x8x32xf32, #tpu.memory_space<vmem>>, %arg2: memref<8x2xi32, #tpu.memory_space<vmem>>, %arg3: memref<8x8x32xf32, #tpu.memory_space<vmem>>, %arg4: memref<32x384xf32, #tpu.memory_space<vmem>>, %arg5: memref<1x384xf32, #tpu.memory_space<vmem>>, %arg6: memref<128x384xf32, #tpu.memory_space<vmem>>, %arg7: memref<1x128xf32, #tpu.memory_space<vmem>>, %arg8: memref<128x128xf32, #tpu.memory_space<vmem>>, %arg9: memref<1x128xf32, #tpu.memory_space<vmem>>, %arg10: memref<32x64xf32, #tpu.memory_space<vmem>>, %arg11: memref<8x8x128xf32, #tpu.memory_space<vmem>>, %arg12: memref<8x64xf32, #tpu.memory_space<vmem>>, %arg13: memref<8x8x384xf32, #tpu.memory_space<vmem>>, %arg14: memref<8x8x128xf32, #tpu.memory_space<vmem>>, %arg15: memref<8x128xf32, #tpu.memory_space<vmem>>, %arg16: memref<8x8x64xf32, #tpu.memory_space<vmem>>, %arg17: memref<8x8x64xf32, #tpu.memory_space<vmem>>, %arg18: memref<8x32xf32, #tpu.memory_space<vmem>>) attributes {dimension_semantics = [#tpu.dimension_semantics<parallel>], iteration_bounds = array<i64: 1>, scalar_prefetch = 0 : i64, scratch_operands = 6 : i64, tpu.core_type = #tpu.core_type<tc>, window_params = [{transform_indices = @transform_0, window_bounds = array<i64: 8, 8, 32>}, {transform_indices = @transform_1, window_bounds = array<i64: 8, 2>}, {transform_indices = @transform_2, window_bounds = array<i64: 8, 8, 32>}, {pipeline_mode = #tpu.pipeline_mode<synchronous>, transform_indices = @transform_3, window_bounds = array<i64: 32, 384>}, {pipeline_mode = #tpu.pipeline_mode<synchronous>, transform_indices = @transform_4, window_bounds = array<i64: 1, 384>}, {pipeline_mode = #tpu.pipeline_mode<synchronous>, transform_indices = @transform_5, window_bounds = array<i64: 128, 384>}, {pipeline_mode = #tpu.pipeline_mode<synchronous>, transform_indices = @transform_6, window_bounds = array<i64: 1, 128>}, {pipeline_mode = #tpu.pipeline_mode<synchronous>, transform_indices = @transform_7, window_bounds = array<i64: 128, 128>}, {pipeline_mode = #tpu.pipeline_mode<synchronous>, transform_indices = @transform_8, window_bounds = array<i64: 1, 128>}, {pipeline_mode = #tpu.pipeline_mode<synchronous>, transform_indices = @transform_9, window_bounds = array<i64: 32, 64>}, {transform_indices = @transform_10, window_bounds = array<i64: 8, 8, 128>}, {transform_indices = @transform_11, window_bounds = array<i64: 8, 64>}]} {
    %c0 = arith.constant 0 : index
    %c0_0 = arith.constant 0 : index
    %0 = vector.load %arg2[%c0, %c0_0] : memref<8x2xi32, #tpu.memory_space<vmem>>, vector<8x1xi32>
    %1 = arith.sitofp %0 : vector<8x1xi32> to vector<8x1xf32>
    %cst = arith.constant 1.000000e+00 : f32
    %2 = vector.broadcast %cst : f32 to vector<8x1xf32>
    %3 = arith.maximumf %1, %2 : vector<8x1xf32>
    %c0_1 = arith.constant 0 : index
    %c1 = arith.constant 1 : index
    %4 = vector.load %arg2[%c0_1, %c1] : memref<8x2xi32, #tpu.memory_space<vmem>>, vector<8x1xi32>
    %5 = vector.shape_cast %4 : vector<8x1xi32> to vector<1x8x1xi32>
    %cst_2 = arith.constant dense<-2147483648> : vector<1xi32>
    %6 = vector.multi_reduction <maxsi>, %5, %cst_2 [1, 2] : vector<1x8x1xi32> to vector<1xi32>
    %7 = vector.shape_cast %6 : vector<1xi32> to vector<1x1x1xi32>
    %8 = vector.extract %7[0, 0, 0] : i32 from vector<1x1x1xi32>
    %9 = tpu.iota {dimensions = array<i32: 1>} : vector<1x128xi32>
    %c64_i32 = arith.constant 64 : i32
    %10 = vector.broadcast %c64_i32 : i32 to vector<1x128xi32>
    %11 = arith.cmpi slt, %9, %10 : vector<1x128xi32>
    %12 = tpu.iota {dimensions = array<i32: 1>} : vector<1x384xi32>
    %c128_i32 = arith.constant 128 : i32
    %c0_i32 = arith.constant 0 : i32
    %13 = arith.cmpi eq, %c128_i32, %c0_i32 : i32
    %c1_i32 = arith.constant 1 : i32
    %14 = arith.select %13, %c1_i32, %c128_i32 : i32
    %15 = vector.broadcast %14 : i32 to vector<1x384xi32>
    %16 = arith.remsi %12, %15 : vector<1x384xi32>
    %c0_i32_3 = arith.constant 0 : i32
    %17 = vector.broadcast %c0_i32_3 : i32 to vector<1x384xi32>
    %18 = arith.cmpi ne, %16, %17 : vector<1x384xi32>
    %c0_i32_4 = arith.constant 0 : i32
    %19 = vector.broadcast %c0_i32_4 : i32 to vector<1x384xi32>
    %20 = arith.cmpi slt, %16, %19 : vector<1x384xi32>
    %c0_i32_5 = arith.constant 0 : i32
    %21 = arith.cmpi slt, %14, %c0_i32_5 : i32
    %22 = vector.broadcast %21 : i1 to vector<1x384xi1>
    %23 = vector.broadcast %22 : vector<1x384xi1> to vector<1x384xi1>
    %24 = arith.xori %20, %23 : vector<1x384xi1>
    %25 = arith.andi %24, %18 : vector<1x384xi1>
    %26 = vector.broadcast %14 : i32 to vector<1x384xi32>
    %27 = arith.addi %16, %26 : vector<1x384xi32>
    %28 = arith.select %25, %27, %16 : vector<1x384xi1>, vector<1x384xi32>
    %c64_i32_6 = arith.constant 64 : i32
    %29 = vector.broadcast %c64_i32_6 : i32 to vector<1x384xi32>
    %30 = arith.cmpi slt, %28, %29 : vector<1x384xi32>
    %c0_7 = arith.constant 0 : index
    %c0_8 = arith.constant 0 : index
    %c0_9 = arith.constant 0 : index
    %31 = vector.load %arg1[%c0_7, %c0_8, %c0_9] : memref<8x8x32xf32, #tpu.memory_space<vmem>>, vector<8x8x32xf32>
    %32 = vector.shape_cast %31 : vector<8x8x32xf32> to vector<64x32xf32>
    %c0_10 = arith.constant 0 : index
    %c0_11 = arith.constant 0 : index
    %33 = vector.load %arg4[%c0_10, %c0_11] : memref<32x384xf32, #tpu.memory_space<vmem>>, vector<32x384xf32>
    %cst_12 = arith.constant dense<0.000000e+00> : vector<64x384xf32>
    %34 = tpu.matmul %32, %33, %cst_12 {dimension_numbers = #tpu.dot_dimension_numbers<[1], [0], [0], [1], [0, 0, 1, 1], [], []>} : vector<64x32xf32>, vector<32x384xf32>, vector<64x384xf32> -> vector<64x384xf32>
    %c0_13 = arith.constant 0 : index
    %c0_14 = arith.constant 0 : index
    %35 = vector.load %arg5[%c0_13, %c0_14] : memref<1x384xf32, #tpu.memory_space<vmem>>, vector<1x384xf32>
    %36 = vector.broadcast %35 : vector<1x384xf32> to vector<64x384xf32>
    %37 = arith.addf %34, %36 : vector<64x384xf32>
    %38 = vector.shape_cast %37 : vector<64x384xf32> to vector<8x8x384xf32>
    %c0_15 = arith.constant 0 : index
    %c0_16 = arith.constant 0 : index
    %c0_17 = arith.constant 0 : index
    %39 = vector.load %arg13[%c0_15, %c0_16, %c0_17] : memref<8x8x384xf32, #tpu.memory_space<vmem>>, vector<8x8x384xf32>
    tpu.vector_store %arg13[%c0_15, %c0_16, %c0_17], %38 {strides = array<i32>} : memref<8x8x384xf32, #tpu.memory_space<vmem>>, vector<8x8x384xf32>,
    %c0_18 = arith.constant 0 : index
    %c0_19 = arith.constant 0 : index
    %40 = vector.load %arg6[%c0_18, %c0_19] : memref<128x384xf32, #tpu.memory_space<vmem>>, vector<128x384xf32>
    %c0_20 = arith.constant 0 : index
    %c0_21 = arith.constant 0 : index
    %41 = vector.load %arg7[%c0_20, %c0_21] : memref<1x128xf32, #tpu.memory_space<vmem>>, vector<1x128xf32>
    %cst_22 = arith.constant 0.000000e+00 : f32
    %42 = vector.broadcast %cst_22 : f32 to vector<8x128xf32>
    %c0_23 = arith.constant 0 : index
    %c0_24 = arith.constant 0 : index
    %43 = vector.load %arg15[%c0_23, %c0_24] : memref<8x128xf32, #tpu.memory_space<vmem>>, vector<8x128xf32>
    tpu.vector_store %arg15[%c0_23, %c0_24], %42 {strides = array<i32>} : memref<8x128xf32, #tpu.memory_space<vmem>>, vector<8x128xf32>,
    %c0_i32_25 = arith.constant 0 : i32
    %c7_i32 = arith.constant 7 : i32
    %44 = arith.subi %c7_i32, %c0_i32_25 : i32
    %c0_26 = arith.constant 0 : index
    %c0_27 = arith.constant 0 : index
    %45 = vector.load %arg15[%c0_26, %c0_27] : memref<8x128xf32, #tpu.memory_space<vmem>>, vector<8x128xf32>
    %46 = arith.index_cast %c0_i32_25 : i32 to index
    %c0_28 = arith.constant 0 : index
    %c0_29 = arith.constant 0 : index
    %47 = vector.load %arg13[%46, %c0_28, %c0_29] : memref<8x8x384xf32, #tpu.memory_space<vmem>>, vector<1x8x384xf32>
    %48 = vector.shape_cast %47 : vector<1x8x384xf32> to vector<8x384xf32>
    %49 = arith.index_cast %44 : i32 to index
    %c0_30 = arith.constant 0 : index
    %c0_31 = arith.constant 0 : index
    %50 = vector.load %arg13[%49, %c0_30, %c0_31] : memref<8x8x384xf32, #tpu.memory_space<vmem>>, vector<1x8x384xf32>
    %51 = vector.shape_cast %50 : vector<1x8x384xf32> to vector<8x384xf32>
    %52 = vector.shape_cast %30 : vector<1x384xi1> to vector<1x384xi1>
    %53 = vector.broadcast %52 : vector<1x384xi1> to vector<8x384xi1>
    %54 = arith.select %53, %48, %51 : vector<8x384xi1>, vector<8x384xf32>
    %cst_32 = arith.constant dense<0.000000e+00> : vector<8x384xf32>
    %55 = tpu.matmul %45, %40, %cst_32 {dimension_numbers = #tpu.dot_dimension_numbers<[1], [0], [0], [1], [0, 0, 1, 1], [], []>} : vector<8x128xf32>, vector<128x384xf32>, vector<8x384xf32> -> vector<8x384xf32>
    %56 = vector.extract_strided_slice %54 {offsets = [0, 0], sizes = [8, 128], strides = [1, 1]} : vector<8x384xf32> to vector<8x128xf32>
    %57 = vector.extract_strided_slice %55 {offsets = [0, 0], sizes = [8, 128], strides = [1, 1]} : vector<8x384xf32> to vector<8x128xf32>
    %58 = arith.addf %56, %57 : vector<8x128xf32>
    %cst_33 = arith.constant 5.000000e-01 : f32
    %59 = vector.broadcast %cst_33 : f32 to vector<8x128xf32>
    %60 = arith.mulf %59, %58 : vector<8x128xf32>
    %61 = math.tanh %60 : vector<8x128xf32>
    %cst_34 = arith.constant 5.000000e-01 : f32
    %62 = vector.broadcast %cst_34 : f32 to vector<8x128xf32>
    %63 = arith.mulf %62, %61 : vector<8x128xf32>
    %cst_35 = arith.constant 5.000000e-01 : f32
    %64 = vector.broadcast %cst_35 : f32 to vector<8x128xf32>
    %65 = arith.addf %63, %64 : vector<8x128xf32>
    %66 = vector.extract_strided_slice %54 {offsets = [0, 128], sizes = [8, 128], strides = [1, 1]} : vector<8x384xf32> to vector<8x128xf32>
    %67 = vector.extract_strided_slice %55 {offsets = [0, 128], sizes = [8, 128], strides = [1, 1]} : vector<8x384xf32> to vector<8x128xf32>
    %68 = arith.addf %66, %67 : vector<8x128xf32>
    %cst_36 = arith.constant 5.000000e-01 : f32
    %69 = vector.broadcast %cst_36 : f32 to vector<8x128xf32>
    %70 = arith.mulf %69, %68 : vector<8x128xf32>
    %71 = math.tanh %70 : vector<8x128xf32>
    %cst_37 = arith.constant 5.000000e-01 : f32
    %72 = vector.broadcast %cst_37 : f32 to vector<8x128xf32>
    %73 = arith.mulf %72, %71 : vector<8x128xf32>
    %cst_38 = arith.constant 5.000000e-01 : f32
    %74 = vector.broadcast %cst_38 : f32 to vector<8x128xf32>
    %75 = arith.addf %73, %74 : vector<8x128xf32>
    %76 = vector.extract_strided_slice %54 {offsets = [0, 256], sizes = [8, 128], strides = [1, 1]} : vector<8x384xf32> to vector<8x128xf32>
    %77 = vector.extract_strided_slice %55 {offsets = [0, 256], sizes = [8, 128], strides = [1, 1]} : vector<8x384xf32> to vector<8x128xf32>
    %78 = vector.broadcast %41 : vector<1x128xf32> to vector<8x128xf32>
    %79 = arith.addf %77, %78 : vector<8x128xf32>
    %80 = arith.mulf %65, %79 : vector<8x128xf32>
    %81 = arith.addf %76, %80 : vector<8x128xf32>
    %82 = math.tanh %81 : vector<8x128xf32>
    %cst_39 = arith.constant 1.000000e+00 : f32
    %83 = vector.broadcast %cst_39 : f32 to vector<8x128xf32>
    %84 = arith.subf %83, %75 : vector<8x128xf32>
    %85 = arith.mulf %84, %82 : vector<8x128xf32>
    %86 = arith.mulf %75, %45 : vector<8x128xf32>
    %87 = arith.addf %85, %86 : vector<8x128xf32>
    %88 = vector.broadcast %c0_i32_25 : i32 to vector<8x1xi32>
    %89 = arith.cmpi sgt, %0, %88 : vector<8x1xi32>
    %90 = vector.broadcast %44 : i32 to vector<8x1xi32>
    %91 = arith.cmpi sgt, %0, %90 : vector<8x1xi32>
    %92 = vector.broadcast %11 : vector<1x128xi1> to vector<8x128xi1>
    %93 = vector.broadcast %89 : vector<8x1xi1> to vector<8x128xi1>
    %94 = arith.andi %92, %93 : vector<8x128xi1>
    %cst_40 = arith.constant dense<true> : vector<1x128xi1>
    %95 = arith.xori %11, %cst_40 : vector<1x128xi1>
    %96 = vector.broadcast %95 : vector<1x128xi1> to vector<8x128xi1>
    %97 = vector.broadcast %91 : vector<8x1xi1> to vector<8x128xi1>
    %98 = arith.andi %96, %97 : vector<8x128xi1>
    %99 = arith.ori %94, %98 : vector<8x128xi1>
    %100 = arith.select %99, %87, %45 : vector<8x128xi1>, vector<8x128xf32>
    %c0_41 = arith.constant 0 : index
    %c0_42 = arith.constant 0 : index
    %101 = vector.load %arg15[%c0_41, %c0_42] : memref<8x128xf32, #tpu.memory_space<vmem>>, vector<8x128xf32>
    tpu.vector_store %arg15[%c0_41, %c0_42], %100 {strides = array<i32>} : memref<8x128xf32, #tpu.memory_space<vmem>>, vector<8x128xf32>,
    %cst_43 = arith.constant 0.000000e+00 : f32
    %102 = vector.broadcast %cst_43 : f32 to vector<8x128xf32>
    %103 = arith.select %99, %87, %102 : vector<8x128xi1>, vector<8x128xf32>
    %104 = arith.index_cast %c0_i32_25 : i32 to index
    %c0_44 = arith.constant 0 : index
    %c0_45 = arith.constant 0 : index
    %105 = vector.load %arg14[%104, %c0_44, %c0_45] : memref<8x8x128xf32, #tpu.memory_space<vmem>>, vector<1x8x128xf32>
    %106 = vector.shape_cast %105 : vector<1x8x128xf32> to vector<8x128xf32>
    %107 = vector.shape_cast %103 : vector<8x128xf32> to vector<1x8x128xf32>
    tpu.vector_store %arg14[%104, %c0_44, %c0_45], %107 {strides = array<i32>} : memref<8x8x128xf32, #tpu.memory_space<vmem>>, vector<1x8x128xf32>,
    %c1_i32_46 = arith.constant 1 : i32
    %c7_i32_47 = arith.constant 7 : i32
    %108 = arith.subi %c7_i32_47, %c1_i32_46 : i32
    %c0_48 = arith.constant 0 : index
    %c0_49 = arith.constant 0 : index
    %109 = vector.load %arg15[%c0_48, %c0_49] : memref<8x128xf32, #tpu.memory_space<vmem>>, vector<8x128xf32>
    %110 = arith.index_cast %c1_i32_46 : i32 to index
    %c0_50 = arith.constant 0 : index
    %c0_51 = arith.constant 0 : index
    %111 = vector.load %arg13[%110, %c0_50, %c0_51] : memref<8x8x384xf32, #tpu.memory_space<vmem>>, vector<1x8x384xf32>
    %112 = vector.shape_cast %111 : vector<1x8x384xf32> to vector<8x384xf32>
    %113 = arith.index_cast %108 : i32 to index
    %c0_52 = arith.constant 0 : index
    %c0_53 = arith.constant 0 : index
    %114 = vector.load %arg13[%113, %c0_52, %c0_53] : memref<8x8x384xf32, #tpu.memory_space<vmem>>, vector<1x8x384xf32>
    %115 = vector.shape_cast %114 : vector<1x8x384xf32> to vector<8x384xf32>
    %116 = vector.shape_cast %30 : vector<1x384xi1> to vector<1x384xi1>
    %117 = vector.broadcast %116 : vector<1x384xi1> to vector<8x384xi1>
    %118 = arith.select %117, %112, %115 : vector<8x384xi1>, vector<8x384xf32>
    %cst_54 = arith.constant dense<0.000000e+00> : vector<8x384xf32>
    %119 = tpu.matmul %109, %40, %cst_54 {dimension_numbers = #tpu.dot_dimension_numbers<[1], [0], [0], [1], [0, 0, 1, 1], [], []>} : vector<8x128xf32>, vector<128x384xf32>, vector<8x384xf32> -> vector<8x384xf32>
    %120 = vector.extract_strided_slice %118 {offsets = [0, 0], sizes = [8, 128], strides = [1, 1]} : vector<8x384xf32> to vector<8x128xf32>
    %121 = vector.extract_strided_slice %119 {offsets = [0, 0], sizes = [8, 128], strides = [1, 1]} : vector<8x384xf32> to vector<8x128xf32>
    %122 = arith.addf %120, %121 : vector<8x128xf32>
    %cst_55 = arith.constant 5.000000e-01 : f32
    %123 = vector.broadcast %cst_55 : f32 to vector<8x128xf32>
    %124 = arith.mulf %123, %122 : vector<8x128xf32>
    %125 = math.tanh %124 : vector<8x128xf32>
    %cst_56 = arith.constant 5.000000e-01 : f32
    %126 = vector.broadcast %cst_56 : f32 to vector<8x128xf32>
    %127 = arith.mulf %126, %125 : vector<8x128xf32>
    %cst_57 = arith.constant 5.000000e-01 : f32
    %128 = vector.broadcast %cst_57 : f32 to vector<8x128xf32>
    %129 = arith.addf %127, %128 : vector<8x128xf32>
    %130 = vector.extract_strided_slice %118 {offsets = [0, 128], sizes = [8, 128], strides = [1, 1]} : vector<8x384xf32> to vector<8x128xf32>
    %131 = vector.extract_strided_slice %119 {offsets = [0, 128], sizes = [8, 128], strides = [1, 1]} : vector<8x384xf32> to vector<8x128xf32>
    %132 = arith.addf %130, %131 : vector<8x128xf32>
    %cst_58 = arith.constant 5.000000e-01 : f32
    %133 = vector.broadcast %cst_58 : f32 to vector<8x128xf32>
    %134 = arith.mulf %133, %132 : vector<8x128xf32>
    %135 = math.tanh %134 : vector<8x128xf32>
    %cst_59 = arith.constant 5.000000e-01 : f32
    %136 = vector.broadcast %cst_59 : f32 to vector<8x128xf32>
    %137 = arith.mulf %136, %135 : vector<8x128xf32>
    %cst_60 = arith.constant 5.000000e-01 : f32
    %138 = vector.broadcast %cst_60 : f32 to vector<8x128xf32>
    %139 = arith.addf %137, %138 : vector<8x128xf32>
    %140 = vector.extract_strided_slice %118 {offsets = [0, 256], sizes = [8, 128], strides = [1, 1]} : vector<8x384xf32> to vector<8x128xf32>
    %141 = vector.extract_strided_slice %119 {offsets = [0, 256], sizes = [8, 128], strides = [1, 1]} : vector<8x384xf32> to vector<8x128xf32>
    %142 = vector.broadcast %41 : vector<1x128xf32> to vector<8x128xf32>
    %143 = arith.addf %141, %142 : vector<8x128xf32>
    %144 = arith.mulf %129, %143 : vector<8x128xf32>
    %145 = arith.addf %140, %144 : vector<8x128xf32>
    %146 = math.tanh %145 : vector<8x128xf32>
    %cst_61 = arith.constant 1.000000e+00 : f32
    %147 = vector.broadcast %cst_61 : f32 to vector<8x128xf32>
    %148 = arith.subf %147, %139 : vector<8x128xf32>
    %149 = arith.mulf %148, %146 : vector<8x128xf32>
    %150 = arith.mulf %139, %109 : vector<8x128xf32>
    %151 = arith.addf %149, %150 : vector<8x128xf32>
    %152 = vector.broadcast %c1_i32_46 : i32 to vector<8x1xi32>
    %153 = arith.cmpi sgt, %0, %152 : vector<8x1xi32>
    %154 = vector.broadcast %108 : i32 to vector<8x1xi32>
    %155 = arith.cmpi sgt, %0, %154 : vector<8x1xi32>
    %156 = vector.broadcast %11 : vector<1x128xi1> to vector<8x128xi1>
    %157 = vector.broadcast %153 : vector<8x1xi1> to vector<8x128xi1>
    %158 = arith.andi %156, %157 : vector<8x128xi1>
    %cst_62 = arith.constant dense<true> : vector<1x128xi1>
    %159 = arith.xori %11, %cst_62 : vector<1x128xi1>
    %160 = vector.broadcast %159 : vector<1x128xi1> to vector<8x128xi1>
    %161 = vector.broadcast %155 : vector<8x1xi1> to vector<8x128xi1>
    %162 = arith.andi %160, %161 : vector<8x128xi1>
    %163 = arith.ori %158, %162 : vector<8x128xi1>
    %164 = arith.select %163, %151, %109 : vector<8x128xi1>, vector<8x128xf32>
    %c0_63 = arith.constant 0 : index
    %c0_64 = arith.constant 0 : index
    %165 = vector.load %arg15[%c0_63, %c0_64] : memref<8x128xf32, #tpu.memory_space<vmem>>, vector<8x128xf32>
    tpu.vector_store %arg15[%c0_63, %c0_64], %164 {strides = array<i32>} : memref<8x128xf32, #tpu.memory_space<vmem>>, vector<8x128xf32>,
    %cst_65 = arith.constant 0.000000e+00 : f32
    %166 = vector.broadcast %cst_65 : f32 to vector<8x128xf32>
    %167 = arith.select %163, %151, %166 : vector<8x128xi1>, vector<8x128xf32>
    %168 = arith.index_cast %c1_i32_46 : i32 to index
    %c0_66 = arith.constant 0 : index
    %c0_67 = arith.constant 0 : index
    %169 = vector.load %arg14[%168, %c0_66, %c0_67] : memref<8x8x128xf32, #tpu.memory_space<vmem>>, vector<1x8x128xf32>
    %170 = vector.shape_cast %169 : vector<1x8x128xf32> to vector<8x128xf32>
    %171 = vector.shape_cast %167 : vector<8x128xf32> to vector<1x8x128xf32>
    tpu.vector_store %arg14[%168, %c0_66, %c0_67], %171 {strides = array<i32>} : memref<8x8x128xf32, #tpu.memory_space<vmem>>, vector<1x8x128xf32>,
    %c2_i32 = arith.constant 2 : i32
    %c7_i32_68 = arith.constant 7 : i32
    %172 = arith.subi %c7_i32_68, %c2_i32 : i32
    %c0_69 = arith.constant 0 : index
    %c0_70 = arith.constant 0 : index
    %173 = vector.load %arg15[%c0_69, %c0_70] : memref<8x128xf32, #tpu.memory_space<vmem>>, vector<8x128xf32>
    %174 = arith.index_cast %c2_i32 : i32 to index
    %c0_71 = arith.constant 0 : index
    %c0_72 = arith.constant 0 : index
    %175 = vector.load %arg13[%174, %c0_71, %c0_72] : memref<8x8x384xf32, #tpu.memory_space<vmem>>, vector<1x8x384xf32>
    %176 = vector.shape_cast %175 : vector<1x8x384xf32> to vector<8x384xf32>
    %177 = arith.index_cast %172 : i32 to index
    %c0_73 = arith.constant 0 : index
    %c0_74 = arith.constant 0 : index
    %178 = vector.load %arg13[%177, %c0_73, %c0_74] : memref<8x8x384xf32, #tpu.memory_space<vmem>>, vector<1x8x384xf32>
    %179 = vector.shape_cast %178 : vector<1x8x384xf32> to vector<8x384xf32>
    %180 = vector.shape_cast %30 : vector<1x384xi1> to vector<1x384xi1>
    %181 = vector.broadcast %180 : vector<1x384xi1> to vector<8x384xi1>
    %182 = arith.select %181, %176, %179 : vector<8x384xi1>, vector<8x384xf32>
    %cst_75 = arith.constant dense<0.000000e+00> : vector<8x384xf32>
    %183 = tpu.matmul %173, %40, %cst_75 {dimension_numbers = #tpu.dot_dimension_numbers<[1], [0], [0], [1], [0, 0, 1, 1], [], []>} : vector<8x128xf32>, vector<128x384xf32>, vector<8x384xf32> -> vector<8x384xf32>
    %184 = vector.extract_strided_slice %182 {offsets = [0, 0], sizes = [8, 128], strides = [1, 1]} : vector<8x384xf32> to vector<8x128xf32>
    %185 = vector.extract_strided_slice %183 {offsets = [0, 0], sizes = [8, 128], strides = [1, 1]} : vector<8x384xf32> to vector<8x128xf32>
    %186 = arith.addf %184, %185 : vector<8x128xf32>
    %cst_76 = arith.constant 5.000000e-01 : f32
    %187 = vector.broadcast %cst_76 : f32 to vector<8x128xf32>
    %188 = arith.mulf %187, %186 : vector<8x128xf32>
    %189 = math.tanh %188 : vector<8x128xf32>
    %cst_77 = arith.constant 5.000000e-01 : f32
    %190 = vector.broadcast %cst_77 : f32 to vector<8x128xf32>
    %191 = arith.mulf %190, %189 : vector<8x128xf32>
    %cst_78 = arith.constant 5.000000e-01 : f32
    %192 = vector.broadcast %cst_78 : f32 to vector<8x128xf32>
    %193 = arith.addf %191, %192 : vector<8x128xf32>
    %194 = vector.extract_strided_slice %182 {offsets = [0, 128], sizes = [8, 128], strides = [1, 1]} : vector<8x384xf32> to vector<8x128xf32>
    %195 = vector.extract_strided_slice %183 {offsets = [0, 128], sizes = [8, 128], strides = [1, 1]} : vector<8x384xf32> to vector<8x128xf32>
    %196 = arith.addf %194, %195 : vector<8x128xf32>
    %cst_79 = arith.constant 5.000000e-01 : f32
    %197 = vector.broadcast %cst_79 : f32 to vector<8x128xf32>
    %198 = arith.mulf %197, %196 : vector<8x128xf32>
    %199 = math.tanh %198 : vector<8x128xf32>
    %cst_80 = arith.constant 5.000000e-01 : f32
    %200 = vector.broadcast %cst_80 : f32 to vector<8x128xf32>
    %201 = arith.mulf %200, %199 : vector<8x128xf32>
    %cst_81 = arith.constant 5.000000e-01 : f32
    %202 = vector.broadcast %cst_81 : f32 to vector<8x128xf32>
    %203 = arith.addf %201, %202 : vector<8x128xf32>
    %204 = vector.extract_strided_slice %182 {offsets = [0, 256], sizes = [8, 128], strides = [1, 1]} : vector<8x384xf32> to vector<8x128xf32>
    %205 = vector.extract_strided_slice %183 {offsets = [0, 256], sizes = [8, 128], strides = [1, 1]} : vector<8x384xf32> to vector<8x128xf32>
    %206 = vector.broadcast %41 : vector<1x128xf32> to vector<8x128xf32>
    %207 = arith.addf %205, %206 : vector<8x128xf32>
    %208 = arith.mulf %193, %207 : vector<8x128xf32>
    %209 = arith.addf %204, %208 : vector<8x128xf32>
    %210 = math.tanh %209 : vector<8x128xf32>
    %cst_82 = arith.constant 1.000000e+00 : f32
    %211 = vector.broadcast %cst_82 : f32 to vector<8x128xf32>
    %212 = arith.subf %211, %203 : vector<8x128xf32>
    %213 = arith.mulf %212, %210 : vector<8x128xf32>
    %214 = arith.mulf %203, %173 : vector<8x128xf32>
    %215 = arith.addf %213, %214 : vector<8x128xf32>
    %216 = vector.broadcast %c2_i32 : i32 to vector<8x1xi32>
    %217 = arith.cmpi sgt, %0, %216 : vector<8x1xi32>
    %218 = vector.broadcast %172 : i32 to vector<8x1xi32>
    %219 = arith.cmpi sgt, %0, %218 : vector<8x1xi32>
    %220 = vector.broadcast %11 : vector<1x128xi1> to vector<8x128xi1>
    %221 = vector.broadcast %217 : vector<8x1xi1> to vector<8x128xi1>
    %222 = arith.andi %220, %221 : vector<8x128xi1>
    %cst_83 = arith.constant dense<true> : vector<1x128xi1>
    %223 = arith.xori %11, %cst_83 : vector<1x128xi1>
    %224 = vector.broadcast %223 : vector<1x128xi1> to vector<8x128xi1>
    %225 = vector.broadcast %219 : vector<8x1xi1> to vector<8x128xi1>
    %226 = arith.andi %224, %225 : vector<8x128xi1>
    %227 = arith.ori %222, %226 : vector<8x128xi1>
    %228 = arith.select %227, %215, %173 : vector<8x128xi1>, vector<8x128xf32>
    %c0_84 = arith.constant 0 : index
    %c0_85 = arith.constant 0 : index
    %229 = vector.load %arg15[%c0_84, %c0_85] : memref<8x128xf32, #tpu.memory_space<vmem>>, vector<8x128xf32>
    tpu.vector_store %arg15[%c0_84, %c0_85], %228 {strides = array<i32>} : memref<8x128xf32, #tpu.memory_space<vmem>>, vector<8x128xf32>,
    %cst_86 = arith.constant 0.000000e+00 : f32
    %230 = vector.broadcast %cst_86 : f32 to vector<8x128xf32>
    %231 = arith.select %227, %215, %230 : vector<8x128xi1>, vector<8x128xf32>
    %232 = arith.index_cast %c2_i32 : i32 to index
    %c0_87 = arith.constant 0 : index
    %c0_88 = arith.constant 0 : index
    %233 = vector.load %arg14[%232, %c0_87, %c0_88] : memref<8x8x128xf32, #tpu.memory_space<vmem>>, vector<1x8x128xf32>
    %234 = vector.shape_cast %233 : vector<1x8x128xf32> to vector<8x128xf32>
    %235 = vector.shape_cast %231 : vector<8x128xf32> to vector<1x8x128xf32>
    tpu.vector_store %arg14[%232, %c0_87, %c0_88], %235 {strides = array<i32>} : memref<8x8x128xf32, #tpu.memory_space<vmem>>, vector<1x8x128xf32>,
    %c3_i32 = arith.constant 3 : i32
    %c7_i32_89 = arith.constant 7 : i32
    %236 = arith.subi %c7_i32_89, %c3_i32 : i32
    %c0_90 = arith.constant 0 : index
    %c0_91 = arith.constant 0 : index
    %237 = vector.load %arg15[%c0_90, %c0_91] : memref<8x128xf32, #tpu.memory_space<vmem>>, vector<8x128xf32>
    %238 = arith.index_cast %c3_i32 : i32 to index
    %c0_92 = arith.constant 0 : index
    %c0_93 = arith.constant 0 : index
    %239 = vector.load %arg13[%238, %c0_92, %c0_93] : memref<8x8x384xf32, #tpu.memory_space<vmem>>, vector<1x8x384xf32>
    %240 = vector.shape_cast %239 : vector<1x8x384xf32> to vector<8x384xf32>
    %241 = arith.index_cast %236 : i32 to index
    %c0_94 = arith.constant 0 : index
    %c0_95 = arith.constant 0 : index
    %242 = vector.load %arg13[%241, %c0_94, %c0_95] : memref<8x8x384xf32, #tpu.memory_space<vmem>>, vector<1x8x384xf32>
    %243 = vector.shape_cast %242 : vector<1x8x384xf32> to vector<8x384xf32>
    %244 = vector.shape_cast %30 : vector<1x384xi1> to vector<1x384xi1>
    %245 = vector.broadcast %244 : vector<1x384xi1> to vector<8x384xi1>
    %246 = arith.select %245, %240, %243 : vector<8x384xi1>, vector<8x384xf32>
    %cst_96 = arith.constant dense<0.000000e+00> : vector<8x384xf32>
    %247 = tpu.matmul %237, %40, %cst_96 {dimension_numbers = #tpu.dot_dimension_numbers<[1], [0], [0], [1], [0, 0, 1, 1], [], []>} : vector<8x128xf32>, vector<128x384xf32>, vector<8x384xf32> -> vector<8x384xf32>
    %248 = vector.extract_strided_slice %246 {offsets = [0, 0], sizes = [8, 128], strides = [1, 1]} : vector<8x384xf32> to vector<8x128xf32>
    %249 = vector.extract_strided_slice %247 {offsets = [0, 0], sizes = [8, 128], strides = [1, 1]} : vector<8x384xf32> to vector<8x128xf32>
    %250 = arith.addf %248, %249 : vector<8x128xf32>
    %cst_97 = arith.constant 5.000000e-01 : f32
    %251 = vector.broadcast %cst_97 : f32 to vector<8x128xf32>
    %252 = arith.mulf %251, %250 : vector<8x128xf32>
    %253 = math.tanh %252 : vector<8x128xf32>
    %cst_98 = arith.constant 5.000000e-01 : f32
    %254 = vector.broadcast %cst_98 : f32 to vector<8x128xf32>
    %255 = arith.mulf %254, %253 : vector<8x128xf32>
    %cst_99 = arith.constant 5.000000e-01 : f32
    %256 = vector.broadcast %cst_99 : f32 to vector<8x128xf32>
    %257 = arith.addf %255, %256 : vector<8x128xf32>
    %258 = vector.extract_strided_slice %246 {offsets = [0, 128], sizes = [8, 128], strides = [1, 1]} : vector<8x384xf32> to vector<8x128xf32>
    %259 = vector.extract_strided_slice %247 {offsets = [0, 128], sizes = [8, 128], strides = [1, 1]} : vector<8x384xf32> to vector<8x128xf32>
    %260 = arith.addf %258, %259 : vector<8x128xf32>
    %cst_100 = arith.constant 5.000000e-01 : f32
    %261 = vector.broadcast %cst_100 : f32 to vector<8x128xf32>
    %262 = arith.mulf %261, %260 : vector<8x128xf32>
    %263 = math.tanh %262 : vector<8x128xf32>
    %cst_101 = arith.constant 5.000000e-01 : f32
    %264 = vector.broadcast %cst_101 : f32 to vector<8x128xf32>
    %265 = arith.mulf %264, %263 : vector<8x128xf32>
    %cst_102 = arith.constant 5.000000e-01 : f32
    %266 = vector.broadcast %cst_102 : f32 to vector<8x128xf32>
    %267 = arith.addf %265, %266 : vector<8x128xf32>
    %268 = vector.extract_strided_slice %246 {offsets = [0, 256], sizes = [8, 128], strides = [1, 1]} : vector<8x384xf32> to vector<8x128xf32>
    %269 = vector.extract_strided_slice %247 {offsets = [0, 256], sizes = [8, 128], strides = [1, 1]} : vector<8x384xf32> to vector<8x128xf32>
    %270 = vector.broadcast %41 : vector<1x128xf32> to vector<8x128xf32>
    %271 = arith.addf %269, %270 : vector<8x128xf32>
    %272 = arith.mulf %257, %271 : vector<8x128xf32>
    %273 = arith.addf %268, %272 : vector<8x128xf32>
    %274 = math.tanh %273 : vector<8x128xf32>
    %cst_103 = arith.constant 1.000000e+00 : f32
    %275 = vector.broadcast %cst_103 : f32 to vector<8x128xf32>
    %276 = arith.subf %275, %267 : vector<8x128xf32>
    %277 = arith.mulf %276, %274 : vector<8x128xf32>
    %278 = arith.mulf %267, %237 : vector<8x128xf32>
    %279 = arith.addf %277, %278 : vector<8x128xf32>
    %280 = vector.broadcast %c3_i32 : i32 to vector<8x1xi32>
    %281 = arith.cmpi sgt, %0, %280 : vector<8x1xi32>
    %282 = vector.broadcast %236 : i32 to vector<8x1xi32>
    %283 = arith.cmpi sgt, %0, %282 : vector<8x1xi32>
    %284 = vector.broadcast %11 : vector<1x128xi1> to vector<8x128xi1>
    %285 = vector.broadcast %281 : vector<8x1xi1> to vector<8x128xi1>
    %286 = arith.andi %284, %285 : vector<8x128xi1>
    %cst_104 = arith.constant dense<true> : vector<1x128xi1>
    %287 = arith.xori %11, %cst_104 : vector<1x128xi1>
    %288 = vector.broadcast %287 : vector<1x128xi1> to vector<8x128xi1>
    %289 = vector.broadcast %283 : vector<8x1xi1> to vector<8x128xi1>
    %290 = arith.andi %288, %289 : vector<8x128xi1>
    %291 = arith.ori %286, %290 : vector<8x128xi1>
    %292 = arith.select %291, %279, %237 : vector<8x128xi1>, vector<8x128xf32>
    %c0_105 = arith.constant 0 : index
    %c0_106 = arith.constant 0 : index
    %293 = vector.load %arg15[%c0_105, %c0_106] : memref<8x128xf32, #tpu.memory_space<vmem>>, vector<8x128xf32>
    tpu.vector_store %arg15[%c0_105, %c0_106], %292 {strides = array<i32>} : memref<8x128xf32, #tpu.memory_space<vmem>>, vector<8x128xf32>,
    %cst_107 = arith.constant 0.000000e+00 : f32
    %294 = vector.broadcast %cst_107 : f32 to vector<8x128xf32>
    %295 = arith.select %291, %279, %294 : vector<8x128xi1>, vector<8x128xf32>
    %296 = arith.index_cast %c3_i32 : i32 to index
    %c0_108 = arith.constant 0 : index
    %c0_109 = arith.constant 0 : index
    %297 = vector.load %arg14[%296, %c0_108, %c0_109] : memref<8x8x128xf32, #tpu.memory_space<vmem>>, vector<1x8x128xf32>
    %298 = vector.shape_cast %297 : vector<1x8x128xf32> to vector<8x128xf32>
    %299 = vector.shape_cast %295 : vector<8x128xf32> to vector<1x8x128xf32>
    tpu.vector_store %arg14[%296, %c0_108, %c0_109], %299 {strides = array<i32>} : memref<8x8x128xf32, #tpu.memory_space<vmem>>, vector<1x8x128xf32>,
    %c4_i32 = arith.constant 4 : i32
    %c7_i32_110 = arith.constant 7 : i32
    %300 = arith.subi %c7_i32_110, %c4_i32 : i32
    %c0_111 = arith.constant 0 : index
    %c0_112 = arith.constant 0 : index
    %301 = vector.load %arg15[%c0_111, %c0_112] : memref<8x128xf32, #tpu.memory_space<vmem>>, vector<8x128xf32>
    %302 = arith.index_cast %c4_i32 : i32 to index
    %c0_113 = arith.constant 0 : index
    %c0_114 = arith.constant 0 : index
    %303 = vector.load %arg13[%302, %c0_113, %c0_114] : memref<8x8x384xf32, #tpu.memory_space<vmem>>, vector<1x8x384xf32>
    %304 = vector.shape_cast %303 : vector<1x8x384xf32> to vector<8x384xf32>
    %305 = arith.index_cast %300 : i32 to index
    %c0_115 = arith.constant 0 : index
    %c0_116 = arith.constant 0 : index
    %306 = vector.load %arg13[%305, %c0_115, %c0_116] : memref<8x8x384xf32, #tpu.memory_space<vmem>>, vector<1x8x384xf32>
    %307 = vector.shape_cast %306 : vector<1x8x384xf32> to vector<8x384xf32>
    %308 = vector.shape_cast %30 : vector<1x384xi1> to vector<1x384xi1>
    %309 = vector.broadcast %308 : vector<1x384xi1> to vector<8x384xi1>
    %310 = arith.select %309, %304, %307 : vector<8x384xi1>, vector<8x384xf32>
    %cst_117 = arith.constant dense<0.000000e+00> : vector<8x384xf32>
    %311 = tpu.matmul %301, %40, %cst_117 {dimension_numbers = #tpu.dot_dimension_numbers<[1], [0], [0], [1], [0, 0, 1, 1], [], []>} : vector<8x128xf32>, vector<128x384xf32>, vector<8x384xf32> -> vector<8x384xf32>
    %312 = vector.extract_strided_slice %310 {offsets = [0, 0], sizes = [8, 128], strides = [1, 1]} : vector<8x384xf32> to vector<8x128xf32>
    %313 = vector.extract_strided_slice %311 {offsets = [0, 0], sizes = [8, 128], strides = [1, 1]} : vector<8x384xf32> to vector<8x128xf32>
    %314 = arith.addf %312, %313 : vector<8x128xf32>
    %cst_118 = arith.constant 5.000000e-01 : f32
    %315 = vector.broadcast %cst_118 : f32 to vector<8x128xf32>
    %316 = arith.mulf %315, %314 : vector<8x128xf32>
    %317 = math.tanh %316 : vector<8x128xf32>
    %cst_119 = arith.constant 5.000000e-01 : f32
    %318 = vector.broadcast %cst_119 : f32 to vector<8x128xf32>
    %319 = arith.mulf %318, %317 : vector<8x128xf32>
    %cst_120 = arith.constant 5.000000e-01 : f32
    %320 = vector.broadcast %cst_120 : f32 to vector<8x128xf32>
    %321 = arith.addf %319, %320 : vector<8x128xf32>
    %322 = vector.extract_strided_slice %310 {offsets = [0, 128], sizes = [8, 128], strides = [1, 1]} : vector<8x384xf32> to vector<8x128xf32>
    %323 = vector.extract_strided_slice %311 {offsets = [0, 128], sizes = [8, 128], strides = [1, 1]} : vector<8x384xf32> to vector<8x128xf32>
    %324 = arith.addf %322, %323 : vector<8x128xf32>
    %cst_121 = arith.constant 5.000000e-01 : f32
    %325 = vector.broadcast %cst_121 : f32 to vector<8x128xf32>
    %326 = arith.mulf %325, %324 : vector<8x128xf32>
    %327 = math.tanh %326 : vector<8x128xf32>
    %cst_122 = arith.constant 5.000000e-01 : f32
    %328 = vector.broadcast %cst_122 : f32 to vector<8x128xf32>
    %329 = arith.mulf %328, %327 : vector<8x128xf32>
    %cst_123 = arith.constant 5.000000e-01 : f32
    %330 = vector.broadcast %cst_123 : f32 to vector<8x128xf32>
    %331 = arith.addf %329, %330 : vector<8x128xf32>
    %332 = vector.extract_strided_slice %310 {offsets = [0, 256], sizes = [8, 128], strides = [1, 1]} : vector<8x384xf32> to vector<8x128xf32>
    %333 = vector.extract_strided_slice %311 {offsets = [0, 256], sizes = [8, 128], strides = [1, 1]} : vector<8x384xf32> to vector<8x128xf32>
    %334 = vector.broadcast %41 : vector<1x128xf32> to vector<8x128xf32>
    %335 = arith.addf %333, %334 : vector<8x128xf32>
    %336 = arith.mulf %321, %335 : vector<8x128xf32>
    %337 = arith.addf %332, %336 : vector<8x128xf32>
    %338 = math.tanh %337 : vector<8x128xf32>
    %cst_124 = arith.constant 1.000000e+00 : f32
    %339 = vector.broadcast %cst_124 : f32 to vector<8x128xf32>
    %340 = arith.subf %339, %331 : vector<8x128xf32>
    %341 = arith.mulf %340, %338 : vector<8x128xf32>
    %342 = arith.mulf %331, %301 : vector<8x128xf32>
    %343 = arith.addf %341, %342 : vector<8x128xf32>
    %344 = vector.broadcast %c4_i32 : i32 to vector<8x1xi32>
    %345 = arith.cmpi sgt, %0, %344 : vector<8x1xi32>
    %346 = vector.broadcast %300 : i32 to vector<8x1xi32>
    %347 = arith.cmpi sgt, %0, %346 : vector<8x1xi32>
    %348 = vector.broadcast %11 : vector<1x128xi1> to vector<8x128xi1>
    %349 = vector.broadcast %345 : vector<8x1xi1> to vector<8x128xi1>
    %350 = arith.andi %348, %349 : vector<8x128xi1>
    %cst_125 = arith.constant dense<true> : vector<1x128xi1>
    %351 = arith.xori %11, %cst_125 : vector<1x128xi1>
    %352 = vector.broadcast %351 : vector<1x128xi1> to vector<8x128xi1>
    %353 = vector.broadcast %347 : vector<8x1xi1> to vector<8x128xi1>
    %354 = arith.andi %352, %353 : vector<8x128xi1>
    %355 = arith.ori %350, %354 : vector<8x128xi1>
    %356 = arith.select %355, %343, %301 : vector<8x128xi1>, vector<8x128xf32>
    %c0_126 = arith.constant 0 : index
    %c0_127 = arith.constant 0 : index
    %357 = vector.load %arg15[%c0_126, %c0_127] : memref<8x128xf32, #tpu.memory_space<vmem>>, vector<8x128xf32>
    tpu.vector_store %arg15[%c0_126, %c0_127], %356 {strides = array<i32>} : memref<8x128xf32, #tpu.memory_space<vmem>>, vector<8x128xf32>,
    %cst_128 = arith.constant 0.000000e+00 : f32
    %358 = vector.broadcast %cst_128 : f32 to vector<8x128xf32>
    %359 = arith.select %355, %343, %358 : vector<8x128xi1>, vector<8x128xf32>
    %360 = arith.index_cast %c4_i32 : i32 to index
    %c0_129 = arith.constant 0 : index
    %c0_130 = arith.constant 0 : index
    %361 = vector.load %arg14[%360, %c0_129, %c0_130] : memref<8x8x128xf32, #tpu.memory_space<vmem>>, vector<1x8x128xf32>
    %362 = vector.shape_cast %361 : vector<1x8x128xf32> to vector<8x128xf32>
    %363 = vector.shape_cast %359 : vector<8x128xf32> to vector<1x8x128xf32>
    tpu.vector_store %arg14[%360, %c0_129, %c0_130], %363 {strides = array<i32>} : memref<8x8x128xf32, #tpu.memory_space<vmem>>, vector<1x8x128xf32>,
    %c5_i32 = arith.constant 5 : i32
    %c7_i32_131 = arith.constant 7 : i32
    %364 = arith.subi %c7_i32_131, %c5_i32 : i32
    %c0_132 = arith.constant 0 : index
    %c0_133 = arith.constant 0 : index
    %365 = vector.load %arg15[%c0_132, %c0_133] : memref<8x128xf32, #tpu.memory_space<vmem>>, vector<8x128xf32>
    %366 = arith.index_cast %c5_i32 : i32 to index
    %c0_134 = arith.constant 0 : index
    %c0_135 = arith.constant 0 : index
    %367 = vector.load %arg13[%366, %c0_134, %c0_135] : memref<8x8x384xf32, #tpu.memory_space<vmem>>, vector<1x8x384xf32>
    %368 = vector.shape_cast %367 : vector<1x8x384xf32> to vector<8x384xf32>
    %369 = arith.index_cast %364 : i32 to index
    %c0_136 = arith.constant 0 : index
    %c0_137 = arith.constant 0 : index
    %370 = vector.load %arg13[%369, %c0_136, %c0_137] : memref<8x8x384xf32, #tpu.memory_space<vmem>>, vector<1x8x384xf32>
    %371 = vector.shape_cast %370 : vector<1x8x384xf32> to vector<8x384xf32>
    %372 = vector.shape_cast %30 : vector<1x384xi1> to vector<1x384xi1>
    %373 = vector.broadcast %372 : vector<1x384xi1> to vector<8x384xi1>
    %374 = arith.select %373, %368, %371 : vector<8x384xi1>, vector<8x384xf32>
    %cst_138 = arith.constant dense<0.000000e+00> : vector<8x384xf32>
    %375 = tpu.matmul %365, %40, %cst_138 {dimension_numbers = #tpu.dot_dimension_numbers<[1], [0], [0], [1], [0, 0, 1, 1], [], []>} : vector<8x128xf32>, vector<128x384xf32>, vector<8x384xf32> -> vector<8x384xf32>
    %376 = vector.extract_strided_slice %374 {offsets = [0, 0], sizes = [8, 128], strides = [1, 1]} : vector<8x384xf32> to vector<8x128xf32>
    %377 = vector.extract_strided_slice %375 {offsets = [0, 0], sizes = [8, 128], strides = [1, 1]} : vector<8x384xf32> to vector<8x128xf32>
    %378 = arith.addf %376, %377 : vector<8x128xf32>
    %cst_139 = arith.constant 5.000000e-01 : f32
    %379 = vector.broadcast %cst_139 : f32 to vector<8x128xf32>
    %380 = arith.mulf %379, %378 : vector<8x128xf32>
    %381 = math.tanh %380 : vector<8x128xf32>
    %cst_140 = arith.constant 5.000000e-01 : f32
    %382 = vector.broadcast %cst_140 : f32 to vector<8x128xf32>
    %383 = arith.mulf %382, %381 : vector<8x128xf32>
    %cst_141 = arith.constant 5.000000e-01 : f32
    %384 = vector.broadcast %cst_141 : f32 to vector<8x128xf32>
    %385 = arith.addf %383, %384 : vector<8x128xf32>
    %386 = vector.extract_strided_slice %374 {offsets = [0, 128], sizes = [8, 128], strides = [1, 1]} : vector<8x384xf32> to vector<8x128xf32>
    %387 = vector.extract_strided_slice %375 {offsets = [0, 128], sizes = [8, 128], strides = [1, 1]} : vector<8x384xf32> to vector<8x128xf32>
    %388 = arith.addf %386, %387 : vector<8x128xf32>
    %cst_142 = arith.constant 5.000000e-01 : f32
    %389 = vector.broadcast %cst_142 : f32 to vector<8x128xf32>
    %390 = arith.mulf %389, %388 : vector<8x128xf32>
    %391 = math.tanh %390 : vector<8x128xf32>
    %cst_143 = arith.constant 5.000000e-01 : f32
    %392 = vector.broadcast %cst_143 : f32 to vector<8x128xf32>
    %393 = arith.mulf %392, %391 : vector<8x128xf32>
    %cst_144 = arith.constant 5.000000e-01 : f32
    %394 = vector.broadcast %cst_144 : f32 to vector<8x128xf32>
    %395 = arith.addf %393, %394 : vector<8x128xf32>
    %396 = vector.extract_strided_slice %374 {offsets = [0, 256], sizes = [8, 128], strides = [1, 1]} : vector<8x384xf32> to vector<8x128xf32>
    %397 = vector.extract_strided_slice %375 {offsets = [0, 256], sizes = [8, 128], strides = [1, 1]} : vector<8x384xf32> to vector<8x128xf32>
    %398 = vector.broadcast %41 : vector<1x128xf32> to vector<8x128xf32>
    %399 = arith.addf %397, %398 : vector<8x128xf32>
    %400 = arith.mulf %385, %399 : vector<8x128xf32>
    %401 = arith.addf %396, %400 : vector<8x128xf32>
    %402 = math.tanh %401 : vector<8x128xf32>
    %cst_145 = arith.constant 1.000000e+00 : f32
    %403 = vector.broadcast %cst_145 : f32 to vector<8x128xf32>
    %404 = arith.subf %403, %395 : vector<8x128xf32>
    %405 = arith.mulf %404, %402 : vector<8x128xf32>
    %406 = arith.mulf %395, %365 : vector<8x128xf32>
    %407 = arith.addf %405, %406 : vector<8x128xf32>
    %408 = vector.broadcast %c5_i32 : i32 to vector<8x1xi32>
    %409 = arith.cmpi sgt, %0, %408 : vector<8x1xi32>
    %410 = vector.broadcast %364 : i32 to vector<8x1xi32>
    %411 = arith.cmpi sgt, %0, %410 : vector<8x1xi32>
    %412 = vector.broadcast %11 : vector<1x128xi1> to vector<8x128xi1>
    %413 = vector.broadcast %409 : vector<8x1xi1> to vector<8x128xi1>
    %414 = arith.andi %412, %413 : vector<8x128xi1>
    %cst_146 = arith.constant dense<true> : vector<1x128xi1>
    %415 = arith.xori %11, %cst_146 : vector<1x128xi1>
    %416 = vector.broadcast %415 : vector<1x128xi1> to vector<8x128xi1>
    %417 = vector.broadcast %411 : vector<8x1xi1> to vector<8x128xi1>
    %418 = arith.andi %416, %417 : vector<8x128xi1>
    %419 = arith.ori %414, %418 : vector<8x128xi1>
    %420 = arith.select %419, %407, %365 : vector<8x128xi1>, vector<8x128xf32>
    %c0_147 = arith.constant 0 : index
    %c0_148 = arith.constant 0 : index
    %421 = vector.load %arg15[%c0_147, %c0_148] : memref<8x128xf32, #tpu.memory_space<vmem>>, vector<8x128xf32>
    tpu.vector_store %arg15[%c0_147, %c0_148], %420 {strides = array<i32>} : memref<8x128xf32, #tpu.memory_space<vmem>>, vector<8x128xf32>,
    %cst_149 = arith.constant 0.000000e+00 : f32
    %422 = vector.broadcast %cst_149 : f32 to vector<8x128xf32>
    %423 = arith.select %419, %407, %422 : vector<8x128xi1>, vector<8x128xf32>
    %424 = arith.index_cast %c5_i32 : i32 to index
    %c0_150 = arith.constant 0 : index
    %c0_151 = arith.constant 0 : index
    %425 = vector.load %arg14[%424, %c0_150, %c0_151] : memref<8x8x128xf32, #tpu.memory_space<vmem>>, vector<1x8x128xf32>
    %426 = vector.shape_cast %425 : vector<1x8x128xf32> to vector<8x128xf32>
    %427 = vector.shape_cast %423 : vector<8x128xf32> to vector<1x8x128xf32>
    tpu.vector_store %arg14[%424, %c0_150, %c0_151], %427 {strides = array<i32>} : memref<8x8x128xf32, #tpu.memory_space<vmem>>, vector<1x8x128xf32>,
    %c6_i32 = arith.constant 6 : i32
    %c7_i32_152 = arith.constant 7 : i32
    %428 = arith.subi %c7_i32_152, %c6_i32 : i32
    %c0_153 = arith.constant 0 : index
    %c0_154 = arith.constant 0 : index
    %429 = vector.load %arg15[%c0_153, %c0_154] : memref<8x128xf32, #tpu.memory_space<vmem>>, vector<8x128xf32>
    %430 = arith.index_cast %c6_i32 : i32 to index
    %c0_155 = arith.constant 0 : index
    %c0_156 = arith.constant 0 : index
    %431 = vector.load %arg13[%430, %c0_155, %c0_156] : memref<8x8x384xf32, #tpu.memory_space<vmem>>, vector<1x8x384xf32>
    %432 = vector.shape_cast %431 : vector<1x8x384xf32> to vector<8x384xf32>
    %433 = arith.index_cast %428 : i32 to index
    %c0_157 = arith.constant 0 : index
    %c0_158 = arith.constant 0 : index
    %434 = vector.load %arg13[%433, %c0_157, %c0_158] : memref<8x8x384xf32, #tpu.memory_space<vmem>>, vector<1x8x384xf32>
    %435 = vector.shape_cast %434 : vector<1x8x384xf32> to vector<8x384xf32>
    %436 = vector.shape_cast %30 : vector<1x384xi1> to vector<1x384xi1>
    %437 = vector.broadcast %436 : vector<1x384xi1> to vector<8x384xi1>
    %438 = arith.select %437, %432, %435 : vector<8x384xi1>, vector<8x384xf32>
    %cst_159 = arith.constant dense<0.000000e+00> : vector<8x384xf32>
    %439 = tpu.matmul %429, %40, %cst_159 {dimension_numbers = #tpu.dot_dimension_numbers<[1], [0], [0], [1], [0, 0, 1, 1], [], []>} : vector<8x128xf32>, vector<128x384xf32>, vector<8x384xf32> -> vector<8x384xf32>
    %440 = vector.extract_strided_slice %438 {offsets = [0, 0], sizes = [8, 128], strides = [1, 1]} : vector<8x384xf32> to vector<8x128xf32>
    %441 = vector.extract_strided_slice %439 {offsets = [0, 0], sizes = [8, 128], strides = [1, 1]} : vector<8x384xf32> to vector<8x128xf32>
    %442 = arith.addf %440, %441 : vector<8x128xf32>
    %cst_160 = arith.constant 5.000000e-01 : f32
    %443 = vector.broadcast %cst_160 : f32 to vector<8x128xf32>
    %444 = arith.mulf %443, %442 : vector<8x128xf32>
    %445 = math.tanh %444 : vector<8x128xf32>
    %cst_161 = arith.constant 5.000000e-01 : f32
    %446 = vector.broadcast %cst_161 : f32 to vector<8x128xf32>
    %447 = arith.mulf %446, %445 : vector<8x128xf32>
    %cst_162 = arith.constant 5.000000e-01 : f32
    %448 = vector.broadcast %cst_162 : f32 to vector<8x128xf32>
    %449 = arith.addf %447, %448 : vector<8x128xf32>
    %450 = vector.extract_strided_slice %438 {offsets = [0, 128], sizes = [8, 128], strides = [1, 1]} : vector<8x384xf32> to vector<8x128xf32>
    %451 = vector.extract_strided_slice %439 {offsets = [0, 128], sizes = [8, 128], strides = [1, 1]} : vector<8x384xf32> to vector<8x128xf32>
    %452 = arith.addf %450, %451 : vector<8x128xf32>
    %cst_163 = arith.constant 5.000000e-01 : f32
    %453 = vector.broadcast %cst_163 : f32 to vector<8x128xf32>
    %454 = arith.mulf %453, %452 : vector<8x128xf32>
    %455 = math.tanh %454 : vector<8x128xf32>
    %cst_164 = arith.constant 5.000000e-01 : f32
    %456 = vector.broadcast %cst_164 : f32 to vector<8x128xf32>
    %457 = arith.mulf %456, %455 : vector<8x128xf32>
    %cst_165 = arith.constant 5.000000e-01 : f32
    %458 = vector.broadcast %cst_165 : f32 to vector<8x128xf32>
    %459 = arith.addf %457, %458 : vector<8x128xf32>
    %460 = vector.extract_strided_slice %438 {offsets = [0, 256], sizes = [8, 128], strides = [1, 1]} : vector<8x384xf32> to vector<8x128xf32>
    %461 = vector.extract_strided_slice %439 {offsets = [0, 256], sizes = [8, 128], strides = [1, 1]} : vector<8x384xf32> to vector<8x128xf32>
    %462 = vector.broadcast %41 : vector<1x128xf32> to vector<8x128xf32>
    %463 = arith.addf %461, %462 : vector<8x128xf32>
    %464 = arith.mulf %449, %463 : vector<8x128xf32>
    %465 = arith.addf %460, %464 : vector<8x128xf32>
    %466 = math.tanh %465 : vector<8x128xf32>
    %cst_166 = arith.constant 1.000000e+00 : f32
    %467 = vector.broadcast %cst_166 : f32 to vector<8x128xf32>
    %468 = arith.subf %467, %459 : vector<8x128xf32>
    %469 = arith.mulf %468, %466 : vector<8x128xf32>
    %470 = arith.mulf %459, %429 : vector<8x128xf32>
    %471 = arith.addf %469, %470 : vector<8x128xf32>
    %472 = vector.broadcast %c6_i32 : i32 to vector<8x1xi32>
    %473 = arith.cmpi sgt, %0, %472 : vector<8x1xi32>
    %474 = vector.broadcast %428 : i32 to vector<8x1xi32>
    %475 = arith.cmpi sgt, %0, %474 : vector<8x1xi32>
    %476 = vector.broadcast %11 : vector<1x128xi1> to vector<8x128xi1>
    %477 = vector.broadcast %473 : vector<8x1xi1> to vector<8x128xi1>
    %478 = arith.andi %476, %477 : vector<8x128xi1>
    %cst_167 = arith.constant dense<true> : vector<1x128xi1>
    %479 = arith.xori %11, %cst_167 : vector<1x128xi1>
    %480 = vector.broadcast %479 : vector<1x128xi1> to vector<8x128xi1>
    %481 = vector.broadcast %475 : vector<8x1xi1> to vector<8x128xi1>
    %482 = arith.andi %480, %481 : vector<8x128xi1>
    %483 = arith.ori %478, %482 : vector<8x128xi1>
    %484 = arith.select %483, %471, %429 : vector<8x128xi1>, vector<8x128xf32>
    %c0_168 = arith.constant 0 : index
    %c0_169 = arith.constant 0 : index
    %485 = vector.load %arg15[%c0_168, %c0_169] : memref<8x128xf32, #tpu.memory_space<vmem>>, vector<8x128xf32>
    tpu.vector_store %arg15[%c0_168, %c0_169], %484 {strides = array<i32>} : memref<8x128xf32, #tpu.memory_space<vmem>>, vector<8x128xf32>,
    %cst_170 = arith.constant 0.000000e+00 : f32
    %486 = vector.broadcast %cst_170 : f32 to vector<8x128xf32>
    %487 = arith.select %483, %471, %486 : vector<8x128xi1>, vector<8x128xf32>
    %488 = arith.index_cast %c6_i32 : i32 to index
    %c0_171 = arith.constant 0 : index
    %c0_172 = arith.constant 0 : index
    %489 = vector.load %arg14[%488, %c0_171, %c0_172] : memref<8x8x128xf32, #tpu.memory_space<vmem>>, vector<1x8x128xf32>
    %490 = vector.shape_cast %489 : vector<1x8x128xf32> to vector<8x128xf32>
    %491 = vector.shape_cast %487 : vector<8x128xf32> to vector<1x8x128xf32>
    tpu.vector_store %arg14[%488, %c0_171, %c0_172], %491 {strides = array<i32>} : memref<8x8x128xf32, #tpu.memory_space<vmem>>, vector<1x8x128xf32>,
    %c7_i32_173 = arith.constant 7 : i32
    %c7_i32_174 = arith.constant 7 : i32
    %492 = arith.subi %c7_i32_174, %c7_i32_173 : i32
    %c0_175 = arith.constant 0 : index
    %c0_176 = arith.constant 0 : index
    %493 = vector.load %arg15[%c0_175, %c0_176] : memref<8x128xf32, #tpu.memory_space<vmem>>, vector<8x128xf32>
    %494 = arith.index_cast %c7_i32_173 : i32 to index
    %c0_177 = arith.constant 0 : index
    %c0_178 = arith.constant 0 : index
    %495 = vector.load %arg13[%494, %c0_177, %c0_178] : memref<8x8x384xf32, #tpu.memory_space<vmem>>, vector<1x8x384xf32>
    %496 = vector.shape_cast %495 : vector<1x8x384xf32> to vector<8x384xf32>
    %497 = arith.index_cast %492 : i32 to index
    %c0_179 = arith.constant 0 : index
    %c0_180 = arith.constant 0 : index
    %498 = vector.load %arg13[%497, %c0_179, %c0_180] : memref<8x8x384xf32, #tpu.memory_space<vmem>>, vector<1x8x384xf32>
    %499 = vector.shape_cast %498 : vector<1x8x384xf32> to vector<8x384xf32>
    %500 = vector.shape_cast %30 : vector<1x384xi1> to vector<1x384xi1>
    %501 = vector.broadcast %500 : vector<1x384xi1> to vector<8x384xi1>
    %502 = arith.select %501, %496, %499 : vector<8x384xi1>, vector<8x384xf32>
    %cst_181 = arith.constant dense<0.000000e+00> : vector<8x384xf32>
    %503 = tpu.matmul %493, %40, %cst_181 {dimension_numbers = #tpu.dot_dimension_numbers<[1], [0], [0], [1], [0, 0, 1, 1], [], []>} : vector<8x128xf32>, vector<128x384xf32>, vector<8x384xf32> -> vector<8x384xf32>
    %504 = vector.extract_strided_slice %502 {offsets = [0, 0], sizes = [8, 128], strides = [1, 1]} : vector<8x384xf32> to vector<8x128xf32>
    %505 = vector.extract_strided_slice %503 {offsets = [0, 0], sizes = [8, 128], strides = [1, 1]} : vector<8x384xf32> to vector<8x128xf32>
    %506 = arith.addf %504, %505 : vector<8x128xf32>
    %cst_182 = arith.constant 5.000000e-01 : f32
    %507 = vector.broadcast %cst_182 : f32 to vector<8x128xf32>
    %508 = arith.mulf %507, %506 : vector<8x128xf32>
    %509 = math.tanh %508 : vector<8x128xf32>
    %cst_183 = arith.constant 5.000000e-01 : f32
    %510 = vector.broadcast %cst_183 : f32 to vector<8x128xf32>
    %511 = arith.mulf %510, %509 : vector<8x128xf32>
    %cst_184 = arith.constant 5.000000e-01 : f32
    %512 = vector.broadcast %cst_184 : f32 to vector<8x128xf32>
    %513 = arith.addf %511, %512 : vector<8x128xf32>
    %514 = vector.extract_strided_slice %502 {offsets = [0, 128], sizes = [8, 128], strides = [1, 1]} : vector<8x384xf32> to vector<8x128xf32>
    %515 = vector.extract_strided_slice %503 {offsets = [0, 128], sizes = [8, 128], strides = [1, 1]} : vector<8x384xf32> to vector<8x128xf32>
    %516 = arith.addf %514, %515 : vector<8x128xf32>
    %cst_185 = arith.constant 5.000000e-01 : f32
    %517 = vector.broadcast %cst_185 : f32 to vector<8x128xf32>
    %518 = arith.mulf %517, %516 : vector<8x128xf32>
    %519 = math.tanh %518 : vector<8x128xf32>
    %cst_186 = arith.constant 5.000000e-01 : f32
    %520 = vector.broadcast %cst_186 : f32 to vector<8x128xf32>
    %521 = arith.mulf %520, %519 : vector<8x128xf32>
    %cst_187 = arith.constant 5.000000e-01 : f32
    %522 = vector.broadcast %cst_187 : f32 to vector<8x128xf32>
    %523 = arith.addf %521, %522 : vector<8x128xf32>
    %524 = vector.extract_strided_slice %502 {offsets = [0, 256], sizes = [8, 128], strides = [1, 1]} : vector<8x384xf32> to vector<8x128xf32>
    %525 = vector.extract_strided_slice %503 {offsets = [0, 256], sizes = [8, 128], strides = [1, 1]} : vector<8x384xf32> to vector<8x128xf32>
    %526 = vector.broadcast %41 : vector<1x128xf32> to vector<8x128xf32>
    %527 = arith.addf %525, %526 : vector<8x128xf32>
    %528 = arith.mulf %513, %527 : vector<8x128xf32>
    %529 = arith.addf %524, %528 : vector<8x128xf32>
    %530 = math.tanh %529 : vector<8x128xf32>
    %cst_188 = arith.constant 1.000000e+00 : f32
    %531 = vector.broadcast %cst_188 : f32 to vector<8x128xf32>
    %532 = arith.subf %531, %523 : vector<8x128xf32>
    %533 = arith.mulf %532, %530 : vector<8x128xf32>
    %534 = arith.mulf %523, %493 : vector<8x128xf32>
    %535 = arith.addf %533, %534 : vector<8x128xf32>
    %536 = vector.broadcast %c7_i32_173 : i32 to vector<8x1xi32>
    %537 = arith.cmpi sgt, %0, %536 : vector<8x1xi32>
    %538 = vector.broadcast %492 : i32 to vector<8x1xi32>
    %539 = arith.cmpi sgt, %0, %538 : vector<8x1xi32>
    %540 = vector.broadcast %11 : vector<1x128xi1> to vector<8x128xi1>
    %541 = vector.broadcast %537 : vector<8x1xi1> to vector<8x128xi1>
    %542 = arith.andi %540, %541 : vector<8x128xi1>
    %cst_189 = arith.constant dense<true> : vector<1x128xi1>
    %543 = arith.xori %11, %cst_189 : vector<1x128xi1>
    %544 = vector.broadcast %543 : vector<1x128xi1> to vector<8x128xi1>
    %545 = vector.broadcast %539 : vector<8x1xi1> to vector<8x128xi1>
    %546 = arith.andi %544, %545 : vector<8x128xi1>
    %547 = arith.ori %542, %546 : vector<8x128xi1>
    %548 = arith.select %547, %535, %493 : vector<8x128xi1>, vector<8x128xf32>
    %c0_190 = arith.constant 0 : index
    %c0_191 = arith.constant 0 : index
    %549 = vector.load %arg15[%c0_190, %c0_191] : memref<8x128xf32, #tpu.memory_space<vmem>>, vector<8x128xf32>
    tpu.vector_store %arg15[%c0_190, %c0_191], %548 {strides = array<i32>} : memref<8x128xf32, #tpu.memory_space<vmem>>, vector<8x128xf32>,
    %cst_192 = arith.constant 0.000000e+00 : f32
    %550 = vector.broadcast %cst_192 : f32 to vector<8x128xf32>
    %551 = arith.select %547, %535, %550 : vector<8x128xi1>, vector<8x128xf32>
    %552 = arith.index_cast %c7_i32_173 : i32 to index
    %c0_193 = arith.constant 0 : index
    %c0_194 = arith.constant 0 : index
    %553 = vector.load %arg14[%552, %c0_193, %c0_194] : memref<8x8x128xf32, #tpu.memory_space<vmem>>, vector<1x8x128xf32>
    %554 = vector.shape_cast %553 : vector<1x8x128xf32> to vector<8x128xf32>
    %555 = vector.shape_cast %551 : vector<8x128xf32> to vector<1x8x128xf32>
    tpu.vector_store %arg14[%552, %c0_193, %c0_194], %555 {strides = array<i32>} : memref<8x8x128xf32, #tpu.memory_space<vmem>>, vector<1x8x128xf32>,
    %c8_i32 = arith.constant 8 : i32
    %c0_195 = arith.constant 0 : index
    %c0_196 = arith.constant 0 : index
    %c0_197 = arith.constant 0 : index
    %556 = vector.load %arg14[%c0_195, %c0_196, %c0_197] : memref<8x8x128xf32, #tpu.memory_space<vmem>>, vector<8x8x128xf32>
    %cst_198 = arith.constant dense<0.000000e+00> : vector<8x128xf32>
    %557 = vector.multi_reduction <add>, %556, %cst_198 [0] : vector<8x8x128xf32> to vector<8x128xf32>
    %558 = vector.extract_strided_slice %557 {offsets = [0, 0], sizes = [8, 64], strides = [1, 1]} : vector<8x128xf32> to vector<8x64xf32>
    %559 = vector.extract_strided_slice %557 {offsets = [0, 64], sizes = [8, 64], strides = [1, 1]} : vector<8x128xf32> to vector<8x64xf32>
    %560 = arith.addf %558, %559 : vector<8x64xf32>
    %cst_199 = arith.constant 2.000000e+00 : f32
    %561 = vector.broadcast %cst_199 : f32 to vector<8x1xf32>
    %562 = arith.mulf %561, %3 : vector<8x1xf32>
    %563 = vector.broadcast %562 : vector<8x1xf32> to vector<8x64xf32>
    %564 = arith.divf %560, %563 : vector<8x64xf32>
    %c0_200 = arith.constant 0 : index
    %c0_201 = arith.constant 0 : index
    %565 = vector.load %arg12[%c0_200, %c0_201] : memref<8x64xf32, #tpu.memory_space<vmem>>, vector<8x64xf32>
    tpu.vector_store %arg12[%c0_200, %c0_201], %564 {strides = array<i32>} : memref<8x64xf32, #tpu.memory_space<vmem>>, vector<8x64xf32>,
    %c0_202 = arith.constant 0 : index
    %c0_203 = arith.constant 0 : index
    %c0_204 = arith.constant 0 : index
    %566 = vector.load %arg14[%c0_202, %c0_203, %c0_204] : memref<8x8x128xf32, #tpu.memory_space<vmem>>, vector<8x8x128xf32>
    %567 = vector.shape_cast %566 : vector<8x8x128xf32> to vector<64x128xf32>
    %c0_205 = arith.constant 0 : index
    %c0_206 = arith.constant 0 : index
    %568 = vector.load %arg8[%c0_205, %c0_206] : memref<128x128xf32, #tpu.memory_space<vmem>>, vector<128x128xf32>
    %cst_207 = arith.constant dense<0.000000e+00> : vector<64x128xf32>
    %569 = tpu.matmul %567, %568, %cst_207 {dimension_numbers = #tpu.dot_dimension_numbers<[1], [0], [0], [1], [0, 0, 1, 1], [], []>} : vector<64x128xf32>, vector<128x128xf32>, vector<64x128xf32> -> vector<64x128xf32>
    %c0_208 = arith.constant 0 : index
    %c0_209 = arith.constant 0 : index
    %570 = vector.load %arg9[%c0_208, %c0_209] : memref<1x128xf32, #tpu.memory_space<vmem>>, vector<1x128xf32>
    %571 = vector.broadcast %570 : vector<1x128xf32> to vector<64x128xf32>
    %572 = arith.addf %569, %571 : vector<64x128xf32>
    %573 = vector.shape_cast %572 : vector<64x128xf32> to vector<8x8x128xf32>
    %574 = vector.extract_strided_slice %573 {offsets = [0, 0, 0], sizes = [8, 8, 64], strides = [1, 1, 1]} : vector<8x8x128xf32> to vector<8x8x64xf32>
    %c0_210 = arith.constant 0 : index
    %c0_211 = arith.constant 0 : index
    %c0_212 = arith.constant 0 : index
    %575 = vector.load %arg16[%c0_210, %c0_211, %c0_212] : memref<8x8x64xf32, #tpu.memory_space<vmem>>, vector<8x8x64xf32>
    tpu.vector_store %arg16[%c0_210, %c0_211, %c0_212], %574 {strides = array<i32>} : memref<8x8x64xf32, #tpu.memory_space<vmem>>, vector<8x8x64xf32>,
    %576 = vector.extract_strided_slice %573 {offsets = [0, 0, 64], sizes = [8, 8, 64], strides = [1, 1, 1]} : vector<8x8x128xf32> to vector<8x8x64xf32>
    %c0_213 = arith.constant 0 : index
    %c0_214 = arith.constant 0 : index
    %c0_215 = arith.constant 0 : index
    %577 = vector.load %arg17[%c0_213, %c0_214, %c0_215] : memref<8x8x64xf32, #tpu.memory_space<vmem>>, vector<8x8x64xf32>
    tpu.vector_store %arg17[%c0_213, %c0_214, %c0_215], %576 {strides = array<i32>} : memref<8x8x64xf32, #tpu.memory_space<vmem>>, vector<8x8x64xf32>,
    %c0_216 = arith.constant 0 : index
    %c0_217 = arith.constant 0 : index
    %578 = vector.load %arg10[%c0_216, %c0_217] : memref<32x64xf32, #tpu.memory_space<vmem>>, vector<32x64xf32>
    %cst_218 = arith.constant 0.000000e+00 : f32
    %579 = vector.broadcast %cst_218 : f32 to vector<8x32xf32>
    %c0_219 = arith.constant 0 : index
    %c0_220 = arith.constant 0 : index
    %580 = vector.load %arg18[%c0_219, %c0_220] : memref<8x32xf32, #tpu.memory_space<vmem>>, vector<8x32xf32>
    tpu.vector_store %arg18[%c0_219, %c0_220], %579 {strides = array<i32>} : memref<8x32xf32, #tpu.memory_space<vmem>>, vector<8x32xf32>,
    %c0_i32_221 = arith.constant 0 : i32
    %c0_222 = arith.constant 0 : index
    %c0_223 = arith.constant 0 : index
    %581 = vector.load %arg18[%c0_222, %c0_223] : memref<8x32xf32, #tpu.memory_space<vmem>>, vector<8x32xf32>
    %582 = arith.index_cast %c0_i32_221 : i32 to index
    %c0_224 = arith.constant 0 : index
    %c0_225 = arith.constant 0 : index
    %583 = vector.load %arg16[%582, %c0_224, %c0_225] : memref<8x8x64xf32, #tpu.memory_space<vmem>>, vector<1x8x64xf32>
    %584 = vector.shape_cast %583 : vector<1x8x64xf32> to vector<8x64xf32>
    %c7_i32_226 = arith.constant 7 : i32
    %585 = arith.subi %c7_i32_226, %c0_i32_221 : i32
    %586 = arith.index_cast %585 : i32 to index
    %c0_227 = arith.constant 0 : index
    %c0_228 = arith.constant 0 : index
    %587 = vector.load %arg17[%586, %c0_227, %c0_228] : memref<8x8x64xf32, #tpu.memory_space<vmem>>, vector<1x8x64xf32>
    %588 = vector.shape_cast %587 : vector<1x8x64xf32> to vector<8x64xf32>
    %589 = arith.addf %584, %588 : vector<8x64xf32>
    %cst_229 = arith.constant dense<0.000000e+00> : vector<8x64xf32>
    %590 = tpu.matmul %581, %578, %cst_229 {dimension_numbers = #tpu.dot_dimension_numbers<[1], [0], [0], [1], [0, 0, 1, 1], [], []>} : vector<8x32xf32>, vector<32x64xf32>, vector<8x64xf32> -> vector<8x64xf32>
    %591 = arith.addf %589, %590 : vector<8x64xf32>
    %592 = vector.extract_strided_slice %591 {offsets = [0, 0], sizes = [8, 32], strides = [1, 1]} : vector<8x64xf32> to vector<8x32xf32>
    %593 = vector.extract_strided_slice %591 {offsets = [0, 32], sizes = [8, 32], strides = [1, 1]} : vector<8x64xf32> to vector<8x32xf32>
    %cst_230 = arith.constant 5.000000e-01 : f32
    %594 = vector.broadcast %cst_230 : f32 to vector<8x32xf32>
    %595 = arith.mulf %594, %593 : vector<8x32xf32>
    %596 = math.exp %595 : vector<8x32xf32>
    %597 = arith.index_cast %c0_i32_221 : i32 to index
    %c0_231 = arith.constant 0 : index
    %c0_232 = arith.constant 0 : index
    %598 = vector.load %arg3[%597, %c0_231, %c0_232] : memref<8x8x32xf32, #tpu.memory_space<vmem>>, vector<1x8x32xf32>
    %599 = vector.shape_cast %598 : vector<1x8x32xf32> to vector<8x32xf32>
    %600 = arith.mulf %599, %596 : vector<8x32xf32>
    %601 = arith.addf %592, %600 : vector<8x32xf32>
    %602 = arith.cmpi slt, %c0_i32_221, %8 : i32
    %603 = tpu.concatenate %591, %601, %596 in 1 : vector<8x64xf32>, vector<8x32xf32>, vector<8x32xf32> -> vector<8x128xf32>
    %cst_233 = arith.constant 0.000000e+00 : f32
    %604 = vector.broadcast %cst_233 : f32 to vector<8x128xf32>
    %605 = arith.select %602, %603, %604 : vector<8x128xf32>
    %606 = arith.index_cast %c0_i32_221 : i32 to index
    %c0_234 = arith.constant 0 : index
    %c0_235 = arith.constant 0 : index
    %607 = vector.load %arg11[%606, %c0_234, %c0_235] : memref<8x8x128xf32, #tpu.memory_space<vmem>>, vector<1x8x128xf32>
    %608 = vector.shape_cast %607 : vector<1x8x128xf32> to vector<8x128xf32>
    %609 = vector.shape_cast %605 : vector<8x128xf32> to vector<1x8x128xf32>
    tpu.vector_store %arg11[%606, %c0_234, %c0_235], %609 {strides = array<i32>} : memref<8x8x128xf32, #tpu.memory_space<vmem>>, vector<1x8x128xf32>,
    %c0_236 = arith.constant 0 : index
    %c0_237 = arith.constant 0 : index
    %610 = vector.load %arg18[%c0_236, %c0_237] : memref<8x32xf32, #tpu.memory_space<vmem>>, vector<8x32xf32>
    tpu.vector_store %arg18[%c0_236, %c0_237], %601 {strides = array<i32>} : memref<8x32xf32, #tpu.memory_space<vmem>>, vector<8x32xf32>,
    %c1_i32_238 = arith.constant 1 : i32
    %c0_239 = arith.constant 0 : index
    %c0_240 = arith.constant 0 : index
    %611 = vector.load %arg18[%c0_239, %c0_240] : memref<8x32xf32, #tpu.memory_space<vmem>>, vector<8x32xf32>
    %612 = arith.index_cast %c1_i32_238 : i32 to index
    %c0_241 = arith.constant 0 : index
    %c0_242 = arith.constant 0 : index
    %613 = vector.load %arg16[%612, %c0_241, %c0_242] : memref<8x8x64xf32, #tpu.memory_space<vmem>>, vector<1x8x64xf32>
    %614 = vector.shape_cast %613 : vector<1x8x64xf32> to vector<8x64xf32>
    %c7_i32_243 = arith.constant 7 : i32
    %615 = arith.subi %c7_i32_243, %c1_i32_238 : i32
    %616 = arith.index_cast %615 : i32 to index
    %c0_244 = arith.constant 0 : index
    %c0_245 = arith.constant 0 : index
    %617 = vector.load %arg17[%616, %c0_244, %c0_245] : memref<8x8x64xf32, #tpu.memory_space<vmem>>, vector<1x8x64xf32>
    %618 = vector.shape_cast %617 : vector<1x8x64xf32> to vector<8x64xf32>
    %619 = arith.addf %614, %618 : vector<8x64xf32>
    %cst_246 = arith.constant dense<0.000000e+00> : vector<8x64xf32>
    %620 = tpu.matmul %611, %578, %cst_246 {dimension_numbers = #tpu.dot_dimension_numbers<[1], [0], [0], [1], [0, 0, 1, 1], [], []>} : vector<8x32xf32>, vector<32x64xf32>, vector<8x64xf32> -> vector<8x64xf32>
    %621 = arith.addf %619, %620 : vector<8x64xf32>
    %622 = vector.extract_strided_slice %621 {offsets = [0, 0], sizes = [8, 32], strides = [1, 1]} : vector<8x64xf32> to vector<8x32xf32>
    %623 = vector.extract_strided_slice %621 {offsets = [0, 32], sizes = [8, 32], strides = [1, 1]} : vector<8x64xf32> to vector<8x32xf32>
    %cst_247 = arith.constant 5.000000e-01 : f32
    %624 = vector.broadcast %cst_247 : f32 to vector<8x32xf32>
    %625 = arith.mulf %624, %623 : vector<8x32xf32>
    %626 = math.exp %625 : vector<8x32xf32>
    %627 = arith.index_cast %c1_i32_238 : i32 to index
    %c0_248 = arith.constant 0 : index
    %c0_249 = arith.constant 0 : index
    %628 = vector.load %arg3[%627, %c0_248, %c0_249] : memref<8x8x32xf32, #tpu.memory_space<vmem>>, vector<1x8x32xf32>
    %629 = vector.shape_cast %628 : vector<1x8x32xf32> to vector<8x32xf32>
    %630 = arith.mulf %629, %626 : vector<8x32xf32>
    %631 = arith.addf %622, %630 : vector<8x32xf32>
    %632 = arith.cmpi slt, %c1_i32_238, %8 : i32
    %633 = tpu.concatenate %621, %631, %626 in 1 : vector<8x64xf32>, vector<8x32xf32>, vector<8x32xf32> -> vector<8x128xf32>
    %cst_250 = arith.constant 0.000000e+00 : f32
    %634 = vector.broadcast %cst_250 : f32 to vector<8x128xf32>
    %635 = arith.select %632, %633, %634 : vector<8x128xf32>
    %636 = arith.index_cast %c1_i32_238 : i32 to index
    %c0_251 = arith.constant 0 : index
    %c0_252 = arith.constant 0 : index
    %637 = vector.load %arg11[%636, %c0_251, %c0_252] : memref<8x8x128xf32, #tpu.memory_space<vmem>>, vector<1x8x128xf32>
    %638 = vector.shape_cast %637 : vector<1x8x128xf32> to vector<8x128xf32>
    %639 = vector.shape_cast %635 : vector<8x128xf32> to vector<1x8x128xf32>
    tpu.vector_store %arg11[%636, %c0_251, %c0_252], %639 {strides = array<i32>} : memref<8x8x128xf32, #tpu.memory_space<vmem>>, vector<1x8x128xf32>,
    %c0_253 = arith.constant 0 : index
    %c0_254 = arith.constant 0 : index
    %640 = vector.load %arg18[%c0_253, %c0_254] : memref<8x32xf32, #tpu.memory_space<vmem>>, vector<8x32xf32>
    tpu.vector_store %arg18[%c0_253, %c0_254], %631 {strides = array<i32>} : memref<8x32xf32, #tpu.memory_space<vmem>>, vector<8x32xf32>,
    %c2_i32_255 = arith.constant 2 : i32
    %c0_256 = arith.constant 0 : index
    %c0_257 = arith.constant 0 : index
    %641 = vector.load %arg18[%c0_256, %c0_257] : memref<8x32xf32, #tpu.memory_space<vmem>>, vector<8x32xf32>
    %642 = arith.index_cast %c2_i32_255 : i32 to index
    %c0_258 = arith.constant 0 : index
    %c0_259 = arith.constant 0 : index
    %643 = vector.load %arg16[%642, %c0_258, %c0_259] : memref<8x8x64xf32, #tpu.memory_space<vmem>>, vector<1x8x64xf32>
    %644 = vector.shape_cast %643 : vector<1x8x64xf32> to vector<8x64xf32>
    %c7_i32_260 = arith.constant 7 : i32
    %645 = arith.subi %c7_i32_260, %c2_i32_255 : i32
    %646 = arith.index_cast %645 : i32 to index
    %c0_261 = arith.constant 0 : index
    %c0_262 = arith.constant 0 : index
    %647 = vector.load %arg17[%646, %c0_261, %c0_262] : memref<8x8x64xf32, #tpu.memory_space<vmem>>, vector<1x8x64xf32>
    %648 = vector.shape_cast %647 : vector<1x8x64xf32> to vector<8x64xf32>
    %649 = arith.addf %644, %648 : vector<8x64xf32>
    %cst_263 = arith.constant dense<0.000000e+00> : vector<8x64xf32>
    %650 = tpu.matmul %641, %578, %cst_263 {dimension_numbers = #tpu.dot_dimension_numbers<[1], [0], [0], [1], [0, 0, 1, 1], [], []>} : vector<8x32xf32>, vector<32x64xf32>, vector<8x64xf32> -> vector<8x64xf32>
    %651 = arith.addf %649, %650 : vector<8x64xf32>
    %652 = vector.extract_strided_slice %651 {offsets = [0, 0], sizes = [8, 32], strides = [1, 1]} : vector<8x64xf32> to vector<8x32xf32>
    %653 = vector.extract_strided_slice %651 {offsets = [0, 32], sizes = [8, 32], strides = [1, 1]} : vector<8x64xf32> to vector<8x32xf32>
    %cst_264 = arith.constant 5.000000e-01 : f32
    %654 = vector.broadcast %cst_264 : f32 to vector<8x32xf32>
    %655 = arith.mulf %654, %653 : vector<8x32xf32>
    %656 = math.exp %655 : vector<8x32xf32>
    %657 = arith.index_cast %c2_i32_255 : i32 to index
    %c0_265 = arith.constant 0 : index
    %c0_266 = arith.constant 0 : index
    %658 = vector.load %arg3[%657, %c0_265, %c0_266] : memref<8x8x32xf32, #tpu.memory_space<vmem>>, vector<1x8x32xf32>
    %659 = vector.shape_cast %658 : vector<1x8x32xf32> to vector<8x32xf32>
    %660 = arith.mulf %659, %656 : vector<8x32xf32>
    %661 = arith.addf %652, %660 : vector<8x32xf32>
    %662 = arith.cmpi slt, %c2_i32_255, %8 : i32
    %663 = tpu.concatenate %651, %661, %656 in 1 : vector<8x64xf32>, vector<8x32xf32>, vector<8x32xf32> -> vector<8x128xf32>
    %cst_267 = arith.constant 0.000000e+00 : f32
    %664 = vector.broadcast %cst_267 : f32 to vector<8x128xf32>
    %665 = arith.select %662, %663, %664 : vector<8x128xf32>
    %666 = arith.index_cast %c2_i32_255 : i32 to index
    %c0_268 = arith.constant 0 : index
    %c0_269 = arith.constant 0 : index
    %667 = vector.load %arg11[%666, %c0_268, %c0_269] : memref<8x8x128xf32, #tpu.memory_space<vmem>>, vector<1x8x128xf32>
    %668 = vector.shape_cast %667 : vector<1x8x128xf32> to vector<8x128xf32>
    %669 = vector.shape_cast %665 : vector<8x128xf32> to vector<1x8x128xf32>
    tpu.vector_store %arg11[%666, %c0_268, %c0_269], %669 {strides = array<i32>} : memref<8x8x128xf32, #tpu.memory_space<vmem>>, vector<1x8x128xf32>,
    %c0_270 = arith.constant 0 : index
    %c0_271 = arith.constant 0 : index
    %670 = vector.load %arg18[%c0_270, %c0_271] : memref<8x32xf32, #tpu.memory_space<vmem>>, vector<8x32xf32>
    tpu.vector_store %arg18[%c0_270, %c0_271], %661 {strides = array<i32>} : memref<8x32xf32, #tpu.memory_space<vmem>>, vector<8x32xf32>,
    %c3_i32_272 = arith.constant 3 : i32
    %c0_273 = arith.constant 0 : index
    %c0_274 = arith.constant 0 : index
    %671 = vector.load %arg18[%c0_273, %c0_274] : memref<8x32xf32, #tpu.memory_space<vmem>>, vector<8x32xf32>
    %672 = arith.index_cast %c3_i32_272 : i32 to index
    %c0_275 = arith.constant 0 : index
    %c0_276 = arith.constant 0 : index
    %673 = vector.load %arg16[%672, %c0_275, %c0_276] : memref<8x8x64xf32, #tpu.memory_space<vmem>>, vector<1x8x64xf32>
    %674 = vector.shape_cast %673 : vector<1x8x64xf32> to vector<8x64xf32>
    %c7_i32_277 = arith.constant 7 : i32
    %675 = arith.subi %c7_i32_277, %c3_i32_272 : i32
    %676 = arith.index_cast %675 : i32 to index
    %c0_278 = arith.constant 0 : index
    %c0_279 = arith.constant 0 : index
    %677 = vector.load %arg17[%676, %c0_278, %c0_279] : memref<8x8x64xf32, #tpu.memory_space<vmem>>, vector<1x8x64xf32>
    %678 = vector.shape_cast %677 : vector<1x8x64xf32> to vector<8x64xf32>
    %679 = arith.addf %674, %678 : vector<8x64xf32>
    %cst_280 = arith.constant dense<0.000000e+00> : vector<8x64xf32>
    %680 = tpu.matmul %671, %578, %cst_280 {dimension_numbers = #tpu.dot_dimension_numbers<[1], [0], [0], [1], [0, 0, 1, 1], [], []>} : vector<8x32xf32>, vector<32x64xf32>, vector<8x64xf32> -> vector<8x64xf32>
    %681 = arith.addf %679, %680 : vector<8x64xf32>
    %682 = vector.extract_strided_slice %681 {offsets = [0, 0], sizes = [8, 32], strides = [1, 1]} : vector<8x64xf32> to vector<8x32xf32>
    %683 = vector.extract_strided_slice %681 {offsets = [0, 32], sizes = [8, 32], strides = [1, 1]} : vector<8x64xf32> to vector<8x32xf32>
    %cst_281 = arith.constant 5.000000e-01 : f32
    %684 = vector.broadcast %cst_281 : f32 to vector<8x32xf32>
    %685 = arith.mulf %684, %683 : vector<8x32xf32>
    %686 = math.exp %685 : vector<8x32xf32>
    %687 = arith.index_cast %c3_i32_272 : i32 to index
    %c0_282 = arith.constant 0 : index
    %c0_283 = arith.constant 0 : index
    %688 = vector.load %arg3[%687, %c0_282, %c0_283] : memref<8x8x32xf32, #tpu.memory_space<vmem>>, vector<1x8x32xf32>
    %689 = vector.shape_cast %688 : vector<1x8x32xf32> to vector<8x32xf32>
    %690 = arith.mulf %689, %686 : vector<8x32xf32>
    %691 = arith.addf %682, %690 : vector<8x32xf32>
    %692 = arith.cmpi slt, %c3_i32_272, %8 : i32
    %693 = tpu.concatenate %681, %691, %686 in 1 : vector<8x64xf32>, vector<8x32xf32>, vector<8x32xf32> -> vector<8x128xf32>
    %cst_284 = arith.constant 0.000000e+00 : f32
    %694 = vector.broadcast %cst_284 : f32 to vector<8x128xf32>
    %695 = arith.select %692, %693, %694 : vector<8x128xf32>
    %696 = arith.index_cast %c3_i32_272 : i32 to index
    %c0_285 = arith.constant 0 : index
    %c0_286 = arith.constant 0 : index
    %697 = vector.load %arg11[%696, %c0_285, %c0_286] : memref<8x8x128xf32, #tpu.memory_space<vmem>>, vector<1x8x128xf32>
    %698 = vector.shape_cast %697 : vector<1x8x128xf32> to vector<8x128xf32>
    %699 = vector.shape_cast %695 : vector<8x128xf32> to vector<1x8x128xf32>
    tpu.vector_store %arg11[%696, %c0_285, %c0_286], %699 {strides = array<i32>} : memref<8x8x128xf32, #tpu.memory_space<vmem>>, vector<1x8x128xf32>,
    %c0_287 = arith.constant 0 : index
    %c0_288 = arith.constant 0 : index
    %700 = vector.load %arg18[%c0_287, %c0_288] : memref<8x32xf32, #tpu.memory_space<vmem>>, vector<8x32xf32>
    tpu.vector_store %arg18[%c0_287, %c0_288], %691 {strides = array<i32>} : memref<8x32xf32, #tpu.memory_space<vmem>>, vector<8x32xf32>,
    %c4_i32_289 = arith.constant 4 : i32
    %c0_290 = arith.constant 0 : index
    %c0_291 = arith.constant 0 : index
    %701 = vector.load %arg18[%c0_290, %c0_291] : memref<8x32xf32, #tpu.memory_space<vmem>>, vector<8x32xf32>
    %702 = arith.index_cast %c4_i32_289 : i32 to index
    %c0_292 = arith.constant 0 : index
    %c0_293 = arith.constant 0 : index
    %703 = vector.load %arg16[%702, %c0_292, %c0_293] : memref<8x8x64xf32, #tpu.memory_space<vmem>>, vector<1x8x64xf32>
    %704 = vector.shape_cast %703 : vector<1x8x64xf32> to vector<8x64xf32>
    %c7_i32_294 = arith.constant 7 : i32
    %705 = arith.subi %c7_i32_294, %c4_i32_289 : i32
    %706 = arith.index_cast %705 : i32 to index
    %c0_295 = arith.constant 0 : index
    %c0_296 = arith.constant 0 : index
    %707 = vector.load %arg17[%706, %c0_295, %c0_296] : memref<8x8x64xf32, #tpu.memory_space<vmem>>, vector<1x8x64xf32>
    %708 = vector.shape_cast %707 : vector<1x8x64xf32> to vector<8x64xf32>
    %709 = arith.addf %704, %708 : vector<8x64xf32>
    %cst_297 = arith.constant dense<0.000000e+00> : vector<8x64xf32>
    %710 = tpu.matmul %701, %578, %cst_297 {dimension_numbers = #tpu.dot_dimension_numbers<[1], [0], [0], [1], [0, 0, 1, 1], [], []>} : vector<8x32xf32>, vector<32x64xf32>, vector<8x64xf32> -> vector<8x64xf32>
    %711 = arith.addf %709, %710 : vector<8x64xf32>
    %712 = vector.extract_strided_slice %711 {offsets = [0, 0], sizes = [8, 32], strides = [1, 1]} : vector<8x64xf32> to vector<8x32xf32>
    %713 = vector.extract_strided_slice %711 {offsets = [0, 32], sizes = [8, 32], strides = [1, 1]} : vector<8x64xf32> to vector<8x32xf32>
    %cst_298 = arith.constant 5.000000e-01 : f32
    %714 = vector.broadcast %cst_298 : f32 to vector<8x32xf32>
    %715 = arith.mulf %714, %713 : vector<8x32xf32>
    %716 = math.exp %715 : vector<8x32xf32>
    %717 = arith.index_cast %c4_i32_289 : i32 to index
    %c0_299 = arith.constant 0 : index
    %c0_300 = arith.constant 0 : index
    %718 = vector.load %arg3[%717, %c0_299, %c0_300] : memref<8x8x32xf32, #tpu.memory_space<vmem>>, vector<1x8x32xf32>
    %719 = vector.shape_cast %718 : vector<1x8x32xf32> to vector<8x32xf32>
    %720 = arith.mulf %719, %716 : vector<8x32xf32>
    %721 = arith.addf %712, %720 : vector<8x32xf32>
    %722 = arith.cmpi slt, %c4_i32_289, %8 : i32
    %723 = tpu.concatenate %711, %721, %716 in 1 : vector<8x64xf32>, vector<8x32xf32>, vector<8x32xf32> -> vector<8x128xf32>
    %cst_301 = arith.constant 0.000000e+00 : f32
    %724 = vector.broadcast %cst_301 : f32 to vector<8x128xf32>
    %725 = arith.select %722, %723, %724 : vector<8x128xf32>
    %726 = arith.index_cast %c4_i32_289 : i32 to index
    %c0_302 = arith.constant 0 : index
    %c0_303 = arith.constant 0 : index
    %727 = vector.load %arg11[%726, %c0_302, %c0_303] : memref<8x8x128xf32, #tpu.memory_space<vmem>>, vector<1x8x128xf32>
    %728 = vector.shape_cast %727 : vector<1x8x128xf32> to vector<8x128xf32>
    %729 = vector.shape_cast %725 : vector<8x128xf32> to vector<1x8x128xf32>
    tpu.vector_store %arg11[%726, %c0_302, %c0_303], %729 {strides = array<i32>} : memref<8x8x128xf32, #tpu.memory_space<vmem>>, vector<1x8x128xf32>,
    %c0_304 = arith.constant 0 : index
    %c0_305 = arith.constant 0 : index
    %730 = vector.load %arg18[%c0_304, %c0_305] : memref<8x32xf32, #tpu.memory_space<vmem>>, vector<8x32xf32>
    tpu.vector_store %arg18[%c0_304, %c0_305], %721 {strides = array<i32>} : memref<8x32xf32, #tpu.memory_space<vmem>>, vector<8x32xf32>,
    %c5_i32_306 = arith.constant 5 : i32
    %c0_307 = arith.constant 0 : index
    %c0_308 = arith.constant 0 : index
    %731 = vector.load %arg18[%c0_307, %c0_308] : memref<8x32xf32, #tpu.memory_space<vmem>>, vector<8x32xf32>
    %732 = arith.index_cast %c5_i32_306 : i32 to index
    %c0_309 = arith.constant 0 : index
    %c0_310 = arith.constant 0 : index
    %733 = vector.load %arg16[%732, %c0_309, %c0_310] : memref<8x8x64xf32, #tpu.memory_space<vmem>>, vector<1x8x64xf32>
    %734 = vector.shape_cast %733 : vector<1x8x64xf32> to vector<8x64xf32>
    %c7_i32_311 = arith.constant 7 : i32
    %735 = arith.subi %c7_i32_311, %c5_i32_306 : i32
    %736 = arith.index_cast %735 : i32 to index
    %c0_312 = arith.constant 0 : index
    %c0_313 = arith.constant 0 : index
    %737 = vector.load %arg17[%736, %c0_312, %c0_313] : memref<8x8x64xf32, #tpu.memory_space<vmem>>, vector<1x8x64xf32>
    %738 = vector.shape_cast %737 : vector<1x8x64xf32> to vector<8x64xf32>
    %739 = arith.addf %734, %738 : vector<8x64xf32>
    %cst_314 = arith.constant dense<0.000000e+00> : vector<8x64xf32>
    %740 = tpu.matmul %731, %578, %cst_314 {dimension_numbers = #tpu.dot_dimension_numbers<[1], [0], [0], [1], [0, 0, 1, 1], [], []>} : vector<8x32xf32>, vector<32x64xf32>, vector<8x64xf32> -> vector<8x64xf32>
    %741 = arith.addf %739, %740 : vector<8x64xf32>
    %742 = vector.extract_strided_slice %741 {offsets = [0, 0], sizes = [8, 32], strides = [1, 1]} : vector<8x64xf32> to vector<8x32xf32>
    %743 = vector.extract_strided_slice %741 {offsets = [0, 32], sizes = [8, 32], strides = [1, 1]} : vector<8x64xf32> to vector<8x32xf32>
    %cst_315 = arith.constant 5.000000e-01 : f32
    %744 = vector.broadcast %cst_315 : f32 to vector<8x32xf32>
    %745 = arith.mulf %744, %743 : vector<8x32xf32>
    %746 = math.exp %745 : vector<8x32xf32>
    %747 = arith.index_cast %c5_i32_306 : i32 to index
    %c0_316 = arith.constant 0 : index
    %c0_317 = arith.constant 0 : index
    %748 = vector.load %arg3[%747, %c0_316, %c0_317] : memref<8x8x32xf32, #tpu.memory_space<vmem>>, vector<1x8x32xf32>
    %749 = vector.shape_cast %748 : vector<1x8x32xf32> to vector<8x32xf32>
    %750 = arith.mulf %749, %746 : vector<8x32xf32>
    %751 = arith.addf %742, %750 : vector<8x32xf32>
    %752 = arith.cmpi slt, %c5_i32_306, %8 : i32
    %753 = tpu.concatenate %741, %751, %746 in 1 : vector<8x64xf32>, vector<8x32xf32>, vector<8x32xf32> -> vector<8x128xf32>
    %cst_318 = arith.constant 0.000000e+00 : f32
    %754 = vector.broadcast %cst_318 : f32 to vector<8x128xf32>
    %755 = arith.select %752, %753, %754 : vector<8x128xf32>
    %756 = arith.index_cast %c5_i32_306 : i32 to index
    %c0_319 = arith.constant 0 : index
    %c0_320 = arith.constant 0 : index
    %757 = vector.load %arg11[%756, %c0_319, %c0_320] : memref<8x8x128xf32, #tpu.memory_space<vmem>>, vector<1x8x128xf32>
    %758 = vector.shape_cast %757 : vector<1x8x128xf32> to vector<8x128xf32>
    %759 = vector.shape_cast %755 : vector<8x128xf32> to vector<1x8x128xf32>
    tpu.vector_store %arg11[%756, %c0_319, %c0_320], %759 {strides = array<i32>} : memref<8x8x128xf32, #tpu.memory_space<vmem>>, vector<1x8x128xf32>,
    %c0_321 = arith.constant 0 : index
    %c0_322 = arith.constant 0 : index
    %760 = vector.load %arg18[%c0_321, %c0_322] : memref<8x32xf32, #tpu.memory_space<vmem>>, vector<8x32xf32>
    tpu.vector_store %arg18[%c0_321, %c0_322], %751 {strides = array<i32>} : memref<8x32xf32, #tpu.memory_space<vmem>>, vector<8x32xf32>,
    %c6_i32_323 = arith.constant 6 : i32
    %c0_324 = arith.constant 0 : index
    %c0_325 = arith.constant 0 : index
    %761 = vector.load %arg18[%c0_324, %c0_325] : memref<8x32xf32, #tpu.memory_space<vmem>>, vector<8x32xf32>
    %762 = arith.index_cast %c6_i32_323 : i32 to index
    %c0_326 = arith.constant 0 : index
    %c0_327 = arith.constant 0 : index
    %763 = vector.load %arg16[%762, %c0_326, %c0_327] : memref<8x8x64xf32, #tpu.memory_space<vmem>>, vector<1x8x64xf32>
    %764 = vector.shape_cast %763 : vector<1x8x64xf32> to vector<8x64xf32>
    %c7_i32_328 = arith.constant 7 : i32
    %765 = arith.subi %c7_i32_328, %c6_i32_323 : i32
    %766 = arith.index_cast %765 : i32 to index
    %c0_329 = arith.constant 0 : index
    %c0_330 = arith.constant 0 : index
    %767 = vector.load %arg17[%766, %c0_329, %c0_330] : memref<8x8x64xf32, #tpu.memory_space<vmem>>, vector<1x8x64xf32>
    %768 = vector.shape_cast %767 : vector<1x8x64xf32> to vector<8x64xf32>
    %769 = arith.addf %764, %768 : vector<8x64xf32>
    %cst_331 = arith.constant dense<0.000000e+00> : vector<8x64xf32>
    %770 = tpu.matmul %761, %578, %cst_331 {dimension_numbers = #tpu.dot_dimension_numbers<[1], [0], [0], [1], [0, 0, 1, 1], [], []>} : vector<8x32xf32>, vector<32x64xf32>, vector<8x64xf32> -> vector<8x64xf32>
    %771 = arith.addf %769, %770 : vector<8x64xf32>
    %772 = vector.extract_strided_slice %771 {offsets = [0, 0], sizes = [8, 32], strides = [1, 1]} : vector<8x64xf32> to vector<8x32xf32>
    %773 = vector.extract_strided_slice %771 {offsets = [0, 32], sizes = [8, 32], strides = [1, 1]} : vector<8x64xf32> to vector<8x32xf32>
    %cst_332 = arith.constant 5.000000e-01 : f32
    %774 = vector.broadcast %cst_332 : f32 to vector<8x32xf32>
    %775 = arith.mulf %774, %773 : vector<8x32xf32>
    %776 = math.exp %775 : vector<8x32xf32>
    %777 = arith.index_cast %c6_i32_323 : i32 to index
    %c0_333 = arith.constant 0 : index
    %c0_334 = arith.constant 0 : index
    %778 = vector.load %arg3[%777, %c0_333, %c0_334] : memref<8x8x32xf32, #tpu.memory_space<vmem>>, vector<1x8x32xf32>
    %779 = vector.shape_cast %778 : vector<1x8x32xf32> to vector<8x32xf32>
    %780 = arith.mulf %779, %776 : vector<8x32xf32>
    %781 = arith.addf %772, %780 : vector<8x32xf32>
    %782 = arith.cmpi slt, %c6_i32_323, %8 : i32
    %783 = tpu.concatenate %771, %781, %776 in 1 : vector<8x64xf32>, vector<8x32xf32>, vector<8x32xf32> -> vector<8x128xf32>
    %cst_335 = arith.constant 0.000000e+00 : f32
    %784 = vector.broadcast %cst_335 : f32 to vector<8x128xf32>
    %785 = arith.select %782, %783, %784 : vector<8x128xf32>
    %786 = arith.index_cast %c6_i32_323 : i32 to index
    %c0_336 = arith.constant 0 : index
    %c0_337 = arith.constant 0 : index
    %787 = vector.load %arg11[%786, %c0_336, %c0_337] : memref<8x8x128xf32, #tpu.memory_space<vmem>>, vector<1x8x128xf32>
    %788 = vector.shape_cast %787 : vector<1x8x128xf32> to vector<8x128xf32>
    %789 = vector.shape_cast %785 : vector<8x128xf32> to vector<1x8x128xf32>
    tpu.vector_store %arg11[%786, %c0_336, %c0_337], %789 {strides = array<i32>} : memref<8x8x128xf32, #tpu.memory_space<vmem>>, vector<1x8x128xf32>,
    %c0_338 = arith.constant 0 : index
    %c0_339 = arith.constant 0 : index
    %790 = vector.load %arg18[%c0_338, %c0_339] : memref<8x32xf32, #tpu.memory_space<vmem>>, vector<8x32xf32>
    tpu.vector_store %arg18[%c0_338, %c0_339], %781 {strides = array<i32>} : memref<8x32xf32, #tpu.memory_space<vmem>>, vector<8x32xf32>,
    %c7_i32_340 = arith.constant 7 : i32
    %c0_341 = arith.constant 0 : index
    %c0_342 = arith.constant 0 : index
    %791 = vector.load %arg18[%c0_341, %c0_342] : memref<8x32xf32, #tpu.memory_space<vmem>>, vector<8x32xf32>
    %792 = arith.index_cast %c7_i32_340 : i32 to index
    %c0_343 = arith.constant 0 : index
    %c0_344 = arith.constant 0 : index
    %793 = vector.load %arg16[%792, %c0_343, %c0_344] : memref<8x8x64xf32, #tpu.memory_space<vmem>>, vector<1x8x64xf32>
    %794 = vector.shape_cast %793 : vector<1x8x64xf32> to vector<8x64xf32>
    %c7_i32_345 = arith.constant 7 : i32
    %795 = arith.subi %c7_i32_345, %c7_i32_340 : i32
    %796 = arith.index_cast %795 : i32 to index
    %c0_346 = arith.constant 0 : index
    %c0_347 = arith.constant 0 : index
    %797 = vector.load %arg17[%796, %c0_346, %c0_347] : memref<8x8x64xf32, #tpu.memory_space<vmem>>, vector<1x8x64xf32>
    %798 = vector.shape_cast %797 : vector<1x8x64xf32> to vector<8x64xf32>
    %799 = arith.addf %794, %798 : vector<8x64xf32>
    %cst_348 = arith.constant dense<0.000000e+00> : vector<8x64xf32>
    %800 = tpu.matmul %791, %578, %cst_348 {dimension_numbers = #tpu.dot_dimension_numbers<[1], [0], [0], [1], [0, 0, 1, 1], [], []>} : vector<8x32xf32>, vector<32x64xf32>, vector<8x64xf32> -> vector<8x64xf32>
    %801 = arith.addf %799, %800 : vector<8x64xf32>
    %802 = vector.extract_strided_slice %801 {offsets = [0, 0], sizes = [8, 32], strides = [1, 1]} : vector<8x64xf32> to vector<8x32xf32>
    %803 = vector.extract_strided_slice %801 {offsets = [0, 32], sizes = [8, 32], strides = [1, 1]} : vector<8x64xf32> to vector<8x32xf32>
    %cst_349 = arith.constant 5.000000e-01 : f32
    %804 = vector.broadcast %cst_349 : f32 to vector<8x32xf32>
    %805 = arith.mulf %804, %803 : vector<8x32xf32>
    %806 = math.exp %805 : vector<8x32xf32>
    %807 = arith.index_cast %c7_i32_340 : i32 to index
    %c0_350 = arith.constant 0 : index
    %c0_351 = arith.constant 0 : index
    %808 = vector.load %arg3[%807, %c0_350, %c0_351] : memref<8x8x32xf32, #tpu.memory_space<vmem>>, vector<1x8x32xf32>
    %809 = vector.shape_cast %808 : vector<1x8x32xf32> to vector<8x32xf32>
    %810 = arith.mulf %809, %806 : vector<8x32xf32>
    %811 = arith.addf %802, %810 : vector<8x32xf32>
    %812 = arith.cmpi slt, %c7_i32_340, %8 : i32
    %813 = tpu.concatenate %801, %811, %806 in 1 : vector<8x64xf32>, vector<8x32xf32>, vector<8x32xf32> -> vector<8x128xf32>
    %cst_352 = arith.constant 0.000000e+00 : f32
    %814 = vector.broadcast %cst_352 : f32 to vector<8x128xf32>
    %815 = arith.select %812, %813, %814 : vector<8x128xf32>
    %816 = arith.index_cast %c7_i32_340 : i32 to index
    %c0_353 = arith.constant 0 : index
    %c0_354 = arith.constant 0 : index
    %817 = vector.load %arg11[%816, %c0_353, %c0_354] : memref<8x8x128xf32, #tpu.memory_space<vmem>>, vector<1x8x128xf32>
    %818 = vector.shape_cast %817 : vector<1x8x128xf32> to vector<8x128xf32>
    %819 = vector.shape_cast %815 : vector<8x128xf32> to vector<1x8x128xf32>
    tpu.vector_store %arg11[%816, %c0_353, %c0_354], %819 {strides = array<i32>} : memref<8x8x128xf32, #tpu.memory_space<vmem>>, vector<1x8x128xf32>,
    %c0_355 = arith.constant 0 : index
    %c0_356 = arith.constant 0 : index
    %820 = vector.load %arg18[%c0_355, %c0_356] : memref<8x32xf32, #tpu.memory_space<vmem>>, vector<8x32xf32>
    tpu.vector_store %arg18[%c0_355, %c0_356], %811 {strides = array<i32>} : memref<8x32xf32, #tpu.memory_space<vmem>>, vector<8x32xf32>,
    %c8_i32_357 = arith.constant 8 : i32
    return
  }
  func.func @transform_0(%arg0: i32) -> (i32, i32, i32) {
    %c0_i32 = arith.constant 0 : i32
    %c0_i32_0 = arith.constant 0 : i32
    %c0_i32_1 = arith.constant 0 : i32
    return %c0_i32, %arg0, %c0_i32_0 : i32, i32, i32
  }
  func.func @transform_1(%arg0: i32) -> (i32, i32) {
    %c0_i32 = arith.constant 0 : i32
    %c0_i32_0 = arith.constant 0 : i32
    return %arg0, %c0_i32 : i32, i32
  }
  func.func @transform_2(%arg0: i32) -> (i32, i32, i32) {
    %c0_i32 = arith.constant 0 : i32
    %c0_i32_0 = arith.constant 0 : i32
    %c0_i32_1 = arith.constant 0 : i32
    return %c0_i32, %arg0, %c0_i32_0 : i32, i32, i32
  }
  func.func @transform_3(%arg0: i32) -> (i32, i32) {
    %c0_i32 = arith.constant 0 : i32
    %c0_i32_0 = arith.constant 0 : i32
    %c0_i32_1 = arith.constant 0 : i32
    return %c0_i32, %c0_i32_0 : i32, i32
  }
  func.func @transform_4(%arg0: i32) -> (i32, i32) {
    %c0_i32 = arith.constant 0 : i32
    %c0_i32_0 = arith.constant 0 : i32
    %c0_i32_1 = arith.constant 0 : i32
    return %c0_i32, %c0_i32_0 : i32, i32
  }
  func.func @transform_5(%arg0: i32) -> (i32, i32) {
    %c0_i32 = arith.constant 0 : i32
    %c0_i32_0 = arith.constant 0 : i32
    %c0_i32_1 = arith.constant 0 : i32
    return %c0_i32, %c0_i32_0 : i32, i32
  }
  func.func @transform_6(%arg0: i32) -> (i32, i32) {
    %c0_i32 = arith.constant 0 : i32
    %c0_i32_0 = arith.constant 0 : i32
    %c0_i32_1 = arith.constant 0 : i32
    return %c0_i32, %c0_i32_0 : i32, i32
  }
  func.func @transform_7(%arg0: i32) -> (i32, i32) {
    %c0_i32 = arith.constant 0 : i32
    %c0_i32_0 = arith.constant 0 : i32
    %c0_i32_1 = arith.constant 0 : i32
    return %c0_i32, %c0_i32_0 : i32, i32
  }
  func.func @transform_8(%arg0: i32) -> (i32, i32) {
    %c0_i32 = arith.constant 0 : i32
    %c0_i32_0 = arith.constant 0 : i32
    %c0_i32_1 = arith.constant 0 : i32
    return %c0_i32, %c0_i32_0 : i32, i32
  }
  func.func @transform_9(%arg0: i32) -> (i32, i32) {
    %c0_i32 = arith.constant 0 : i32
    %c0_i32_0 = arith.constant 0 : i32
    %c0_i32_1 = arith.constant 0 : i32
    return %c0_i32, %c0_i32_0 : i32, i32
  }
  func.func @transform_10(%arg0: i32) -> (i32, i32, i32) {
    %c0_i32 = arith.constant 0 : i32
    %c0_i32_0 = arith.constant 0 : i32
    %c0_i32_1 = arith.constant 0 : i32
    return %c0_i32, %arg0, %c0_i32_0 : i32, i32, i32
  }
  func.func @transform_11(%arg0: i32) -> (i32, i32) {
    %c0_i32 = arith.constant 0 : i32
    %c0_i32_0 = arith.constant 0 : i32
    return %arg0, %c0_i32 : i32, i32
  }
}

</mosaic_0001>

<llo_original>
// kernel: tpu_custom_call.1
$region0: #{tpu_custom_call.1}
  #allocation0 [shape = 'u32[]', space=smem, size = 0x4, offset = 0x4, fixed_abs, tag = 'smem constant byte address 0x4 - core index']
  #allocation1 [shape = 'u32[144,128]{1,0:T(1,128)}', space=vmem, size = 0x12000, scoped, tag = 'internal scratch']
  #allocation2 [shape = 'f32[8,8,384]{2,1,0:T(8,128)}', space=vmem, size = 0x18000, scoped, tag = 'scratch operand']
  #allocation3 [shape = 'f32[8,8,128]{2,1,0:T(8,128)}', space=vmem, size = 0x8000, scoped, tag = 'scratch operand']
  #allocation4 [shape = 'f32[8,128]{1,0:T(8,128)}', space=vmem, size = 0x1000, scoped, tag = 'scratch operand']
  #allocation5 [shape = 'f32[8,8,64]{2,1,0:T(8,128)}', space=vmem, size = 0x8000, scoped, tag = 'scratch operand']
  #allocation6 [shape = 'f32[8,8,64]{2,1,0:T(8,128)}', space=vmem, size = 0x8000, scoped, tag = 'scratch operand']
  #allocation7 [shape = 'f32[8,32]{1,0:T(8,128)}', space=vmem, size = 0x1000, scoped, tag = 'scratch operand']
  %s0 = inlined_call_operand.hbm [shape: f32[8,8,32], index: 0, kind: input, shape index: {}]
  %s1 = inlined_call_operand.vmem [shape: s32[8,2], index: 1, kind: input, shape index: {}]
  %s2 = inlined_call_operand.hbm [shape: f32[8,8,32], index: 2, kind: input, shape index: {}]
  %s3 = inlined_call_operand.hbm [shape: f32[32,384], index: 3, kind: input, shape index: {}]
  %s4 = inlined_call_operand.vmem [shape: f32[1,384], index: 4, kind: input, shape index: {}]
  %s5 = inlined_call_operand.hbm [shape: f32[128,384], index: 5, kind: input, shape index: {}]
  %s6 = inlined_call_operand.vmem [shape: f32[1,128], index: 6, kind: input, shape index: {}]
  %s7 = inlined_call_operand.hbm [shape: f32[128,128], index: 7, kind: input, shape index: {}]
  %s8 = inlined_call_operand.vmem [shape: f32[1,128], index: 8, kind: input, shape index: {}]
  %s9 = inlined_call_operand.vmem [shape: f32[32,64], index: 9, kind: input, shape index: {}]
  %s10 = inlined_call_operand.hbm [shape: f32[8,8,128], index: 10, kind: output, shape index: {0}]
  %s11 = inlined_call_operand.hbm [shape: f32[8,64], index: 11, kind: output, shape index: {1}]
  %12 = xla_tuple %s10, %s11
  %s13 = sld [smem:[#allocation0]]
  $region78: #{tpu_custom_call.1} parent=0
    _
  %s15 = ssub.s32 1, %s13
  %s16 = scalar_select 0, %s15, %s13
  $region1: #{tpu_custom_call.1} parent=0
    #allocation8 [shape = 'u8[32768]{0}', space=vmem, size = 0x8000, scoped, tag = 'input window, operand 0, single buffered']
    #allocation9 [shape = 's32[1]{0}', space=sflag, size = 0x4, scoped, tag = 'scoped memory for tpu_custom_call.1']
    #allocation10 [shape = 's32[1]{0}', space=sflag, size = 0x4, scoped, tag = 'scoped memory for tpu_custom_call.1']
    #allocation11 [shape = 'u8[32768]{0}', space=vmem, size = 0x8000, scoped, tag = 'input window, operand 2, single buffered']
    #allocation12 [shape = 's32[1]{0}', space=sflag, size = 0x4, scoped, tag = 'scoped memory for tpu_custom_call.1']
    #allocation13 [shape = 'u8[49152]{0}', space=vmem, size = 0xc000, scoped, tag = 'input window, operand 3, single buffered']
    #allocation14 [shape = 'u8[196608]{0}', space=vmem, size = 0x30000, scoped, tag = 'input window, operand 5, single buffered']
    #allocation15 [shape = 's32[1]{0}', space=sflag, size = 0x4, scoped, tag = 'scoped memory for tpu_custom_call.1']
    #allocation16 [shape = 'u8[65536]{0}', space=vmem, size = 0x10000, scoped, tag = 'input window, operand 7, single buffered']
    #allocation17 [shape = 'u8[32768]{0}', space=vmem, size = 0x8000, scoped, tag = 'output window, operand 0, single buffered']
    #allocation18 [shape = 'u8[4096]{0}', space=vmem, size = 0x1000, scoped, tag = 'output window, operand 1, single buffered']
    #allocation19 [shape = 's32[1]{0}', space=sflag, size = 0x4, scoped, tag = 'scoped memory for tpu_custom_call.1']
    %17 = vsyncpa [#allocation9], 0
    %18 = vsyncpa [#allocation12], 0
    %19 = vsyncpa [#allocation15], 0
    %20 = vsyncpa [#allocation10], 0
    %21 = vsyncpa [#allocation19], 0
    // Predicated region
    $region2: #{tpu_custom_call.1} parent=1 // pred_check
      _
    $region3: #{tpu_custom_call.1} parent=1 // pred_check_branch
      %23 = sbr.rel (0) target = $region5
    $region4: #{tpu_custom_call.1} parent=1 // pred_region
      %s25 = ssub.s32 1024, 1024
      %26 = vsyncadd [#allocation9], %s25
      %s27 = sshll.u32 [#allocation8], 4
      %s28 = int_to_ptr.vmem [resolvable:$true] %s27
      %33 = dma.hbm_to_vmem [thread:$0]  %s0, 1024, %s28, [#allocation9], 128, 128, 8
    $region5: #{tpu_custom_call.1} parent=1 // pred_fallthru
      _
    // Predicated region
    $region6: #{tpu_custom_call.1} parent=1 // pred_check
      _
    $region7: #{tpu_custom_call.1} parent=1 // pred_check_branch
      %35 = sbr.rel (0) target = $region9
    $region8: #{tpu_custom_call.1} parent=1 // pred_region
      _
    $region9: #{tpu_custom_call.1} parent=1 // pred_fallthru
      _
    // Predicated region
    $region10: #{tpu_custom_call.1} parent=1 // pred_check
      _
    $region11: #{tpu_custom_call.1} parent=1 // pred_check_branch
      %37 = sbr.rel (0) target = $region13
    $region12: #{tpu_custom_call.1} parent=1 // pred_region
      %s39 = ssub.s32 1024, 1024
      %40 = vsyncadd [#allocation12], %s39
      %s41 = sshll.u32 [#allocation11], 4
      %s42 = int_to_ptr.vmem [resolvable:$true] %s41
      %47 = dma.hbm_to_vmem [thread:$0]  %s2, 1024, %s42, [#allocation12], 128, 128, 8
    $region13: #{tpu_custom_call.1} parent=1 // pred_fallthru
      _
    // Predicated region
    $region14: #{tpu_custom_call.1} parent=1 // pred_check
      _
    $region15: #{tpu_custom_call.1} parent=1 // pred_check_branch
      %49 = sbr.rel (0) target = $region17
    $region16: #{tpu_custom_call.1} parent=1 // pred_region
      %s51 = ssub.s32 1536, 1536
      %52 = vsyncadd [#allocation12], %s51
      %s53 = sshll.u32 [#allocation13], 4
      %s54 = int_to_ptr.vmem [resolvable:$true] %s53
      %59 = dma.hbm_to_vmem [thread:$0]  %s3, 1536, %s54, [#allocation12], 384, 384, 24
    $region17: #{tpu_custom_call.1} parent=1 // pred_fallthru
      _
    // Predicated region
    $region18: #{tpu_custom_call.1} parent=1 // pred_check
      _
    $region19: #{tpu_custom_call.1} parent=1 // pred_check_branch
      %61 = sbr.rel (0) target = $region21
    $region20: #{tpu_custom_call.1} parent=1 // pred_region
      _
    $region21: #{tpu_custom_call.1} parent=1 // pred_fallthru
      _
    // Predicated region
    $region22: #{tpu_custom_call.1} parent=1 // pred_check
      _
    $region23: #{tpu_custom_call.1} parent=1 // pred_check_branch
      %63 = sbr.rel (0) target = $region25
    $region24: #{tpu_custom_call.1} parent=1 // pred_region
      %s65 = ssub.s32 6144, 6144
      %66 = vsyncadd [#allocation15], %s65
      %s67 = sshll.u32 [#allocation14], 4
      %s68 = int_to_ptr.vmem [resolvable:$true] %s67
      %73 = dma.hbm_to_vmem [thread:$0]  %s5, 6144, %s68, [#allocation15], 384, 384, 24
    $region25: #{tpu_custom_call.1} parent=1 // pred_fallthru
      _
    // Predicated region
    $region26: #{tpu_custom_call.1} parent=1 // pred_check
      _
    $region27: #{tpu_custom_call.1} parent=1 // pred_check_branch
      %75 = sbr.rel (0) target = $region29
    $region28: #{tpu_custom_call.1} parent=1 // pred_region
      _
    $region29: #{tpu_custom_call.1} parent=1 // pred_fallthru
      _
    // Predicated region
    $region30: #{tpu_custom_call.1} parent=1 // pred_check
      _
    $region31: #{tpu_custom_call.1} parent=1 // pred_check_branch
      %77 = sbr.rel (0) target = $region33
    $region32: #{tpu_custom_call.1} parent=1 // pred_region
      %s79 = ssub.s32 2048, 2048
      %80 = vsyncadd [#allocation15], %s79
      %s81 = sshll.u32 [#allocation16], 4
      %s82 = int_to_ptr.vmem [resolvable:$true] %s81
      %87 = dma.hbm_to_vmem [thread:$0]  %s7, 2048, %s82, [#allocation15], 128, 128, 8
    $region33: #{tpu_custom_call.1} parent=1 // pred_fallthru
      _
    // Predicated region
    $region34: #{tpu_custom_call.1} parent=1 // pred_check
      _
    $region35: #{tpu_custom_call.1} parent=1 // pred_check_branch
      %89 = sbr.rel (0) target = $region37
    $region36: #{tpu_custom_call.1} parent=1 // pred_region
      _
    $region37: #{tpu_custom_call.1} parent=1 // pred_fallthru
      _
    // Predicated region
    $region38: #{tpu_custom_call.1} parent=1 // pred_check
      _
    $region39: #{tpu_custom_call.1} parent=1 // pred_check_branch
      %91 = sbr.rel (0) target = $region41
    $region40: #{tpu_custom_call.1} parent=1 // pred_region
      _
    $region41: #{tpu_custom_call.1} parent=1 // pred_fallthru
      _
    // Predicated region
    $region42: #{tpu_custom_call.1} parent=1 // pred_check
      _
    $region43: #{tpu_custom_call.1} parent=1 // pred_check_branch
      %93 = sbr.rel (0) target = $region45
    $region44: #{tpu_custom_call.1} parent=1 // pred_region
      %94 = dma.done [#allocation9], 1024
    $region45: #{tpu_custom_call.1} parent=1 // pred_fallthru
      _
    // Predicated region
    $region46: #{tpu_custom_call.1} parent=1 // pred_check
      _
    $region47: #{tpu_custom_call.1} parent=1 // pred_check_branch
      %96 = sbr.rel (0) target = $region49
    $region48: #{tpu_custom_call.1} parent=1 // pred_region
      %97 = dma.done [#allocation12], 1024
    $region49: #{tpu_custom_call.1} parent=1 // pred_fallthru
      _
    // Predicated region
    $region50: #{tpu_custom_call.1} parent=1 // pred_check
      _
    $region51: #{tpu_custom_call.1} parent=1 // pred_check_branch
      %99 = sbr.rel (0) target = $region53
    $region52: #{tpu_custom_call.1} parent=1 // pred_region
      %100 = dma.done [#allocation12], 1536
    $region53: #{tpu_custom_call.1} parent=1 // pred_fallthru
      _
    // Predicated region
    $region54: #{tpu_custom_call.1} parent=1 // pred_check
      _
    $region55: #{tpu_custom_call.1} parent=1 // pred_check_branch
      %102 = sbr.rel (0) target = $region57
    $region56: #{tpu_custom_call.1} parent=1 // pred_region
      %103 = dma.done [#allocation15], 6144
    $region57: #{tpu_custom_call.1} parent=1 // pred_fallthru
      _
    // Predicated region
    $region58: #{tpu_custom_call.1} parent=1 // pred_check
      _
    $region59: #{tpu_custom_call.1} parent=1 // pred_check_branch
      %105 = sbr.rel (0) target = $region61
    $region60: #{tpu_custom_call.1} parent=1 // pred_region
      %106 = dma.done [#allocation15], 2048
    $region61: #{tpu_custom_call.1} parent=1 // pred_fallthru
      _
    %v107 = vld [vmem:[%s1] sm:$0xff]
    %v108 = vcvt.s32.f32 %v107
    %v109 = vmax.f32 %v108, 1.0
    %vm110 = vcmask 15368
    %v111 = vsel %vm110, %v107, 2147483648
    %v112 = vand.u32 %v111, 65535
    %v113 = vshra.s32 %v111, 16
    %v114 = vcvt.s32.f32 %v112
    %v115 = vcvt.s32.f32 %v113
    %116 = vmax.xlane.f32.xlu0 %v115
    %v117 = vpop.xlane.xlu0 %116
    %vm118 = vcmp.eq.f32.partialorder %v115, %v117
    %v119 = vsel %vm118, %v114, -inf
    %120 = vmax.xlane.f32.xlu0 %v119
    %v121 = vpop.xlane.xlu0 %120
    %v122 = vcvt.f32.s32 %v121
    %v123 = vcvt.f32.s32 %v117
    %v124 = vshll.u32 %v123, 16
    %v125 = vadd.s32 %v124, %v122
    %v126 = vrot.slane %v125, 4
    %vm127 = vcmp.gt.s32.totalorder %v125, %v126
    %v128 = vsel %vm127, %v125, %v126
    %v129 = vrot.slane %v128, 2
    %vm130 = vcmp.gt.s32.totalorder %v128, %v129
    %v131 = vsel %vm130, %v128, %v129
    %v132 = vrot.slane %v131, 1
    %vm133 = vcmp.gt.s32.totalorder %v131, %v132
    %v134 = vsel %vm133, %v131, %v132
    %s135 = vtos %v134
    %v136 = vlaneseq
    %v137 = vand.u32 %v136, 127
    %vm138 = vcmp.lt.s32.totalorder %v137, 64
    %v139 = vadd.s32 %v137, 128
    %v140 = vadd.s32 %v137, 256
    %vm141 = vcmp.lt.s32.totalorder %v137, 0
    %v142 = vsub.s32 0, %v137
    %v143 = vsel %vm141, %v142, %v137
    %v144 = vshrl.u32 %v143, 7
    %v145 = vand.u32 %v143, 127
    %v146 = vsub.s32 0, %v145
    %v147 = vsel %vm141, %v146, %v145
    %vm148 = vcmp.lt.s32.totalorder %v139, 0
    %v149 = vsub.s32 0, %v139
    %v150 = vsel %vm148, %v149, %v139
    %v151 = vshrl.u32 %v150, 7
    %v152 = vand.u32 %v150, 127
    %v153 = vsub.s32 0, %v152
    %v154 = vsel %vm148, %v153, %v152
    %vm155 = vcmp.lt.s32.totalorder %v140, 0
    %v156 = vsub.s32 0, %v140
    %v157 = vsel %vm155, %v156, %v140
    %v158 = vshrl.u32 %v157, 7
    %v159 = vand.u32 %v157, 127
    %v160 = vsub.s32 0, %v159
    %v161 = vsel %vm155, %v160, %v159
    %vm162 = vcmp.ne.s32.totalorder %v147, 0
    %vm163 = vcmp.ne.s32.totalorder %v154, 0
    %vm164 = vcmp.ne.s32.totalorder %v161, 0
    %vm165 = vcmp.lt.s32.totalorder %v147, 0
    %vm166 = vcmp.lt.s32.totalorder %v154, 0
    %vm167 = vcmp.lt.s32.totalorder %v161, 0
    %vm168 = vmand %vm165, %vm162
    %vm169 = vmand %vm166, %vm163
    %vm170 = vmand %vm167, %vm164
    %v171 = vadd.s32 %v147, 128
    %v172 = vadd.s32 %v154, 128
    %v173 = vadd.s32 %v161, 128
    %v174 = vsel %vm168, %v171, %v147
    %v175 = vsel %vm169, %v172, %v154
    %v176 = vsel %vm170, %v173, %v161
    %vm177 = vcmp.lt.s32.totalorder %v174, 64
    %vm178 = vcmp.lt.s32.totalorder %v175, 64
    %vm179 = vcmp.lt.s32.totalorder %v176, 64
    %v180 = vld [vmem:[#allocation8] sm:$0xff]
    %v181 = vld [vmem:[#allocation8 + $0x8] sm:$0xff]
    %v182 = vld [vmem:[#allocation8 + $0x10] sm:$0xff]
    %v183 = vld [vmem:[#allocation8 + $0x18] sm:$0xff]
    %v184 = vld [vmem:[#allocation8 + $0x20] sm:$0xff]
    %v185 = vld [vmem:[#allocation8 + $0x28] sm:$0xff]
    %v186 = vld [vmem:[#allocation8 + $0x30] sm:$0xff]
    %v187 = vld [vmem:[#allocation8 + $0x38] sm:$0xff]
    %v188 = vld [vmem:[#allocation13] sm:$0xff]
    %v189 = vld [vmem:[#allocation13 + $0x8] sm:$0xff]
    %v190 = vld [vmem:[#allocation13 + $0x10] sm:$0xff]
    %v191 = vld [vmem:[#allocation13 + $0x18] sm:$0xff]
    %v192 = vld [vmem:[#allocation13 + $0x20] sm:$0xff]
    %v193 = vld [vmem:[#allocation13 + $0x28] sm:$0xff]
    %v194 = vld [vmem:[#allocation13 + $0x30] sm:$0xff]
    %v195 = vld [vmem:[#allocation13 + $0x38] sm:$0xff]
    %v196 = vld [vmem:[#allocation13 + $0x40] sm:$0xff]
    %v197 = vld [vmem:[#allocation13 + $0x48] sm:$0xff]
    %v198 = vld [vmem:[#allocation13 + $0x50] sm:$0xff]
    %v199 = vld [vmem:[#allocation13 + $0x58] sm:$0xff]
    %v200 = vld [vmem:[%s4] sm:$0x7]
    %v202 = vlaneseq
    %v203 = vshrl.u32 %v202, 7
    %v204 = vsub.s32 0, %v203
    %v205 = vrot.slane %v200, %v204
    %v206 = vlaneseq
    %v207 = vshrl.u32 %v206, 7
    %v208 = vsub.s32 1, %v207
    %v209 = vrot.slane %v200, %v208
    %v210 = vlaneseq
    %v211 = vshrl.u32 %v210, 7
    %v212 = vsub.s32 2, %v211
    %v213 = vrot.slane %v200, %v212
    %vm217 = vcmask 261120
    %v219 = vsel %vm217, %v180, 0
    %v222 = vsel %vm217, %v181, 0
    %v225 = vsel %vm217, %v182, 0
    %v228 = vsel %vm217, %v183, 0
    %v231 = vsel %vm217, %v184, 0
    %v234 = vsel %vm217, %v185, 0
    %v237 = vsel %vm217, %v186, 0
    %v240 = vsel %vm217, %v187, 0
    %242 = vmatprep.subr.mxu0 %v189
    %243 = vmatpush1.msra.mxu0 %v188
    %244 = vmatprep.subr.mxu0 %v192
    %245 = vmatpush1.msra.mxu0 %v191
    %246 = vmatprep.subr.mxu0 %v195
    %247 = vmatpush1.msra.mxu0 %v194
    %248 = vmatprep.subr.mxu0 %v198
    %249 = vmatpush1.msra.mxu0 %v197
    %250 = vmatprep.subr.mxu0 0.0
    %251 = vmatpush1.msra.mxu0 0.0
    %252 = vmatprep.subr.mxu0 0.0
    %253 = vmatpush1.msra.mxu0 0.0
    %254 = vmatprep.subr.mxu0 0.0
    %255 = vmatpush1.msra.mxu0 0.0
    %256 = vmatprep.subr.mxu0 0.0
    %257 = vmatpush1.msra.mxu0 0.0
    %258 = vmatprep.subr.mxu0 0.0
    %259 = vmatpush1.msra.mxu0 0.0
    %260 = vmatprep.subr.mxu0 0.0
    %261 = vmatpush1.msra.mxu0 0.0
    %262 = vmatprep.subr.mxu0 0.0
    %263 = vmatpush1.msra.mxu0 0.0
    %264 = vmatprep.subr.mxu0 0.0
    %265 = vmatpush1.msra.mxu0 0.0
    %266 = vmatprep.subr.mxu0 0.0
    %267 = vmatpush1.msra.mxu0 0.0
    %268 = vmatprep.subr.mxu0 0.0
    %269 = vmatpush1.msra.mxu0 0.0
    %270 = vmatprep.subr.mxu0 0.0
    %271 = vmatpush1.msra.mxu0 0.0
    %272 = vmatprep.subr.mxu0 0.0
    %273 = vmatpush1.msra.mxu0 0.0
    %274 = vmatprep.subr.mxu0 0.0
    %275 = vmatpush1.msra.mxu0 0.0
    %276 = vmatprep.subr.mxu0 0.0
    %277 = vmatpush1.msra.mxu0 0.0
    %278 = vmatprep.subr.mxu0 0.0
    %279 = vmatpush1.msra.mxu0 0.0
    %280 = vmatprep.subr.mxu0 0.0
    %281 = vmatpush1.msra.mxu0 0.0
    %282 = vmatprep.subr.mxu0 0.0
    %283 = vmatpush1.msra.mxu0 0.0
    %284 = vmatprep.subr.mxu0 0.0
    %285 = vmatpush1.msra.mxu0 0.0
    %286 = vmatprep.subr.mxu0 0.0
    %287 = vmatpush1.msra.mxu0 0.0
    %288 = vmatprep.subr.mxu0 0.0
    %289 = vmatpush1.msra.mxu0 0.0
    %290 = vmatprep.subr.mxu0 0.0
    %291 = vmatpush1.msra.mxu0 0.0
    %292 = vmatprep.subr.mxu0 0.0
    %293 = vmatpush1.msra.mxu0 0.0
    %294 = vmatprep.subr.mxu0 0.0
    %295 = vmatpush1.msra.mxu0 0.0
    %296 = vmatprep.subr.mxu0 0.0
    %297 = vmatpush1.msra.mxu0 0.0
    %298 = vmatprep.subr.mxu0 0.0
    %299 = vmatpush1.msra.mxu0 0.0
    %300 = vmatprep.subr.mxu0 0.0
    %301 = vmatpush1.msra.mxu0 0.0
    %302 = vmatprep.subr.mxu0 0.0
    %303 = vmatpush1.msra.mxu0 0.0
    %304 = vmatprep.subr.mxu0 0.0
    %305 = vmatpush1.msra.mxu0 0.0
    %306 = vmatprep.mubr.f32.mxu0 0.0
    %307 = vmatmul.mubr.f32.gmra.mrb[0].mxu0 %v219
    %v308 = vpop.f32.mrb[0].mxu0
    %v309 = vadd.f32 %v205, %v308
    %v310 = vpop.f32.mrb[0].mxu0
    %v311 = vadd.f32 %v209, %v310
    %312 = vmatprep.mubr.f32.mxu0 0.0
    %313 = vmatmul.mubr.f32.gmra.mrb[0].mxu0 %v222
    %v314 = vpop.f32.mrb[0].mxu0
    %v315 = vadd.f32 %v205, %v314
    %v316 = vpop.f32.mrb[0].mxu0
    %v317 = vadd.f32 %v209, %v316
    %318 = vmatprep.mubr.f32.mxu0 0.0
    %319 = vmatmul.mubr.f32.gmra.mrb[0].mxu0 %v225
    %v320 = vpop.f32.mrb[0].mxu0
    %v321 = vadd.f32 %v205, %v320
    %v322 = vpop.f32.mrb[0].mxu0
    %v323 = vadd.f32 %v209, %v322
    %324 = vmatprep.mubr.f32.mxu0 0.0
    %325 = vmatmul.mubr.f32.gmra.mrb[0].mxu0 %v228
    %v326 = vpop.f32.mrb[0].mxu0
    %v327 = vadd.f32 %v205, %v326
    %v328 = vpop.f32.mrb[0].mxu0
    %v329 = vadd.f32 %v209, %v328
    %330 = vmatprep.mubr.f32.mxu0 0.0
    %331 = vmatmul.mubr.f32.gmra.mrb[0].mxu0 %v231
    %v332 = vpop.f32.mrb[0].mxu0
    %v333 = vadd.f32 %v205, %v332
    %v334 = vpop.f32.mrb[0].mxu0
    %v335 = vadd.f32 %v209, %v334
    %336 = vmatprep.mubr.f32.mxu0 0.0
    %337 = vmatmul.mubr.f32.gmra.mrb[0].mxu0 %v234
    %v338 = vpop.f32.mrb[0].mxu0
    %v339 = vadd.f32 %v205, %v338
    %v340 = vpop.f32.mrb[0].mxu0
    %v341 = vadd.f32 %v209, %v340
    %342 = vmatprep.mubr.f32.mxu0 0.0
    %343 = vmatmul.mubr.f32.gmra.mrb[0].mxu0 %v237
    %v344 = vpop.f32.mrb[0].mxu0
    %v345 = vadd.f32 %v205, %v344
    %v346 = vpop.f32.mrb[0].mxu0
    %v347 = vadd.f32 %v209, %v346
    %348 = vmatprep.mubr.f32.mxu0 0.0
    %349 = vmatmul.mubr.f32.gmra.mrb[0].mxu0 %v240
    %v350 = vpop.f32.mrb[0].mxu0
    %v351 = vadd.f32 %v205, %v350
    %v352 = vpop.f32.mrb[0].mxu0
    %v353 = vadd.f32 %v209, %v352
    %354 = vdwg.mxu0
    %355 = vmatprep.subr.mxu0 0.0
    %356 = vmatpush1.msra.mxu0 %v190
    %357 = vmatprep.subr.mxu0 0.0
    %358 = vmatpush1.msra.mxu0 %v193
    %359 = vmatprep.subr.mxu0 0.0
    %360 = vmatpush1.msra.mxu0 %v196
    %361 = vmatprep.subr.mxu0 0.0
    %362 = vmatpush1.msra.mxu0 %v199
    %363 = vmatprep.subr.mxu0 0.0
    %364 = vmatpush1.msra.mxu0 0.0
    %365 = vmatprep.subr.mxu0 0.0
    %366 = vmatpush1.msra.mxu0 0.0
    %367 = vmatprep.subr.mxu0 0.0
    %368 = vmatpush1.msra.mxu0 0.0
    %369 = vmatprep.subr.mxu0 0.0
    %370 = vmatpush1.msra.mxu0 0.0
    %371 = vmatprep.subr.mxu0 0.0
    %372 = vmatpush1.msra.mxu0 0.0
    %373 = vmatprep.subr.mxu0 0.0
    %374 = vmatpush1.msra.mxu0 0.0
    %375 = vmatprep.subr.mxu0 0.0
    %376 = vmatpush1.msra.mxu0 0.0
    %377 = vmatprep.subr.mxu0 0.0
    %378 = vmatpush1.msra.mxu0 0.0
    %379 = vmatprep.subr.mxu0 0.0
    %380 = vmatpush1.msra.mxu0 0.0
    %381 = vmatprep.subr.mxu0 0.0
    %382 = vmatpush1.msra.mxu0 0.0
    %383 = vmatprep.subr.mxu0 0.0
    %384 = vmatpush1.msra.mxu0 0.0
    %385 = vmatprep.subr.mxu0 0.0
    %386 = vmatpush1.msra.mxu0 0.0
    %387 = vmatprep.subr.mxu0 0.0
    %388 = vmatpush1.msra.mxu0 0.0
    %389 = vmatprep.subr.mxu0 0.0
    %390 = vmatpush1.msra.mxu0 0.0
    %391 = vmatprep.subr.mxu0 0.0
    %392 = vmatpush1.msra.mxu0 0.0
    %393 = vmatprep.subr.mxu0 0.0
    %394 = vmatpush1.msra.mxu0 0.0
    %395 = vmatprep.subr.mxu0 0.0
    %396 = vmatpush1.msra.mxu0 0.0
    %397 = vmatprep.subr.mxu0 0.0
    %398 = vmatpush1.msra.mxu0 0.0
    %399 = vmatprep.subr.mxu0 0.0
    %400 = vmatpush1.msra.mxu0 0.0
    %401 = vmatprep.subr.mxu0 0.0
    %402 = vmatpush1.msra.mxu0 0.0
    %403 = vmatprep.subr.mxu0 0.0
    %404 = vmatpush1.msra.mxu0 0.0
    %405 = vmatprep.subr.mxu0 0.0
    %406 = vmatpush1.msra.mxu0 0.0
    %407 = vmatprep.subr.mxu0 0.0
    %408 = vmatpush1.msra.mxu0 0.0
    %409 = vmatprep.subr.mxu0 0.0
    %410 = vmatpush1.msra.mxu0 0.0
    %411 = vmatprep.subr.mxu0 0.0
    %412 = vmatpush1.msra.mxu0 0.0
    %413 = vmatprep.subr.mxu0 0.0
    %414 = vmatpush1.msra.mxu0 0.0
    %415 = vmatprep.subr.mxu0 0.0
    %416 = vmatpush1.msra.mxu0 0.0
    %417 = vmatprep.subr.mxu0 0.0
    %418 = vmatpush1.msra.mxu0 0.0
    %419 = vmatprep.mubr.f32.mxu0 0.0
    %420 = vmatmul.mubr.f32.gmra.mrb[0].mxu0 %v219
    %v421 = vpop.f32.mrb[0].mxu0
    %v422 = vadd.f32 %v213, %v421
    %v423 = vpop.f32.mrb[0].mxu0
    %424 = vmatprep.mubr.f32.mxu0 0.0
    %425 = vmatmul.mubr.f32.gmra.mrb[0].mxu0 %v222
    %v426 = vpop.f32.mrb[0].mxu0
    %v427 = vadd.f32 %v213, %v426
    %v428 = vpop.f32.mrb[0].mxu0
    %429 = vmatprep.mubr.f32.mxu0 0.0
    %430 = vmatmul.mubr.f32.gmra.mrb[0].mxu0 %v225
    %v431 = vpop.f32.mrb[0].mxu0
    %v432 = vadd.f32 %v213, %v431
    %v433 = vpop.f32.mrb[0].mxu0
    %434 = vmatprep.mubr.f32.mxu0 0.0
    %435 = vmatmul.mubr.f32.gmra.mrb[0].mxu0 %v228
    %v436 = vpop.f32.mrb[0].mxu0
    %v437 = vadd.f32 %v213, %v436
    %v438 = vpop.f32.mrb[0].mxu0
    %439 = vmatprep.mubr.f32.mxu0 0.0
    %440 = vmatmul.mubr.f32.gmra.mrb[0].mxu0 %v231
    %v441 = vpop.f32.mrb[0].mxu0
    %v442 = vadd.f32 %v213, %v441
    %v443 = vpop.f32.mrb[0].mxu0
    %444 = vmatprep.mubr.f32.mxu0 0.0
    %445 = vmatmul.mubr.f32.gmra.mrb[0].mxu0 %v234
    %v446 = vpop.f32.mrb[0].mxu0
    %v447 = vadd.f32 %v213, %v446
    %v448 = vpop.f32.mrb[0].mxu0
    %449 = vmatprep.mubr.f32.mxu0 0.0
    %450 = vmatmul.mubr.f32.gmra.mrb[0].mxu0 %v237
    %v451 = vpop.f32.mrb[0].mxu0
    %v452 = vadd.f32 %v213, %v451
    %v453 = vpop.f32.mrb[0].mxu0
    %454 = vmatprep.mubr.f32.mxu0 0.0
    %455 = vmatmul.mubr.f32.gmra.mrb[0].mxu0 %v240
    %v456 = vpop.f32.mrb[0].mxu0
    %v457 = vadd.f32 %v213, %v456
    %v458 = vpop.f32.mrb[0].mxu0
    %459 = vdwg.mxu0
    %460 = vst [vmem:[#allocation2] sm:$0xff] %v309
    %461 = vst [vmem:[#allocation2 + $0x8] sm:$0xff] %v311
    %462 = vst [vmem:[#allocation2 + $0x10] sm:$0xff] %v422
    %463 = vst [vmem:[#allocation2 + $0x18] sm:$0xff] %v315
    %464 = vst [vmem:[#allocation2 + $0x20] sm:$0xff] %v317
    %465 = vst [vmem:[#allocation2 + $0x28] sm:$0xff] %v427
    %466 = vst [vmem:[#allocation2 + $0x30] sm:$0xff] %v321
    %467 = vst [vmem:[#allocation2 + $0x38] sm:$0xff] %v323
    %468 = vst [vmem:[#allocation2 + $0x40] sm:$0xff] %v432
    %469 = vst [vmem:[#allocation2 + $0x48] sm:$0xff] %v327
    %470 = vst [vmem:[#allocation2 + $0x50] sm:$0xff] %v329
    %471 = vst [vmem:[#allocation2 + $0x58] sm:$0xff] %v437
    %472 = vst [vmem:[#allocation2 + $0x60] sm:$0xff] %v333
    %473 = vst [vmem:[#allocation2 + $0x68] sm:$0xff] %v335
    %474 = vst [vmem:[#allocation2 + $0x70] sm:$0xff] %v442
    %475 = vst [vmem:[#allocation2 + $0x78] sm:$0xff] %v339
    %476 = vst [vmem:[#allocation2 + $0x80] sm:$0xff] %v341
    %477 = vst [vmem:[#allocation2 + $0x88] sm:$0xff] %v447
    %478 = vst [vmem:[#allocation2 + $0x90] sm:$0xff] %v345
    %479 = vst [vmem:[#allocation2 + $0x98] sm:$0xff] %v347
    %480 = vst [vmem:[#allocation2 + $0xa0] sm:$0xff] %v452
    %481 = vst [vmem:[#allocation2 + $0xa8] sm:$0xff] %v351
    %482 = vst [vmem:[#allocation2 + $0xb0] sm:$0xff] %v353
    %483 = vst [vmem:[#allocation2 + $0xb8] sm:$0xff] %v457
    %v484 = vld [vmem:[#allocation14] sm:$0xff]
    %v485 = vld [vmem:[#allocation14 + $0x8] sm:$0xff]
    %v486 = vld [vmem:[#allocation14 + $0x10] sm:$0xff]
    %v487 = vld [vmem:[#allocation14 + $0x18] sm:$0xff]
    %v488 = vld [vmem:[#allocation14 + $0x20] sm:$0xff]
    %v489 = vld [vmem:[#allocation14 + $0x28] sm:$0xff]
    %v490 = vld [vmem:[#allocation14 + $0x30] sm:$0xff]
    %v491 = vld [vmem:[#allocation14 + $0x38] sm:$0xff]
    %v492 = vld [vmem:[#allocation14 + $0x40] sm:$0xff]
    %v493 = vld [vmem:[#allocation14 + $0x48] sm:$0xff]
    %v494 = vld [vmem:[#allocation14 + $0x50] sm:$0xff]
    %v495 = vld [vmem:[#allocation14 + $0x58] sm:$0xff]
    %v496 = vld [vmem:[#allocation14 + $0x60] sm:$0xff]
    %v497 = vld [vmem:[#allocation14 + $0x68] sm:$0xff]
    %v498 = vld [vmem:[#allocation14 + $0x70] sm:$0xff]
    %v499 = vld [vmem:[#allocation14 + $0x78] sm:$0xff]
    %v500 = vld [vmem:[#allocation14 + $0x80] sm:$0xff]
    %v501 = vld [vmem:[#allocation14 + $0x88] sm:$0xff]
    %v502 = vld [vmem:[#allocation14 + $0x90] sm:$0xff]
    %v503 = vld [vmem:[#allocation14 + $0x98] sm:$0xff]
    %v504 = vld [vmem:[#allocation14 + $0xa0] sm:$0xff]
    %v505 = vld [vmem:[#allocation14 + $0xa8] sm:$0xff]
    %v506 = vld [vmem:[#allocation14 + $0xb0] sm:$0xff]
    %v507 = vld [vmem:[#allocation14 + $0xb8] sm:$0xff]
    %v508 = vld [vmem:[#allocation14 + $0xc0] sm:$0xff]
    %v509 = vld [vmem:[#allocation14 + $0xc8] sm:$0xff]
    %v510 = vld [vmem:[#allocation14 + $0xd0] sm:$0xff]
    %v511 = vld [vmem:[#allocation14 + $0xd8] sm:$0xff]
    %v512 = vld [vmem:[#allocation14 + $0xe0] sm:$0xff]
    %v513 = vld [vmem:[#allocation14 + $0xe8] sm:$0xff]
    %v514 = vld [vmem:[#allocation14 + $0xf0] sm:$0xff]
    %v515 = vld [vmem:[#allocation14 + $0xf8] sm:$0xff]
    %v516 = vld [vmem:[#allocation14 + $0x100] sm:$0xff]
    %v517 = vld [vmem:[#allocation14 + $0x108] sm:$0xff]
    %v518 = vld [vmem:[#allocation14 + $0x110] sm:$0xff]
    %v519 = vld [vmem:[#allocation14 + $0x118] sm:$0xff]
    %v520 = vld [vmem:[#allocation14 + $0x120] sm:$0xff]
    %v521 = vld [vmem:[#allocation14 + $0x128] sm:$0xff]
    %v522 = vld [vmem:[#allocation14 + $0x130] sm:$0xff]
    %v523 = vld [vmem:[#allocation14 + $0x138] sm:$0xff]
    %v524 = vld [vmem:[#allocation14 + $0x140] sm:$0xff]
    %v525 = vld [vmem:[#allocation14 + $0x148] sm:$0xff]
    %v526 = vld [vmem:[#allocation14 + $0x150] sm:$0xff]
    %v527 = vld [vmem:[#allocation14 + $0x158] sm:$0xff]
    %v528 = vld [vmem:[#allocation14 + $0x160] sm:$0xff]
    %v529 = vld [vmem:[#allocation14 + $0x168] sm:$0xff]
    %v530 = vld [vmem:[#allocation14 + $0x170] sm:$0xff]
    %v531 = vld [vmem:[#allocation14 + $0x178] sm:$0xff]
    %v532 = vld [vmem:[%s6] sm:$0x1]
    %533 = vst [vmem:[#allocation4] sm:$0xff] 0.0
    %v534 = vld [vmem:[#allocation4] sm:$0xff]
    %v535 = vld [vmem:[#allocation2] sm:$0xff]
    %v536 = vld [vmem:[#allocation2 + $0x8] sm:$0xff]
    %v537 = vld [vmem:[#allocation2 + $0x10] sm:$0xff]
    %s538 = scalar_lea.vmem [#allocation2], 168
    %v539 = vld [vmem:[%s538] sm:$0xff]
    %v540 = vld [vmem:[%s538 + $0x8] sm:$0xff]
    %v541 = vld [vmem:[%s538 + $0x10] sm:$0xff]
    %v542 = vsel %vm177, 1, 0
    %v543 = vsel %vm178, 1, 0
    %v544 = vsel %vm179, 1, 0
    %vm545 = vcmp.eq.s32.totalorder %v542, 1
    %vm546 = vcmp.eq.s32.totalorder %v543, 1
    %vm547 = vcmp.eq.s32.totalorder %v544, 1
    %v548 = vsel %vm545, %v535, %v539
    %v549 = vsel %vm546, %v536, %v540
    %v550 = vsel %vm547, %v537, %v541
    %551 = vmatprep.subr.mxu0 %v485
    %552 = vmatpush1.msra.mxu0 %v484
    %553 = vmatprep.subr.mxu0 %v488
    %554 = vmatpush1.msra.mxu0 %v487
    %555 = vmatprep.subr.mxu0 %v491
    %556 = vmatpush1.msra.mxu0 %v490
    %557 = vmatprep.subr.mxu0 %v494
    %558 = vmatpush1.msra.mxu0 %v493
    %559 = vmatprep.subr.mxu0 %v497
    %560 = vmatpush1.msra.mxu0 %v496
    %561 = vmatprep.subr.mxu0 %v500
    %562 = vmatpush1.msra.mxu0 %v499
    %563 = vmatprep.subr.mxu0 %v503
    %564 = vmatpush1.msra.mxu0 %v502
    %565 = vmatprep.subr.mxu0 %v506
    %566 = vmatpush1.msra.mxu0 %v505
    %567 = vmatprep.subr.mxu0 %v509
    %568 = vmatpush1.msra.mxu0 %v508
    %569 = vmatprep.subr.mxu0 %v512
    %570 = vmatpush1.msra.mxu0 %v511
    %571 = vmatprep.subr.mxu0 %v515
    %572 = vmatpush1.msra.mxu0 %v514
    %573 = vmatprep.subr.mxu0 %v518
    %574 = vmatpush1.msra.mxu0 %v517
    %575 = vmatprep.subr.mxu0 %v521
    %576 = vmatpush1.msra.mxu0 %v520
    %577 = vmatprep.subr.mxu0 %v524
    %578 = vmatpush1.msra.mxu0 %v523
    %579 = vmatprep.subr.mxu0 %v527
    %580 = vmatpush1.msra.mxu0 %v526
    %581 = vmatprep.subr.mxu0 %v530
    %582 = vmatpush1.msra.mxu0 %v529
    %583 = vmatprep.subr.mxu0 0.0
    %584 = vmatpush1.msra.mxu0 0.0
    %585 = vmatprep.subr.mxu0 0.0
    %586 = vmatpush1.msra.mxu0 0.0
    %587 = vmatprep.subr.mxu0 0.0
    %588 = vmatpush1.msra.mxu0 0.0
    %589 = vmatprep.subr.mxu0 0.0
    %590 = vmatpush1.msra.mxu0 0.0
    %591 = vmatprep.subr.mxu0 0.0
    %592 = vmatpush1.msra.mxu0 0.0
    %593 = vmatprep.subr.mxu0 0.0
    %594 = vmatpush1.msra.mxu0 0.0
    %595 = vmatprep.subr.mxu0 0.0
    %596 = vmatpush1.msra.mxu0 0.0
    %597 = vmatprep.subr.mxu0 0.0
    %598 = vmatpush1.msra.mxu0 0.0
    %599 = vmatprep.subr.mxu0 0.0
    %600 = vmatpush1.msra.mxu0 0.0
    %601 = vmatprep.subr.mxu0 0.0
    %602 = vmatpush1.msra.mxu0 0.0
    %603 = vmatprep.subr.mxu0 0.0
    %604 = vmatpush1.msra.mxu0 0.0
    %605 = vmatprep.subr.mxu0 0.0
    %606 = vmatpush1.msra.mxu0 0.0
    %607 = vmatprep.subr.mxu0 0.0
    %608 = vmatpush1.msra.mxu0 0.0
    %609 = vmatprep.subr.mxu0 0.0
    %610 = vmatpush1.msra.mxu0 0.0
    %611 = vmatprep.subr.mxu0 0.0
    %612 = vmatpush1.msra.mxu0 0.0
    %613 = vmatprep.subr.mxu0 0.0
    %614 = vmatpush1.msra.mxu0 0.0
    %615 = vmatprep.mubr.f32.mxu0 0.0
    %616 = vmatmul.mubr.f32.gmra.mrb[0].mxu0 %v534
    %v617 = vpop.f32.mrb[0].mxu0
    %v618 = vadd.f32 0.0, %v617
    %v619 = vpop.f32.mrb[0].mxu0
    %v620 = vadd.f32 0.0, %v619
    %621 = vdwg.mxu0
    %622 = vmatprep.subr.mxu0 0.0
    %623 = vmatpush1.msra.mxu0 %v486
    %624 = vmatprep.subr.mxu0 0.0
    %625 = vmatpush1.msra.mxu0 %v489
    %626 = vmatprep.subr.mxu0 0.0
    %627 = vmatpush1.msra.mxu0 %v492
    %628 = vmatprep.subr.mxu0 0.0
    %629 = vmatpush1.msra.mxu0 %v495
    %630 = vmatprep.subr.mxu0 0.0
    %631 = vmatpush1.msra.mxu0 %v498
    %632 = vmatprep.subr.mxu0 0.0
    %633 = vmatpush1.msra.mxu0 %v501
    %634 = vmatprep.subr.mxu0 0.0
    %635 = vmatpush1.msra.mxu0 %v504
    %636 = vmatprep.subr.mxu0 0.0
    %637 = vmatpush1.msra.mxu0 %v507
    %638 = vmatprep.subr.mxu0 0.0
    %639 = vmatpush1.msra.mxu0 %v510
    %640 = vmatprep.subr.mxu0 0.0
    %641 = vmatpush1.msra.mxu0 %v513
    %642 = vmatprep.subr.mxu0 0.0
    %643 = vmatpush1.msra.mxu0 %v516
    %644 = vmatprep.subr.mxu0 0.0
    %645 = vmatpush1.msra.mxu0 %v519
    %646 = vmatprep.subr.mxu0 0.0
    %647 = vmatpush1.msra.mxu0 %v522
    %648 = vmatprep.subr.mxu0 0.0
    %649 = vmatpush1.msra.mxu0 %v525
    %650 = vmatprep.subr.mxu0 0.0
    %651 = vmatpush1.msra.mxu0 %v528
    %652 = vmatprep.subr.mxu0 0.0
    %653 = vmatpush1.msra.mxu0 %v531
    %654 = vmatprep.subr.mxu0 0.0
    %655 = vmatpush1.msra.mxu0 0.0
    %656 = vmatprep.subr.mxu0 0.0
    %657 = vmatpush1.msra.mxu0 0.0
    %658 = vmatprep.subr.mxu0 0.0
    %659 = vmatpush1.msra.mxu0 0.0
    %660 = vmatprep.subr.mxu0 0.0
    %661 = vmatpush1.msra.mxu0 0.0
    %662 = vmatprep.subr.mxu0 0.0
    %663 = vmatpush1.msra.mxu0 0.0
    %664 = vmatprep.subr.mxu0 0.0
    %665 = vmatpush1.msra.mxu0 0.0
    %666 = vmatprep.subr.mxu0 0.0
    %667 = vmatpush1.msra.mxu0 0.0
    %668 = vmatprep.subr.mxu0 0.0
    %669 = vmatpush1.msra.mxu0 0.0
    %670 = vmatprep.subr.mxu0 0.0
    %671 = vmatpush1.msra.mxu0 0.0
    %672 = vmatprep.subr.mxu0 0.0
    %673 = vmatpush1.msra.mxu0 0.0
    %674 = vmatprep.subr.mxu0 0.0
    %675 = vmatpush1.msra.mxu0 0.0
    %676 = vmatprep.subr.mxu0 0.0
    %677 = vmatpush1.msra.mxu0 0.0
    %678 = vmatprep.subr.mxu0 0.0
    %679 = vmatpush1.msra.mxu0 0.0
    %680 = vmatprep.subr.mxu0 0.0
    %681 = vmatpush1.msra.mxu0 0.0
    %682 = vmatprep.subr.mxu0 0.0
    %683 = vmatpush1.msra.mxu0 0.0
    %684 = vmatprep.subr.mxu0 0.0
    %685 = vmatpush1.msra.mxu0 0.0
    %686 = vmatprep.mubr.f32.mxu0 0.0
    %687 = vmatmul.mubr.f32.gmra.mrb[0].mxu0 %v534
    %v688 = vpop.f32.mrb[0].mxu0
    %v689 = vadd.f32 0.0, %v688
    %v690 = vpop.f32.mrb[0].mxu0
    %691 = vdwg.mxu0
    %v692 = vadd.f32 %v548, %v618
    %v693 = vmul.f32 %v692, 0.5
    %v694 = vtanh.pop %v693
    %v695 = vmul.f32 %v694, 0.5
    %v696 = vadd.f32 %v695, 0.5
    %v697 = vadd.f32 %v549, %v620
    %v698 = vmul.f32 %v697, 0.5
    %v699 = vtanh.pop %v698
    %v700 = vmul.f32 %v699, 0.5
    %v701 = vadd.f32 %v700, 0.5
    %v703 = vlaneseq
    %v704 = vshrl.u32 %v703, 7
    %v705 = vsub.s32 0, %v704
    %v706 = vrot.slane %v532, %v705
    %v708 = vadd.f32 %v689, %v706
    %v709 = vmul.f32 %v696, %v708
    %v710 = vadd.f32 %v550, %v709
    %v711 = vtanh.pop %v710
    %v712 = vsub.f32 1.0, %v701
    %v713 = vmul.f32 %v712, %v711
    %v714 = vmul.f32 %v701, %v534
    %v715 = vadd.f32 %v713, %v714
    %vm716 = vcmp.gt.s32.totalorder %v107, 0
    %vm717 = vcmp.gt.s32.totalorder %v107, 7
    %v718 = vsel %vm138, 1, 0
    %vm719 = vcmp.eq.s32.totalorder %v718, 1
    %v720 = vsel %vm716, 1, 0
    %721 = vset.pattern.permute.xlu0 0
    %722 = vperm.xlu0 %721, %v720
    %v723 = vpop.permute.xlu0 %722
    %vm724 = vcmp.eq.s32.totalorder %v723, 1
    %vm725 = vmand %vm719, %vm724
    %vm726 = vmxor %vm138, 1
    %v727 = vsel %vm726, 1, 0
    %vm728 = vcmp.eq.s32.totalorder %v727, 1
    %v729 = vsel %vm717, 1, 0
    %730 = vset.pattern.permute.xlu0 0
    %731 = vperm.xlu0 %730, %v729
    %v732 = vpop.permute.xlu0 %731
    %vm733 = vcmp.eq.s32.totalorder %v732, 1
    %vm734 = vmand %vm728, %vm733
    %vm735 = vmor %vm725, %vm734
    %v736 = vsel %vm735, %v715, %v534
    %737 = vst [vmem:[#allocation4] sm:$0xff] %v736
    %v738 = vsel %vm735, %v715, 0.0
    %739 = vst [vmem:[#allocation3] sm:$0xff] %v738
    %v740 = vld [vmem:[#allocation4] sm:$0xff]
    %s741 = scalar_lea.vmem [#allocation2], 24
    %v742 = vld [vmem:[%s741] sm:$0xff]
    %v743 = vld [vmem:[%s741 + $0x8] sm:$0xff]
    %v744 = vld [vmem:[%s741 + $0x10] sm:$0xff]
    %s745 = scalar_lea.vmem [#allocation2], 144
    %v746 = vld [vmem:[%s745] sm:$0xff]
    %v747 = vld [vmem:[%s745 + $0x8] sm:$0xff]
    %v748 = vld [vmem:[%s745 + $0x10] sm:$0xff]
    %v749 = vsel %vm545, %v742, %v746
    %v750 = vsel %vm546, %v743, %v747
    %v751 = vsel %vm547, %v744, %v748
    %752 = vmatprep.subr.mxu0 %v485
    %753 = vmatpush1.msra.mxu0 %v484
    %754 = vmatprep.subr.mxu0 %v488
    %755 = vmatpush1.msra.mxu0 %v487
    %756 = vmatprep.subr.mxu0 %v491
    %757 = vmatpush1.msra.mxu0 %v490
    %758 = vmatprep.subr.mxu0 %v494
    %759 = vmatpush1.msra.mxu0 %v493
    %760 = vmatprep.subr.mxu0 %v497
    %761 = vmatpush1.msra.mxu0 %v496
    %762 = vmatprep.subr.mxu0 %v500
    %763 = vmatpush1.msra.mxu0 %v499
    %764 = vmatprep.subr.mxu0 %v503
    %765 = vmatpush1.msra.mxu0 %v502
    %766 = vmatprep.subr.mxu0 %v506
    %767 = vmatpush1.msra.mxu0 %v505
    %768 = vmatprep.subr.mxu0 %v509
    %769 = vmatpush1.msra.mxu0 %v508
    %770 = vmatprep.subr.mxu0 %v512
    %771 = vmatpush1.msra.mxu0 %v511
    %772 = vmatprep.subr.mxu0 %v515
    %773 = vmatpush1.msra.mxu0 %v514
    %774 = vmatprep.subr.mxu0 %v518
    %775 = vmatpush1.msra.mxu0 %v517
    %776 = vmatprep.subr.mxu0 %v521
    %777 = vmatpush1.msra.mxu0 %v520
    %778 = vmatprep.subr.mxu0 %v524
    %779 = vmatpush1.msra.mxu0 %v523
    %780 = vmatprep.subr.mxu0 %v527
    %781 = vmatpush1.msra.mxu0 %v526
    %782 = vmatprep.subr.mxu0 %v530
    %783 = vmatpush1.msra.mxu0 %v529
    %784 = vmatprep.subr.mxu0 0.0
    %785 = vmatpush1.msra.mxu0 0.0
    %786 = vmatprep.subr.mxu0 0.0
    %787 = vmatpush1.msra.mxu0 0.0
    %788 = vmatprep.subr.mxu0 0.0
    %789 = vmatpush1.msra.mxu0 0.0
    %790 = vmatprep.subr.mxu0 0.0
    %791 = vmatpush1.msra.mxu0 0.0
    %792 = vmatprep.subr.mxu0 0.0
    %793 = vmatpush1.msra.mxu0 0.0
    %794 = vmatprep.subr.mxu0 0.0
    %795 = vmatpush1.msra.mxu0 0.0
    %796 = vmatprep.subr.mxu0 0.0
    %797 = vmatpush1.msra.mxu0 0.0
    %798 = vmatprep.subr.mxu0 0.0
    %799 = vmatpush1.msra.mxu0 0.0
    %800 = vmatprep.subr.mxu0 0.0
    %801 = vmatpush1.msra.mxu0 0.0
    %802 = vmatprep.subr.mxu0 0.0
    %803 = vmatpush1.msra.mxu0 0.0
    %804 = vmatprep.subr.mxu0 0.0
    %805 = vmatpush1.msra.mxu0 0.0
    %806 = vmatprep.subr.mxu0 0.0
    %807 = vmatpush1.msra.mxu0 0.0
    %808 = vmatprep.subr.mxu0 0.0
    %809 = vmatpush1.msra.mxu0 0.0
    %810 = vmatprep.subr.mxu0 0.0
    %811 = vmatpush1.msra.mxu0 0.0
    %812 = vmatprep.subr.mxu0 0.0
    %813 = vmatpush1.msra.mxu0 0.0
    %814 = vmatprep.subr.mxu0 0.0
    %815 = vmatpush1.msra.mxu0 0.0
    %816 = vmatprep.mubr.f32.mxu0 0.0
    %817 = vmatmul.mubr.f32.gmra.mrb[0].mxu0 %v740
    %v818 = vpop.f32.mrb[0].mxu0
    %v819 = vadd.f32 0.0, %v818
    %v820 = vpop.f32.mrb[0].mxu0
    %v821 = vadd.f32 0.0, %v820
    %822 = vdwg.mxu0
    %823 = vmatprep.subr.mxu0 0.0
    %824 = vmatpush1.msra.mxu0 %v486
    %825 = vmatprep.subr.mxu0 0.0
    %826 = vmatpush1.msra.mxu0 %v489
    %827 = vmatprep.subr.mxu0 0.0
    %828 = vmatpush1.msra.mxu0 %v492
    %829 = vmatprep.subr.mxu0 0.0
    %830 = vmatpush1.msra.mxu0 %v495
    %831 = vmatprep.subr.mxu0 0.0
    %832 = vmatpush1.msra.mxu0 %v498
    %833 = vmatprep.subr.mxu0 0.0
    %834 = vmatpush1.msra.mxu0 %v501
    %835 = vmatprep.subr.mxu0 0.0
    %836 = vmatpush1.msra.mxu0 %v504
    %837 = vmatprep.subr.mxu0 0.0
    %838 = vmatpush1.msra.mxu0 %v507
    %839 = vmatprep.subr.mxu0 0.0
    %840 = vmatpush1.msra.mxu0 %v510
    %841 = vmatprep.subr.mxu0 0.0
    %842 = vmatpush1.msra.mxu0 %v513
    %843 = vmatprep.subr.mxu0 0.0
    %844 = vmatpush1.msra.mxu0 %v516
    %845 = vmatprep.subr.mxu0 0.0
    %846 = vmatpush1.msra.mxu0 %v519
    %847 = vmatprep.subr.mxu0 0.0
    %848 = vmatpush1.msra.mxu0 %v522
    %849 = vmatprep.subr.mxu0 0.0
    %850 = vmatpush1.msra.mxu0 %v525
    %851 = vmatprep.subr.mxu0 0.0
    %852 = vmatpush1.msra.mxu0 %v528
    %853 = vmatprep.subr.mxu0 0.0
    %854 = vmatpush1.msra.mxu0 %v531
    %855 = vmatprep.subr.mxu0 0.0
    %856 = vmatpush1.msra.mxu0 0.0
    %857 = vmatprep.subr.mxu0 0.0
    %858 = vmatpush1.msra.mxu0 0.0
    %859 = vmatprep.subr.mxu0 0.0
    %860 = vmatpush1.msra.mxu0 0.0
    %861 = vmatprep.subr.mxu0 0.0
    %862 = vmatpush1.msra.mxu0 0.0
    %863 = vmatprep.subr.mxu0 0.0
    %864 = vmatpush1.msra.mxu0 0.0
    %865 = vmatprep.subr.mxu0 0.0
    %866 = vmatpush1.msra.mxu0 0.0
    %867 = vmatprep.subr.mxu0 0.0
    %868 = vmatpush1.msra.mxu0 0.0
    %869 = vmatprep.subr.mxu0 0.0
    %870 = vmatpush1.msra.mxu0 0.0
    %871 = vmatprep.subr.mxu0 0.0
    %872 = vmatpush1.msra.mxu0 0.0
    %873 = vmatprep.subr.mxu0 0.0
    %874 = vmatpush1.msra.mxu0 0.0
    %875 = vmatprep.subr.mxu0 0.0
    %876 = vmatpush1.msra.mxu0 0.0
    %877 = vmatprep.subr.mxu0 0.0
    %878 = vmatpush1.msra.mxu0 0.0
    %879 = vmatprep.subr.mxu0 0.0
    %880 = vmatpush1.msra.mxu0 0.0
    %881 = vmatprep.subr.mxu0 0.0
    %882 = vmatpush1.msra.mxu0 0.0
    %883 = vmatprep.subr.mxu0 0.0
    %884 = vmatpush1.msra.mxu0 0.0
    %885 = vmatprep.subr.mxu0 0.0
    %886 = vmatpush1.msra.mxu0 0.0
    %887 = vmatprep.mubr.f32.mxu0 0.0
    %888 = vmatmul.mubr.f32.gmra.mrb[0].mxu0 %v740
    %v889 = vpop.f32.mrb[0].mxu0
    %v890 = vadd.f32 0.0, %v889
    %v891 = vpop.f32.mrb[0].mxu0
    %892 = vdwg.mxu0
    %v893 = vadd.f32 %v749, %v819
    %v894 = vmul.f32 %v893, 0.5
    %v895 = vtanh.pop %v894
    %v896 = vmul.f32 %v895, 0.5
    %v897 = vadd.f32 %v896, 0.5
    %v898 = vadd.f32 %v750, %v821
    %v899 = vmul.f32 %v898, 0.5
    %v900 = vtanh.pop %v899
    %v901 = vmul.f32 %v900, 0.5
    %v902 = vadd.f32 %v901, 0.5
    %v903 = vadd.f32 %v890, %v706
    %v904 = vmul.f32 %v897, %v903
    %v905 = vadd.f32 %v751, %v904
    %v906 = vtanh.pop %v905
    %v907 = vsub.f32 1.0, %v902
    %v908 = vmul.f32 %v907, %v906
    %v909 = vmul.f32 %v902, %v740
    %v910 = vadd.f32 %v908, %v909
    %vm911 = vcmp.gt.s32.totalorder %v107, 1
    %vm912 = vcmp.gt.s32.totalorder %v107, 6
    %v913 = vsel %vm911, 1, 0
    %914 = vset.pattern.permute.xlu0 0
    %915 = vperm.xlu0 %914, %v913
    %v916 = vpop.permute.xlu0 %915
    %vm917 = vcmp.eq.s32.totalorder %v916, 1
    %vm918 = vmand %vm719, %vm917
    %v919 = vsel %vm912, 1, 0
    %920 = vset.pattern.permute.xlu0 0
    %921 = vperm.xlu0 %920, %v919
    %v922 = vpop.permute.xlu0 %921
    %vm923 = vcmp.eq.s32.totalorder %v922, 1
    %vm924 = vmand %vm728, %vm923
    %vm925 = vmor %vm918, %vm924
    %v926 = vsel %vm925, %v910, %v740
    %927 = vst [vmem:[#allocation4] sm:$0xff] %v926
    %v928 = vsel %vm925, %v910, 0.0
    %s929 = scalar_lea.vmem [#allocation3], 8
    %930 = vst [vmem:[%s929] sm:$0xff] %v928
    %v931 = vld [vmem:[#allocation4] sm:$0xff]
    %s932 = scalar_lea.vmem [#allocation2], 48
    %v933 = vld [vmem:[%s932] sm:$0xff]
    %v934 = vld [vmem:[%s932 + $0x8] sm:$0xff]
    %v935 = vld [vmem:[%s932 + $0x10] sm:$0xff]
    %s936 = scalar_lea.vmem [#allocation2], 120
    %v937 = vld [vmem:[%s936] sm:$0xff]
    %v938 = vld [vmem:[%s936 + $0x8] sm:$0xff]
    %v939 = vld [vmem:[%s936 + $0x10] sm:$0xff]
    %v940 = vsel %vm545, %v933, %v937
    %v941 = vsel %vm546, %v934, %v938
    %v942 = vsel %vm547, %v935, %v939
    %943 = vmatprep.subr.mxu0 %v485
    %944 = vmatpush1.msra.mxu0 %v484
    %945 = vmatprep.subr.mxu0 %v488
    %946 = vmatpush1.msra.mxu0 %v487
    %947 = vmatprep.subr.mxu0 %v491
    %948 = vmatpush1.msra.mxu0 %v490
    %949 = vmatprep.subr.mxu0 %v494
    %950 = vmatpush1.msra.mxu0 %v493
    %951 = vmatprep.subr.mxu0 %v497
    %952 = vmatpush1.msra.mxu0 %v496
    %953 = vmatprep.subr.mxu0 %v500
    %954 = vmatpush1.msra.mxu0 %v499
    %955 = vmatprep.subr.mxu0 %v503
    %956 = vmatpush1.msra.mxu0 %v502
    %957 = vmatprep.subr.mxu0 %v506
    %958 = vmatpush1.msra.mxu0 %v505
    %959 = vmatprep.subr.mxu0 %v509
    %960 = vmatpush1.msra.mxu0 %v508
    %961 = vmatprep.subr.mxu0 %v512
    %962 = vmatpush1.msra.mxu0 %v511
    %963 = vmatprep.subr.mxu0 %v515
    %964 = vmatpush1.msra.mxu0 %v514
    %965 = vmatprep.subr.mxu0 %v518
    %966 = vmatpush1.msra.mxu0 %v517
    %967 = vmatprep.subr.mxu0 %v521
    %968 = vmatpush1.msra.mxu0 %v520
    %969 = vmatprep.subr.mxu0 %v524
    %970 = vmatpush1.msra.mxu0 %v523
    %971 = vmatprep.subr.mxu0 %v527
    %972 = vmatpush1.msra.mxu0 %v526
    %973 = vmatprep.subr.mxu0 %v530
    %974 = vmatpush1.msra.mxu0 %v529
    %975 = vmatprep.subr.mxu0 0.0
    %976 = vmatpush1.msra.mxu0 0.0
    %977 = vmatprep.subr.mxu0 0.0
    %978 = vmatpush1.msra.mxu0 0.0
    %979 = vmatprep.subr.mxu0 0.0
    %980 = vmatpush1.msra.mxu0 0.0
    %981 = vmatprep.subr.mxu0 0.0
    %982 = vmatpush1.msra.mxu0 0.0
    %983 = vmatprep.subr.mxu0 0.0
    %984 = vmatpush1.msra.mxu0 0.0
    %985 = vmatprep.subr.mxu0 0.0
    %986 = vmatpush1.msra.mxu0 0.0
    %987 = vmatprep.subr.mxu0 0.0
    %988 = vmatpush1.msra.mxu0 0.0
    %989 = vmatprep.subr.mxu0 0.0
    %990 = vmatpush1.msra.mxu0 0.0
    %991 = vmatprep.subr.mxu0 0.0
    %992 = vmatpush1.msra.mxu0 0.0
    %993 = vmatprep.subr.mxu0 0.0
    %994 = vmatpush1.msra.mxu0 0.0
    %995 = vmatprep.subr.mxu0 0.0
    %996 = vmatpush1.msra.mxu0 0.0
    %997 = vmatprep.subr.mxu0 0.0
    %998 = vmatpush1.msra.mxu0 0.0
    %999 = vmatprep.subr.mxu0 0.0
    %1000 = vmatpush1.msra.mxu0 0.0
    %1001 = vmatprep.subr.mxu0 0.0
    %1002 = vmatpush1.msra.mxu0 0.0
    %1003 = vmatprep.subr.mxu0 0.0
    %1004 = vmatpush1.msra.mxu0 0.0
    %1005 = vmatprep.subr.mxu0 0.0
    %1006 = vmatpush1.msra.mxu0 0.0
    %1007 = vmatprep.mubr.f32.mxu0 0.0
    %1008 = vmatmul.mubr.f32.gmra.mrb[0].mxu0 %v931
    %v1009 = vpop.f32.mrb[0].mxu0
    %v1010 = vadd.f32 0.0, %v1009
    %v1011 = vpop.f32.mrb[0].mxu0
    %v1012 = vadd.f32 0.0, %v1011
    %1013 = vdwg.mxu0
    %1014 = vmatprep.subr.mxu0 0.0
    %1015 = vmatpush1.msra.mxu0 %v486
    %1016 = vmatprep.subr.mxu0 0.0
    %1017 = vmatpush1.msra.mxu0 %v489
    %1018 = vmatprep.subr.mxu0 0.0
    %1019 = vmatpush1.msra.mxu0 %v492
    %1020 = vmatprep.subr.mxu0 0.0
    %1021 = vmatpush1.msra.mxu0 %v495
    %1022 = vmatprep.subr.mxu0 0.0
    %1023 = vmatpush1.msra.mxu0 %v498
    %1024 = vmatprep.subr.mxu0 0.0
    %1025 = vmatpush1.msra.mxu0 %v501
    %1026 = vmatprep.subr.mxu0 0.0
    %1027 = vmatpush1.msra.mxu0 %v504
    %1028 = vmatprep.subr.mxu0 0.0
    %1029 = vmatpush1.msra.mxu0 %v507
    %1030 = vmatprep.subr.mxu0 0.0
    %1031 = vmatpush1.msra.mxu0 %v510
    %1032 = vmatprep.subr.mxu0 0.0
    %1033 = vmatpush1.msra.mxu0 %v513
    %1034 = vmatprep.subr.mxu0 0.0
    %1035 = vmatpush1.msra.mxu0 %v516
    %1036 = vmatprep.subr.mxu0 0.0
    %1037 = vmatpush1.msra.mxu0 %v519
    %1038 = vmatprep.subr.mxu0 0.0
    %1039 = vmatpush1.msra.mxu0 %v522
    %1040 = vmatprep.subr.mxu0 0.0
    %1041 = vmatpush1.msra.mxu0 %v525
    %1042 = vmatprep.subr.mxu0 0.0
    %1043 = vmatpush1.msra.mxu0 %v528
    %1044 = vmatprep.subr.mxu0 0.0
    %1045 = vmatpush1.msra.mxu0 %v531
    %1046 = vmatprep.subr.mxu0 0.0
    %1047 = vmatpush1.msra.mxu0 0.0
    %1048 = vmatprep.subr.mxu0 0.0
    %1049 = vmatpush1.msra.mxu0 0.0
    %1050 = vmatprep.subr.mxu0 0.0
    %1051 = vmatpush1.msra.mxu0 0.0
    %1052 = vmatprep.subr.mxu0 0.0
    %1053 = vmatpush1.msra.mxu0 0.0
    %1054 = vmatprep.subr.mxu0 0.0
    %1055 = vmatpush1.msra.mxu0 0.0
    %1056 = vmatprep.subr.mxu0 0.0
    %1057 = vmatpush1.msra.mxu0 0.0
    %1058 = vmatprep.subr.mxu0 0.0
    %1059 = vmatpush1.msra.mxu0 0.0
    %1060 = vmatprep.subr.mxu0 0.0
    %1061 = vmatpush1.msra.mxu0 0.0
    %1062 = vmatprep.subr.mxu0 0.0
    %1063 = vmatpush1.msra.mxu0 0.0
    %1064 = vmatprep.subr.mxu0 0.0
    %1065 = vmatpush1.msra.mxu0 0.0
    %1066 = vmatprep.subr.mxu0 0.0
    %1067 = vmatpush1.msra.mxu0 0.0
    %1068 = vmatprep.subr.mxu0 0.0
    %1069 = vmatpush1.msra.mxu0 0.0
    %1070 = vmatprep.subr.mxu0 0.0
    %1071 = vmatpush1.msra.mxu0 0.0
    %1072 = vmatprep.subr.mxu0 0.0
    %1073 = vmatpush1.msra.mxu0 0.0
    %1074 = vmatprep.subr.mxu0 0.0
    %1075 = vmatpush1.msra.mxu0 0.0
    %1076 = vmatprep.subr.mxu0 0.0
    %1077 = vmatpush1.msra.mxu0 0.0
    %1078 = vmatprep.mubr.f32.mxu0 0.0
    %1079 = vmatmul.mubr.f32.gmra.mrb[0].mxu0 %v931
    %v1080 = vpop.f32.mrb[0].mxu0
    %v1081 = vadd.f32 0.0, %v1080
    %v1082 = vpop.f32.mrb[0].mxu0
    %1083 = vdwg.mxu0
    %v1084 = vadd.f32 %v940, %v1010
    %v1085 = vmul.f32 %v1084, 0.5
    %v1086 = vtanh.pop %v1085
    %v1087 = vmul.f32 %v1086, 0.5
    %v1088 = vadd.f32 %v1087, 0.5
    %v1089 = vadd.f32 %v941, %v1012
    %v1090 = vmul.f32 %v1089, 0.5
    %v1091 = vtanh.pop %v1090
    %v1092 = vmul.f32 %v1091, 0.5
    %v1093 = vadd.f32 %v1092, 0.5
    %v1094 = vadd.f32 %v1081, %v706
    %v1095 = vmul.f32 %v1088, %v1094
    %v1096 = vadd.f32 %v942, %v1095
    %v1097 = vtanh.pop %v1096
    %v1098 = vsub.f32 1.0, %v1093
    %v1099 = vmul.f32 %v1098, %v1097
    %v1100 = vmul.f32 %v1093, %v931
    %v1101 = vadd.f32 %v1099, %v1100
    %vm1102 = vcmp.gt.s32.totalorder %v107, 2
    %vm1103 = vcmp.gt.s32.totalorder %v107, 5
    %v1104 = vsel %vm1102, 1, 0
    %1105 = vset.pattern.permute.xlu0 0
    %1106 = vperm.xlu0 %1105, %v1104
    %v1107 = vpop.permute.xlu0 %1106
    %vm1108 = vcmp.eq.s32.totalorder %v1107, 1
    %vm1109 = vmand %vm719, %vm1108
    %v1110 = vsel %vm1103, 1, 0
    %1111 = vset.pattern.permute.xlu0 0
    %1112 = vperm.xlu0 %1111, %v1110
    %v1113 = vpop.permute.xlu0 %1112
    %vm1114 = vcmp.eq.s32.totalorder %v1113, 1
    %vm1115 = vmand %vm728, %vm1114
    %vm1116 = vmor %vm1109, %vm1115
    %v1117 = vsel %vm1116, %v1101, %v931
    %1118 = vst [vmem:[#allocation4] sm:$0xff] %v1117
    %v1119 = vsel %vm1116, %v1101, 0.0
    %s1120 = scalar_lea.vmem [#allocation3], 16
    %1121 = vst [vmem:[%s1120] sm:$0xff] %v1119
    %v1122 = vld [vmem:[#allocation4] sm:$0xff]
    %s1123 = scalar_lea.vmem [#allocation2], 72
    %v1124 = vld [vmem:[%s1123] sm:$0xff]
    %v1125 = vld [vmem:[%s1123 + $0x8] sm:$0xff]
    %v1126 = vld [vmem:[%s1123 + $0x10] sm:$0xff]
    %s1127 = scalar_lea.vmem [#allocation2], 96
    %v1128 = vld [vmem:[%s1127] sm:$0xff]
    %v1129 = vld [vmem:[%s1127 + $0x8] sm:$0xff]
    %v1130 = vld [vmem:[%s1127 + $0x10] sm:$0xff]
    %v1131 = vsel %vm545, %v1124, %v1128
    %v1132 = vsel %vm546, %v1125, %v1129
    %v1133 = vsel %vm547, %v1126, %v1130
    %1134 = vmatprep.subr.mxu0 %v485
    %1135 = vmatpush1.msra.mxu0 %v484
    %1136 = vmatprep.subr.mxu0 %v488
    %1137 = vmatpush1.msra.mxu0 %v487
    %1138 = vmatprep.subr.mxu0 %v491
    %1139 = vmatpush1.msra.mxu0 %v490
    %1140 = vmatprep.subr.mxu0 %v494
    %1141 = vmatpush1.msra.mxu0 %v493
    %1142 = vmatprep.subr.mxu0 %v497
    %1143 = vmatpush1.msra.mxu0 %v496
    %1144 = vmatprep.subr.mxu0 %v500
    %1145 = vmatpush1.msra.mxu0 %v499
    %1146 = vmatprep.subr.mxu0 %v503
    %1147 = vmatpush1.msra.mxu0 %v502
    %1148 = vmatprep.subr.mxu0 %v506
    %1149 = vmatpush1.msra.mxu0 %v505
    %1150 = vmatprep.subr.mxu0 %v509
    %1151 = vmatpush1.msra.mxu0 %v508
    %1152 = vmatprep.subr.mxu0 %v512
    %1153 = vmatpush1.msra.mxu0 %v511
    %1154 = vmatprep.subr.mxu0 %v515
    %1155 = vmatpush1.msra.mxu0 %v514
    %1156 = vmatprep.subr.mxu0 %v518
    %1157 = vmatpush1.msra.mxu0 %v517
    %1158 = vmatprep.subr.mxu0 %v521
    %1159 = vmatpush1.msra.mxu0 %v520
    %1160 = vmatprep.subr.mxu0 %v524
    %1161 = vmatpush1.msra.mxu0 %v523
    %1162 = vmatprep.subr.mxu0 %v527
    %1163 = vmatpush1.msra.mxu0 %v526
    %1164 = vmatprep.subr.mxu0 %v530
    %1165 = vmatpush1.msra.mxu0 %v529
    %1166 = vmatprep.subr.mxu0 0.0
    %1167 = vmatpush1.msra.mxu0 0.0
    %1168 = vmatprep.subr.mxu0 0.0
    %1169 = vmatpush1.msra.mxu0 0.0
    %1170 = vmatprep.subr.mxu0 0.0
    %1171 = vmatpush1.msra.mxu0 0.0
    %1172 = vmatprep.subr.mxu0 0.0
    %1173 = vmatpush1.msra.mxu0 0.0
    %1174 = vmatprep.subr.mxu0 0.0
    %1175 = vmatpush1.msra.mxu0 0.0
    %1176 = vmatprep.subr.mxu0 0.0
    %1177 = vmatpush1.msra.mxu0 0.0
    %1178 = vmatprep.subr.mxu0 0.0
    %1179 = vmatpush1.msra.mxu0 0.0
    %1180 = vmatprep.subr.mxu0 0.0
    %1181 = vmatpush1.msra.mxu0 0.0
    %1182 = vmatprep.subr.mxu0 0.0
    %1183 = vmatpush1.msra.mxu0 0.0
    %1184 = vmatprep.subr.mxu0 0.0
    %1185 = vmatpush1.msra.mxu0 0.0
    %1186 = vmatprep.subr.mxu0 0.0
    %1187 = vmatpush1.msra.mxu0 0.0
    %1188 = vmatprep.subr.mxu0 0.0
    %1189 = vmatpush1.msra.mxu0 0.0
    %1190 = vmatprep.subr.mxu0 0.0
    %1191 = vmatpush1.msra.mxu0 0.0
    %1192 = vmatprep.subr.mxu0 0.0
    %1193 = vmatpush1.msra.mxu0 0.0
    %1194 = vmatprep.subr.mxu0 0.0
    %1195 = vmatpush1.msra.mxu0 0.0
    %1196 = vmatprep.subr.mxu0 0.0
    %1197 = vmatpush1.msra.mxu0 0.0
    %1198 = vmatprep.mubr.f32.mxu0 0.0
    %1199 = vmatmul.mubr.f32.gmra.mrb[0].mxu0 %v1122
    %v1200 = vpop.f32.mrb[0].mxu0
    %v1201 = vadd.f32 0.0, %v1200
    %v1202 = vpop.f32.mrb[0].mxu0
    %v1203 = vadd.f32 0.0, %v1202
    %1204 = vdwg.mxu0
    %1205 = vmatprep.subr.mxu0 0.0
    %1206 = vmatpush1.msra.mxu0 %v486
    %1207 = vmatprep.subr.mxu0 0.0
    %1208 = vmatpush1.msra.mxu0 %v489
    %1209 = vmatprep.subr.mxu0 0.0
    %1210 = vmatpush1.msra.mxu0 %v492
    %1211 = vmatprep.subr.mxu0 0.0
    %1212 = vmatpush1.msra.mxu0 %v495
    %1213 = vmatprep.subr.mxu0 0.0
    %1214 = vmatpush1.msra.mxu0 %v498
    %1215 = vmatprep.subr.mxu0 0.0
    %1216 = vmatpush1.msra.mxu0 %v501
    %1217 = vmatprep.subr.mxu0 0.0
    %1218 = vmatpush1.msra.mxu0 %v504
    %1219 = vmatprep.subr.mxu0 0.0
    %1220 = vmatpush1.msra.mxu0 %v507
    %1221 = vmatprep.subr.mxu0 0.0
    %1222 = vmatpush1.msra.mxu0 %v510
    %1223 = vmatprep.subr.mxu0 0.0
    %1224 = vmatpush1.msra.mxu0 %v513
    %1225 = vmatprep.subr.mxu0 0.0
    %1226 = vmatpush1.msra.mxu0 %v516
    %1227 = vmatprep.subr.mxu0 0.0
    %1228 = vmatpush1.msra.mxu0 %v519
    %1229 = vmatprep.subr.mxu0 0.0
    %1230 = vmatpush1.msra.mxu0 %v522
    %1231 = vmatprep.subr.mxu0 0.0
    %1232 = vmatpush1.msra.mxu0 %v525
    %1233 = vmatprep.subr.mxu0 0.0
    %1234 = vmatpush1.msra.mxu0 %v528
    %1235 = vmatprep.subr.mxu0 0.0
    %1236 = vmatpush1.msra.mxu0 %v531
    %1237 = vmatprep.subr.mxu0 0.0
    %1238 = vmatpush1.msra.mxu0 0.0
    %1239 = vmatprep.subr.mxu0 0.0
    %1240 = vmatpush1.msra.mxu0 0.0
    %1241 = vmatprep.subr.mxu0 0.0
    %1242 = vmatpush1.msra.mxu0 0.0
    %1243 = vmatprep.subr.mxu0 0.0
    %1244 = vmatpush1.msra.mxu0 0.0
    %1245 = vmatprep.subr.mxu0 0.0
    %1246 = vmatpush1.msra.mxu0 0.0
    %1247 = vmatprep.subr.mxu0 0.0
    %1248 = vmatpush1.msra.mxu0 0.0
    %1249 = vmatprep.subr.mxu0 0.0
    %1250 = vmatpush1.msra.mxu0 0.0
    %1251 = vmatprep.subr.mxu0 0.0
    %1252 = vmatpush1.msra.mxu0 0.0
    %1253 = vmatprep.subr.mxu0 0.0
    %1254 = vmatpush1.msra.mxu0 0.0
    %1255 = vmatprep.subr.mxu0 0.0
    %1256 = vmatpush1.msra.mxu0 0.0
    %1257 = vmatprep.subr.mxu0 0.0
    %1258 = vmatpush1.msra.mxu0 0.0
    %1259 = vmatprep.subr.mxu0 0.0
    %1260 = vmatpush1.msra.mxu0 0.0
    %1261 = vmatprep.subr.mxu0 0.0
    %1262 = vmatpush1.msra.mxu0 0.0
    %1263 = vmatprep.subr.mxu0 0.0
    %1264 = vmatpush1.msra.mxu0 0.0
    %1265 = vmatprep.subr.mxu0 0.0
    %1266 = vmatpush1.msra.mxu0 0.0
    %1267 = vmatprep.subr.mxu0 0.0
    %1268 = vmatpush1.msra.mxu0 0.0
    %1269 = vmatprep.mubr.f32.mxu0 0.0
    %1270 = vmatmul.mubr.f32.gmra.mrb[0].mxu0 %v1122
    %v1271 = vpop.f32.mrb[0].mxu0
    %v1272 = vadd.f32 0.0, %v1271
    %v1273 = vpop.f32.mrb[0].mxu0
    %1274 = vdwg.mxu0
    %v1275 = vadd.f32 %v1131, %v1201
    %v1276 = vmul.f32 %v1275, 0.5
    %v1277 = vtanh.pop %v1276
    %v1278 = vmul.f32 %v1277, 0.5
    %v1279 = vadd.f32 %v1278, 0.5
    %v1280 = vadd.f32 %v1132, %v1203
    %v1281 = vmul.f32 %v1280, 0.5
    %v1282 = vtanh.pop %v1281
    %v1283 = vmul.f32 %v1282, 0.5
    %v1284 = vadd.f32 %v1283, 0.5
    %v1285 = vadd.f32 %v1272, %v706
    %v1286 = vmul.f32 %v1279, %v1285
    %v1287 = vadd.f32 %v1133, %v1286
    %v1288 = vtanh.pop %v1287
    %v1289 = vsub.f32 1.0, %v1284
    %v1290 = vmul.f32 %v1289, %v1288
    %v1291 = vmul.f32 %v1284, %v1122
    %v1292 = vadd.f32 %v1290, %v1291
    %vm1293 = vcmp.gt.s32.totalorder %v107, 3
    %vm1294 = vcmp.gt.s32.totalorder %v107, 4
    %v1295 = vsel %vm1293, 1, 0
    %1296 = vset.pattern.permute.xlu0 0
    %1297 = vperm.xlu0 %1296, %v1295
    %v1298 = vpop.permute.xlu0 %1297
    %vm1299 = vcmp.eq.s32.totalorder %v1298, 1
    %vm1300 = vmand %vm719, %vm1299
    %v1301 = vsel %vm1294, 1, 0
    %1302 = vset.pattern.permute.xlu0 0
    %1303 = vperm.xlu0 %1302, %v1301
    %v1304 = vpop.permute.xlu0 %1303
    %vm1305 = vcmp.eq.s32.totalorder %v1304, 1
    %vm1306 = vmand %vm728, %vm1305
    %vm1307 = vmor %vm1300, %vm1306
    %v1308 = vsel %vm1307, %v1292, %v1122
    %1309 = vst [vmem:[#allocation4] sm:$0xff] %v1308
    %v1310 = vsel %vm1307, %v1292, 0.0
    %s1311 = scalar_lea.vmem [#allocation3], 24
    %1312 = vst [vmem:[%s1311] sm:$0xff] %v1310
    %v1313 = vld [vmem:[#allocation4] sm:$0xff]
    %v1314 = vld [vmem:[%s1127] sm:$0xff]
    %v1315 = vld [vmem:[%s1127 + $0x8] sm:$0xff]
    %v1316 = vld [vmem:[%s1127 + $0x10] sm:$0xff]
    %v1317 = vld [vmem:[%s1123] sm:$0xff]
    %v1318 = vld [vmem:[%s1123 + $0x8] sm:$0xff]
    %v1319 = vld [vmem:[%s1123 + $0x10] sm:$0xff]
    %v1320 = vsel %vm545, %v1314, %v1317
    %v1321 = vsel %vm546, %v1315, %v1318
    %v1322 = vsel %vm547, %v1316, %v1319
    %1323 = vmatprep.subr.mxu0 %v485
    %1324 = vmatpush1.msra.mxu0 %v484
    %1325 = vmatprep.subr.mxu0 %v488
    %1326 = vmatpush1.msra.mxu0 %v487
    %1327 = vmatprep.subr.mxu0 %v491
    %1328 = vmatpush1.msra.mxu0 %v490
    %1329 = vmatprep.subr.mxu0 %v494
    %1330 = vmatpush1.msra.mxu0 %v493
    %1331 = vmatprep.subr.mxu0 %v497
    %1332 = vmatpush1.msra.mxu0 %v496
    %1333 = vmatprep.subr.mxu0 %v500
    %1334 = vmatpush1.msra.mxu0 %v499
    %1335 = vmatprep.subr.mxu0 %v503
    %1336 = vmatpush1.msra.mxu0 %v502
    %1337 = vmatprep.subr.mxu0 %v506
    %1338 = vmatpush1.msra.mxu0 %v505
    %1339 = vmatprep.subr.mxu0 %v509
    %1340 = vmatpush1.msra.mxu0 %v508
    %1341 = vmatprep.subr.mxu0 %v512
    %1342 = vmatpush1.msra.mxu0 %v511
    %1343 = vmatprep.subr.mxu0 %v515
    %1344 = vmatpush1.msra.mxu0 %v514
    %1345 = vmatprep.subr.mxu0 %v518
    %1346 = vmatpush1.msra.mxu0 %v517
    %1347 = vmatprep.subr.mxu0 %v521
    %1348 = vmatpush1.msra.mxu0 %v520
    %1349 = vmatprep.subr.mxu0 %v524
    %1350 = vmatpush1.msra.mxu0 %v523
    %1351 = vmatprep.subr.mxu0 %v527
    %1352 = vmatpush1.msra.mxu0 %v526
    %1353 = vmatprep.subr.mxu0 %v530
    %1354 = vmatpush1.msra.mxu0 %v529
    %1355 = vmatprep.subr.mxu0 0.0
    %1356 = vmatpush1.msra.mxu0 0.0
    %1357 = vmatprep.subr.mxu0 0.0
    %1358 = vmatpush1.msra.mxu0 0.0
    %1359 = vmatprep.subr.mxu0 0.0
    %1360 = vmatpush1.msra.mxu0 0.0
    %1361 = vmatprep.subr.mxu0 0.0
    %1362 = vmatpush1.msra.mxu0 0.0
    %1363 = vmatprep.subr.mxu0 0.0
    %1364 = vmatpush1.msra.mxu0 0.0
    %1365 = vmatprep.subr.mxu0 0.0
    %1366 = vmatpush1.msra.mxu0 0.0
    %1367 = vmatprep.subr.mxu0 0.0
    %1368 = vmatpush1.msra.mxu0 0.0
    %1369 = vmatprep.subr.mxu0 0.0
    %1370 = vmatpush1.msra.mxu0 0.0
    %1371 = vmatprep.subr.mxu0 0.0
    %1372 = vmatpush1.msra.mxu0 0.0
    %1373 = vmatprep.subr.mxu0 0.0
    %1374 = vmatpush1.msra.mxu0 0.0
    %1375 = vmatprep.subr.mxu0 0.0
    %1376 = vmatpush1.msra.mxu0 0.0
    %1377 = vmatprep.subr.mxu0 0.0
    %1378 = vmatpush1.msra.mxu0 0.0
    %1379 = vmatprep.subr.mxu0 0.0
    %1380 = vmatpush1.msra.mxu0 0.0
    %1381 = vmatprep.subr.mxu0 0.0
    %1382 = vmatpush1.msra.mxu0 0.0
    %1383 = vmatprep.subr.mxu0 0.0
    %1384 = vmatpush1.msra.mxu0 0.0
    %1385 = vmatprep.subr.mxu0 0.0
    %1386 = vmatpush1.msra.mxu0 0.0
    %1387 = vmatprep.mubr.f32.mxu0 0.0
    %1388 = vmatmul.mubr.f32.gmra.mrb[0].mxu0 %v1313
    %v1389 = vpop.f32.mrb[0].mxu0
    %v1390 = vadd.f32 0.0, %v1389
    %v1391 = vpop.f32.mrb[0].mxu0
    %v1392 = vadd.f32 0.0, %v1391
    %1393 = vdwg.mxu0
    %1394 = vmatprep.subr.mxu0 0.0
    %1395 = vmatpush1.msra.mxu0 %v486
    %1396 = vmatprep.subr.mxu0 0.0
    %1397 = vmatpush1.msra.mxu0 %v489
    %1398 = vmatprep.subr.mxu0 0.0
    %1399 = vmatpush1.msra.mxu0 %v492
    %1400 = vmatprep.subr.mxu0 0.0
    %1401 = vmatpush1.msra.mxu0 %v495
    %1402 = vmatprep.subr.mxu0 0.0
    %1403 = vmatpush1.msra.mxu0 %v498
    %1404 = vmatprep.subr.mxu0 0.0
    %1405 = vmatpush1.msra.mxu0 %v501
    %1406 = vmatprep.subr.mxu0 0.0
    %1407 = vmatpush1.msra.mxu0 %v504
    %1408 = vmatprep.subr.mxu0 0.0
    %1409 = vmatpush1.msra.mxu0 %v507
    %1410 = vmatprep.subr.mxu0 0.0
    %1411 = vmatpush1.msra.mxu0 %v510
    %1412 = vmatprep.subr.mxu0 0.0
    %1413 = vmatpush1.msra.mxu0 %v513
    %1414 = vmatprep.subr.mxu0 0.0
    %1415 = vmatpush1.msra.mxu0 %v516
    %1416 = vmatprep.subr.mxu0 0.0
    %1417 = vmatpush1.msra.mxu0 %v519
    %1418 = vmatprep.subr.mxu0 0.0
    %1419 = vmatpush1.msra.mxu0 %v522
    %1420 = vmatprep.subr.mxu0 0.0
    %1421 = vmatpush1.msra.mxu0 %v525
    %1422 = vmatprep.subr.mxu0 0.0
    %1423 = vmatpush1.msra.mxu0 %v528
    %1424 = vmatprep.subr.mxu0 0.0
    %1425 = vmatpush1.msra.mxu0 %v531
    %1426 = vmatprep.subr.mxu0 0.0
    %1427 = vmatpush1.msra.mxu0 0.0
    %1428 = vmatprep.subr.mxu0 0.0
    %1429 = vmatpush1.msra.mxu0 0.0
    %1430 = vmatprep.subr.mxu0 0.0
    %1431 = vmatpush1.msra.mxu0 0.0
    %1432 = vmatprep.subr.mxu0 0.0
    %1433 = vmatpush1.msra.mxu0 0.0
    %1434 = vmatprep.subr.mxu0 0.0
    %1435 = vmatpush1.msra.mxu0 0.0
    %1436 = vmatprep.subr.mxu0 0.0
    %1437 = vmatpush1.msra.mxu0 0.0
    %1438 = vmatprep.subr.mxu0 0.0
    %1439 = vmatpush1.msra.mxu0 0.0
    %1440 = vmatprep.subr.mxu0 0.0
    %1441 = vmatpush1.msra.mxu0 0.0
    %1442 = vmatprep.subr.mxu0 0.0
    %1443 = vmatpush1.msra.mxu0 0.0
    %1444 = vmatprep.subr.mxu0 0.0
    %1445 = vmatpush1.msra.mxu0 0.0
    %1446 = vmatprep.subr.mxu0 0.0
    %1447 = vmatpush1.msra.mxu0 0.0
    %1448 = vmatprep.subr.mxu0 0.0
    %1449 = vmatpush1.msra.mxu0 0.0
    %1450 = vmatprep.subr.mxu0 0.0
    %1451 = vmatpush1.msra.mxu0 0.0
    %1452 = vmatprep.subr.mxu0 0.0
    %1453 = vmatpush1.msra.mxu0 0.0
    %1454 = vmatprep.subr.mxu0 0.0
    %1455 = vmatpush1.msra.mxu0 0.0
    %1456 = vmatprep.subr.mxu0 0.0
    %1457 = vmatpush1.msra.mxu0 0.0
    %1458 = vmatprep.mubr.f32.mxu0 0.0
    %1459 = vmatmul.mubr.f32.gmra.mrb[0].mxu0 %v1313
    %v1460 = vpop.f32.mrb[0].mxu0
    %v1461 = vadd.f32 0.0, %v1460
    %v1462 = vpop.f32.mrb[0].mxu0
    %1463 = vdwg.mxu0
    %v1464 = vadd.f32 %v1320, %v1390
    %v1465 = vmul.f32 %v1464, 0.5
    %v1466 = vtanh.pop %v1465
    %v1467 = vmul.f32 %v1466, 0.5
    %v1468 = vadd.f32 %v1467, 0.5
    %v1469 = vadd.f32 %v1321, %v1392
    %v1470 = vmul.f32 %v1469, 0.5
    %v1471 = vtanh.pop %v1470
    %v1472 = vmul.f32 %v1471, 0.5
    %v1473 = vadd.f32 %v1472, 0.5
    %v1474 = vadd.f32 %v1461, %v706
    %v1475 = vmul.f32 %v1468, %v1474
    %v1476 = vadd.f32 %v1322, %v1475
    %v1477 = vtanh.pop %v1476
    %v1478 = vsub.f32 1.0, %v1473
    %v1479 = vmul.f32 %v1478, %v1477
    %v1480 = vmul.f32 %v1473, %v1313
    %v1481 = vadd.f32 %v1479, %v1480
    %vm1482 = vmand %vm719, %vm1305
    %vm1483 = vmand %vm728, %vm1299
    %vm1484 = vmor %vm1482, %vm1483
    %v1485 = vsel %vm1484, %v1481, %v1313
    %1486 = vst [vmem:[#allocation4] sm:$0xff] %v1485
    %v1487 = vsel %vm1484, %v1481, 0.0
    %s1488 = scalar_lea.vmem [#allocation3], 32
    %1489 = vst [vmem:[%s1488] sm:$0xff] %v1487
    %v1490 = vld [vmem:[#allocation4] sm:$0xff]
    %v1491 = vld [vmem:[%s936] sm:$0xff]
    %v1492 = vld [vmem:[%s936 + $0x8] sm:$0xff]
    %v1493 = vld [vmem:[%s936 + $0x10] sm:$0xff]
    %v1494 = vld [vmem:[%s932] sm:$0xff]
    %v1495 = vld [vmem:[%s932 + $0x8] sm:$0xff]
    %v1496 = vld [vmem:[%s932 + $0x10] sm:$0xff]
    %v1497 = vsel %vm545, %v1491, %v1494
    %v1498 = vsel %vm546, %v1492, %v1495
    %v1499 = vsel %vm547, %v1493, %v1496
    %1500 = vmatprep.subr.mxu0 %v485
    %1501 = vmatpush1.msra.mxu0 %v484
    %1502 = vmatprep.subr.mxu0 %v488
    %1503 = vmatpush1.msra.mxu0 %v487
    %1504 = vmatprep.subr.mxu0 %v491
    %1505 = vmatpush1.msra.mxu0 %v490
    %1506 = vmatprep.subr.mxu0 %v494
    %1507 = vmatpush1.msra.mxu0 %v493
    %1508 = vmatprep.subr.mxu0 %v497
    %1509 = vmatpush1.msra.mxu0 %v496
    %1510 = vmatprep.subr.mxu0 %v500
    %1511 = vmatpush1.msra.mxu0 %v499
    %1512 = vmatprep.subr.mxu0 %v503
    %1513 = vmatpush1.msra.mxu0 %v502
    %1514 = vmatprep.subr.mxu0 %v506
    %1515 = vmatpush1.msra.mxu0 %v505
    %1516 = vmatprep.subr.mxu0 %v509
    %1517 = vmatpush1.msra.mxu0 %v508
    %1518 = vmatprep.subr.mxu0 %v512
    %1519 = vmatpush1.msra.mxu0 %v511
    %1520 = vmatprep.subr.mxu0 %v515
    %1521 = vmatpush1.msra.mxu0 %v514
    %1522 = vmatprep.subr.mxu0 %v518
    %1523 = vmatpush1.msra.mxu0 %v517
    %1524 = vmatprep.subr.mxu0 %v521
    %1525 = vmatpush1.msra.mxu0 %v520
    %1526 = vmatprep.subr.mxu0 %v524
    %1527 = vmatpush1.msra.mxu0 %v523
    %1528 = vmatprep.subr.mxu0 %v527
    %1529 = vmatpush1.msra.mxu0 %v526
    %1530 = vmatprep.subr.mxu0 %v530
    %1531 = vmatpush1.msra.mxu0 %v529
    %1532 = vmatprep.subr.mxu0 0.0
    %1533 = vmatpush1.msra.mxu0 0.0
    %1534 = vmatprep.subr.mxu0 0.0
    %1535 = vmatpush1.msra.mxu0 0.0
    %1536 = vmatprep.subr.mxu0 0.0
    %1537 = vmatpush1.msra.mxu0 0.0
    %1538 = vmatprep.subr.mxu0 0.0
    %1539 = vmatpush1.msra.mxu0 0.0
    %1540 = vmatprep.subr.mxu0 0.0
    %1541 = vmatpush1.msra.mxu0 0.0
    %1542 = vmatprep.subr.mxu0 0.0
    %1543 = vmatpush1.msra.mxu0 0.0
    %1544 = vmatprep.subr.mxu0 0.0
    %1545 = vmatpush1.msra.mxu0 0.0
    %1546 = vmatprep.subr.mxu0 0.0
    %1547 = vmatpush1.msra.mxu0 0.0
    %1548 = vmatprep.subr.mxu0 0.0
    %1549 = vmatpush1.msra.mxu0 0.0
    %1550 = vmatprep.subr.mxu0 0.0
    %1551 = vmatpush1.msra.mxu0 0.0
    %1552 = vmatprep.subr.mxu0 0.0
    %1553 = vmatpush1.msra.mxu0 0.0
    %1554 = vmatprep.subr.mxu0 0.0
    %1555 = vmatpush1.msra.mxu0 0.0
    %1556 = vmatprep.subr.mxu0 0.0
    %1557 = vmatpush1.msra.mxu0 0.0
    %1558 = vmatprep.subr.mxu0 0.0
    %1559 = vmatpush1.msra.mxu0 0.0
    %1560 = vmatprep.subr.mxu0 0.0
    %1561 = vmatpush1.msra.mxu0 0.0
    %1562 = vmatprep.subr.mxu0 0.0
    %1563 = vmatpush1.msra.mxu0 0.0
    %1564 = vmatprep.mubr.f32.mxu0 0.0
    %1565 = vmatmul.mubr.f32.gmra.mrb[0].mxu0 %v1490
    %v1566 = vpop.f32.mrb[0].mxu0
    %v1567 = vadd.f32 0.0, %v1566
    %v1568 = vpop.f32.mrb[0].mxu0
    %v1569 = vadd.f32 0.0, %v1568
    %1570 = vdwg.mxu0
    %1571 = vmatprep.subr.mxu0 0.0
    %1572 = vmatpush1.msra.mxu0 %v486
    %1573 = vmatprep.subr.mxu0 0.0
    %1574 = vmatpush1.msra.mxu0 %v489
    %1575 = vmatprep.subr.mxu0 0.0
    %1576 = vmatpush1.msra.mxu0 %v492
    %1577 = vmatprep.subr.mxu0 0.0
    %1578 = vmatpush1.msra.mxu0 %v495
    %1579 = vmatprep.subr.mxu0 0.0
    %1580 = vmatpush1.msra.mxu0 %v498
    %1581 = vmatprep.subr.mxu0 0.0
    %1582 = vmatpush1.msra.mxu0 %v501
    %1583 = vmatprep.subr.mxu0 0.0
    %1584 = vmatpush1.msra.mxu0 %v504
    %1585 = vmatprep.subr.mxu0 0.0
    %1586 = vmatpush1.msra.mxu0 %v507
    %1587 = vmatprep.subr.mxu0 0.0
    %1588 = vmatpush1.msra.mxu0 %v510
    %1589 = vmatprep.subr.mxu0 0.0
    %1590 = vmatpush1.msra.mxu0 %v513
    %1591 = vmatprep.subr.mxu0 0.0
    %1592 = vmatpush1.msra.mxu0 %v516
    %1593 = vmatprep.subr.mxu0 0.0
    %1594 = vmatpush1.msra.mxu0 %v519
    %1595 = vmatprep.subr.mxu0 0.0
    %1596 = vmatpush1.msra.mxu0 %v522
    %1597 = vmatprep.subr.mxu0 0.0
    %1598 = vmatpush1.msra.mxu0 %v525
    %1599 = vmatprep.subr.mxu0 0.0
    %1600 = vmatpush1.msra.mxu0 %v528
    %1601 = vmatprep.subr.mxu0 0.0
    %1602 = vmatpush1.msra.mxu0 %v531
    %1603 = vmatprep.subr.mxu0 0.0
    %1604 = vmatpush1.msra.mxu0 0.0
    %1605 = vmatprep.subr.mxu0 0.0
    %1606 = vmatpush1.msra.mxu0 0.0
    %1607 = vmatprep.subr.mxu0 0.0
    %1608 = vmatpush1.msra.mxu0 0.0
    %1609 = vmatprep.subr.mxu0 0.0
    %1610 = vmatpush1.msra.mxu0 0.0
    %1611 = vmatprep.subr.mxu0 0.0
    %1612 = vmatpush1.msra.mxu0 0.0
    %1613 = vmatprep.subr.mxu0 0.0
    %1614 = vmatpush1.msra.mxu0 0.0
    %1615 = vmatprep.subr.mxu0 0.0
    %1616 = vmatpush1.msra.mxu0 0.0
    %1617 = vmatprep.subr.mxu0 0.0
    %1618 = vmatpush1.msra.mxu0 0.0
    %1619 = vmatprep.subr.mxu0 0.0
    %1620 = vmatpush1.msra.mxu0 0.0
    %1621 = vmatprep.subr.mxu0 0.0
    %1622 = vmatpush1.msra.mxu0 0.0
    %1623 = vmatprep.subr.mxu0 0.0
    %1624 = vmatpush1.msra.mxu0 0.0
    %1625 = vmatprep.subr.mxu0 0.0
    %1626 = vmatpush1.msra.mxu0 0.0
    %1627 = vmatprep.subr.mxu0 0.0
    %1628 = vmatpush1.msra.mxu0 0.0
    %1629 = vmatprep.subr.mxu0 0.0
    %1630 = vmatpush1.msra.mxu0 0.0
    %1631 = vmatprep.subr.mxu0 0.0
    %1632 = vmatpush1.msra.mxu0 0.0
    %1633 = vmatprep.subr.mxu0 0.0
    %1634 = vmatpush1.msra.mxu0 0.0
    %1635 = vmatprep.mubr.f32.mxu0 0.0
    %1636 = vmatmul.mubr.f32.gmra.mrb[0].mxu0 %v1490
    %v1637 = vpop.f32.mrb[0].mxu0
    %v1638 = vadd.f32 0.0, %v1637
    %v1639 = vpop.f32.mrb[0].mxu0
    %1640 = vdwg.mxu0
    %v1641 = vadd.f32 %v1497, %v1567
    %v1642 = vmul.f32 %v1641, 0.5
    %v1643 = vtanh.pop %v1642
    %v1644 = vmul.f32 %v1643, 0.5
    %v1645 = vadd.f32 %v1644, 0.5
    %v1646 = vadd.f32 %v1498, %v1569
    %v1647 = vmul.f32 %v1646, 0.5
    %v1648 = vtanh.pop %v1647
    %v1649 = vmul.f32 %v1648, 0.5
    %v1650 = vadd.f32 %v1649, 0.5
    %v1651 = vadd.f32 %v1638, %v706
    %v1652 = vmul.f32 %v1645, %v1651
    %v1653 = vadd.f32 %v1499, %v1652
    %v1654 = vtanh.pop %v1653
    %v1655 = vsub.f32 1.0, %v1650
    %v1656 = vmul.f32 %v1655, %v1654
    %v1657 = vmul.f32 %v1650, %v1490
    %v1658 = vadd.f32 %v1656, %v1657
    %vm1659 = vmand %vm719, %vm1114
    %vm1660 = vmand %vm728, %vm1108
    %vm1661 = vmor %vm1659, %vm1660
    %v1662 = vsel %vm1661, %v1658, %v1490
    %1663 = vst [vmem:[#allocation4] sm:$0xff] %v1662
    %v1664 = vsel %vm1661, %v1658, 0.0
    %s1665 = scalar_lea.vmem [#allocation3], 40
    %1666 = vst [vmem:[%s1665] sm:$0xff] %v1664
    %v1667 = vld [vmem:[#allocation4] sm:$0xff]
    %v1668 = vld [vmem:[%s745] sm:$0xff]
    %v1669 = vld [vmem:[%s745 + $0x8] sm:$0xff]
    %v1670 = vld [vmem:[%s745 + $0x10] sm:$0xff]
    %v1671 = vld [vmem:[%s741] sm:$0xff]
    %v1672 = vld [vmem:[%s741 + $0x8] sm:$0xff]
    %v1673 = vld [vmem:[%s741 + $0x10] sm:$0xff]
    %v1674 = vsel %vm545, %v1668, %v1671
    %v1675 = vsel %vm546, %v1669, %v1672
    %v1676 = vsel %vm547, %v1670, %v1673
    %1677 = vmatprep.subr.mxu0 %v485
    %1678 = vmatpush1.msra.mxu0 %v484
    %1679 = vmatprep.subr.mxu0 %v488
    %1680 = vmatpush1.msra.mxu0 %v487
    %1681 = vmatprep.subr.mxu0 %v491
    %1682 = vmatpush1.msra.mxu0 %v490
    %1683 = vmatprep.subr.mxu0 %v494
    %1684 = vmatpush1.msra.mxu0 %v493
    %1685 = vmatprep.subr.mxu0 %v497
    %1686 = vmatpush1.msra.mxu0 %v496
    %1687 = vmatprep.subr.mxu0 %v500
    %1688 = vmatpush1.msra.mxu0 %v499
    %1689 = vmatprep.subr.mxu0 %v503
    %1690 = vmatpush1.msra.mxu0 %v502
    %1691 = vmatprep.subr.mxu0 %v506
    %1692 = vmatpush1.msra.mxu0 %v505
    %1693 = vmatprep.subr.mxu0 %v509
    %1694 = vmatpush1.msra.mxu0 %v508
    %1695 = vmatprep.subr.mxu0 %v512
    %1696 = vmatpush1.msra.mxu0 %v511
    %1697 = vmatprep.subr.mxu0 %v515
    %1698 = vmatpush1.msra.mxu0 %v514
    %1699 = vmatprep.subr.mxu0 %v518
    %1700 = vmatpush1.msra.mxu0 %v517
    %1701 = vmatprep.subr.mxu0 %v521
    %1702 = vmatpush1.msra.mxu0 %v520
    %1703 = vmatprep.subr.mxu0 %v524
    %1704 = vmatpush1.msra.mxu0 %v523
    %1705 = vmatprep.subr.mxu0 %v527
    %1706 = vmatpush1.msra.mxu0 %v526
    %1707 = vmatprep.subr.mxu0 %v530
    %1708 = vmatpush1.msra.mxu0 %v529
    %1709 = vmatprep.subr.mxu0 0.0
    %1710 = vmatpush1.msra.mxu0 0.0
    %1711 = vmatprep.subr.mxu0 0.0
    %1712 = vmatpush1.msra.mxu0 0.0
    %1713 = vmatprep.subr.mxu0 0.0
    %1714 = vmatpush1.msra.mxu0 0.0
    %1715 = vmatprep.subr.mxu0 0.0
    %1716 = vmatpush1.msra.mxu0 0.0
    %1717 = vmatprep.subr.mxu0 0.0
    %1718 = vmatpush1.msra.mxu0 0.0
    %1719 = vmatprep.subr.mxu0 0.0
    %1720 = vmatpush1.msra.mxu0 0.0
    %1721 = vmatprep.subr.mxu0 0.0
    %1722 = vmatpush1.msra.mxu0 0.0
    %1723 = vmatprep.subr.mxu0 0.0
    %1724 = vmatpush1.msra.mxu0 0.0
    %1725 = vmatprep.subr.mxu0 0.0
    %1726 = vmatpush1.msra.mxu0 0.0
    %1727 = vmatprep.subr.mxu0 0.0
    %1728 = vmatpush1.msra.mxu0 0.0
    %1729 = vmatprep.subr.mxu0 0.0
    %1730 = vmatpush1.msra.mxu0 0.0
    %1731 = vmatprep.subr.mxu0 0.0
    %1732 = vmatpush1.msra.mxu0 0.0
    %1733 = vmatprep.subr.mxu0 0.0
    %1734 = vmatpush1.msra.mxu0 0.0
    %1735 = vmatprep.subr.mxu0 0.0
    %1736 = vmatpush1.msra.mxu0 0.0
    %1737 = vmatprep.subr.mxu0 0.0
    %1738 = vmatpush1.msra.mxu0 0.0
    %1739 = vmatprep.subr.mxu0 0.0
    %1740 = vmatpush1.msra.mxu0 0.0
    %1741 = vmatprep.mubr.f32.mxu0 0.0
    %1742 = vmatmul.mubr.f32.gmra.mrb[0].mxu0 %v1667
    %v1743 = vpop.f32.mrb[0].mxu0
    %v1744 = vadd.f32 0.0, %v1743
    %v1745 = vpop.f32.mrb[0].mxu0
    %v1746 = vadd.f32 0.0, %v1745
    %1747 = vdwg.mxu0
    %1748 = vmatprep.subr.mxu0 0.0
    %1749 = vmatpush1.msra.mxu0 %v486
    %1750 = vmatprep.subr.mxu0 0.0
    %1751 = vmatpush1.msra.mxu0 %v489
    %1752 = vmatprep.subr.mxu0 0.0
    %1753 = vmatpush1.msra.mxu0 %v492
    %1754 = vmatprep.subr.mxu0 0.0
    %1755 = vmatpush1.msra.mxu0 %v495
    %1756 = vmatprep.subr.mxu0 0.0
    %1757 = vmatpush1.msra.mxu0 %v498
    %1758 = vmatprep.subr.mxu0 0.0
    %1759 = vmatpush1.msra.mxu0 %v501
    %1760 = vmatprep.subr.mxu0 0.0
    %1761 = vmatpush1.msra.mxu0 %v504
    %1762 = vmatprep.subr.mxu0 0.0
    %1763 = vmatpush1.msra.mxu0 %v507
    %1764 = vmatprep.subr.mxu0 0.0
    %1765 = vmatpush1.msra.mxu0 %v510
    %1766 = vmatprep.subr.mxu0 0.0
    %1767 = vmatpush1.msra.mxu0 %v513
    %1768 = vmatprep.subr.mxu0 0.0
    %1769 = vmatpush1.msra.mxu0 %v516
    %1770 = vmatprep.subr.mxu0 0.0
    %1771 = vmatpush1.msra.mxu0 %v519
    %1772 = vmatprep.subr.mxu0 0.0
    %1773 = vmatpush1.msra.mxu0 %v522
    %1774 = vmatprep.subr.mxu0 0.0
    %1775 = vmatpush1.msra.mxu0 %v525
    %1776 = vmatprep.subr.mxu0 0.0
    %1777 = vmatpush1.msra.mxu0 %v528
    %1778 = vmatprep.subr.mxu0 0.0
    %1779 = vmatpush1.msra.mxu0 %v531
    %1780 = vmatprep.subr.mxu0 0.0
    %1781 = vmatpush1.msra.mxu0 0.0
    %1782 = vmatprep.subr.mxu0 0.0
    %1783 = vmatpush1.msra.mxu0 0.0
    %1784 = vmatprep.subr.mxu0 0.0
    %1785 = vmatpush1.msra.mxu0 0.0
    %1786 = vmatprep.subr.mxu0 0.0
    %1787 = vmatpush1.msra.mxu0 0.0
    %1788 = vmatprep.subr.mxu0 0.0
    %1789 = vmatpush1.msra.mxu0 0.0
    %1790 = vmatprep.subr.mxu0 0.0
    %1791 = vmatpush1.msra.mxu0 0.0
    %1792 = vmatprep.subr.mxu0 0.0
    %1793 = vmatpush1.msra.mxu0 0.0
    %1794 = vmatprep.subr.mxu0 0.0
    %1795 = vmatpush1.msra.mxu0 0.0
    %1796 = vmatprep.subr.mxu0 0.0
    %1797 = vmatpush1.msra.mxu0 0.0
    %1798 = vmatprep.subr.mxu0 0.0
    %1799 = vmatpush1.msra.mxu0 0.0
    %1800 = vmatprep.subr.mxu0 0.0
    %1801 = vmatpush1.msra.mxu0 0.0
    %1802 = vmatprep.subr.mxu0 0.0
    %1803 = vmatpush1.msra.mxu0 0.0
    %1804 = vmatprep.subr.mxu0 0.0
    %1805 = vmatpush1.msra.mxu0 0.0
    %1806 = vmatprep.subr.mxu0 0.0
    %1807 = vmatpush1.msra.mxu0 0.0
    %1808 = vmatprep.subr.mxu0 0.0
    %1809 = vmatpush1.msra.mxu0 0.0
    %1810 = vmatprep.subr.mxu0 0.0
    %1811 = vmatpush1.msra.mxu0 0.0
    %1812 = vmatprep.mubr.f32.mxu0 0.0
    %1813 = vmatmul.mubr.f32.gmra.mrb[0].mxu0 %v1667
    %v1814 = vpop.f32.mrb[0].mxu0
    %v1815 = vadd.f32 0.0, %v1814
    %v1816 = vpop.f32.mrb[0].mxu0
    %1817 = vdwg.mxu0
    %v1818 = vadd.f32 %v1674, %v1744
    %v1819 = vmul.f32 %v1818, 0.5
    %v1820 = vtanh.pop %v1819
    %v1821 = vmul.f32 %v1820, 0.5
    %v1822 = vadd.f32 %v1821, 0.5
    %v1823 = vadd.f32 %v1675, %v1746
    %v1824 = vmul.f32 %v1823, 0.5
    %v1825 = vtanh.pop %v1824
    %v1826 = vmul.f32 %v1825, 0.5
    %v1827 = vadd.f32 %v1826, 0.5
    %v1828 = vadd.f32 %v1815, %v706
    %v1829 = vmul.f32 %v1822, %v1828
    %v1830 = vadd.f32 %v1676, %v1829
    %v1831 = vtanh.pop %v1830
    %v1832 = vsub.f32 1.0, %v1827
    %v1833 = vmul.f32 %v1832, %v1831
    %v1834 = vmul.f32 %v1827, %v1667
    %v1835 = vadd.f32 %v1833, %v1834
    %vm1836 = vmand %vm719, %vm923
    %vm1837 = vmand %vm728, %vm917
    %vm1838 = vmor %vm1836, %vm1837
    %v1839 = vsel %vm1838, %v1835, %v1667
    %1840 = vst [vmem:[#allocation4] sm:$0xff] %v1839
    %v1841 = vsel %vm1838, %v1835, 0.0
    %s1842 = scalar_lea.vmem [#allocation3], 48
    %1843 = vst [vmem:[%s1842] sm:$0xff] %v1841
    %v1844 = vld [vmem:[#allocation4] sm:$0xff]
    %v1845 = vld [vmem:[%s538] sm:$0xff]
    %v1846 = vld [vmem:[%s538 + $0x8] sm:$0xff]
    %v1847 = vld [vmem:[%s538 + $0x10] sm:$0xff]
    %v1848 = vld [vmem:[#allocation2] sm:$0xff]
    %v1849 = vld [vmem:[#allocation2 + $0x8] sm:$0xff]
    %v1850 = vld [vmem:[#allocation2 + $0x10] sm:$0xff]
    %v1851 = vsel %vm545, %v1845, %v1848
    %v1852 = vsel %vm546, %v1846, %v1849
    %v1853 = vsel %vm547, %v1847, %v1850
    %1854 = vmatprep.subr.mxu0 %v485
    %1855 = vmatpush1.msra.mxu0 %v484
    %1856 = vmatprep.subr.mxu0 %v488
    %1857 = vmatpush1.msra.mxu0 %v487
    %1858 = vmatprep.subr.mxu0 %v491
    %1859 = vmatpush1.msra.mxu0 %v490
    %1860 = vmatprep.subr.mxu0 %v494
    %1861 = vmatpush1.msra.mxu0 %v493
    %1862 = vmatprep.subr.mxu0 %v497
    %1863 = vmatpush1.msra.mxu0 %v496
    %1864 = vmatprep.subr.mxu0 %v500
    %1865 = vmatpush1.msra.mxu0 %v499
    %1866 = vmatprep.subr.mxu0 %v503
    %1867 = vmatpush1.msra.mxu0 %v502
    %1868 = vmatprep.subr.mxu0 %v506
    %1869 = vmatpush1.msra.mxu0 %v505
    %1870 = vmatprep.subr.mxu0 %v509
    %1871 = vmatpush1.msra.mxu0 %v508
    %1872 = vmatprep.subr.mxu0 %v512
    %1873 = vmatpush1.msra.mxu0 %v511
    %1874 = vmatprep.subr.mxu0 %v515
    %1875 = vmatpush1.msra.mxu0 %v514
    %1876 = vmatprep.subr.mxu0 %v518
    %1877 = vmatpush1.msra.mxu0 %v517
    %1878 = vmatprep.subr.mxu0 %v521
    %1879 = vmatpush1.msra.mxu0 %v520
    %1880 = vmatprep.subr.mxu0 %v524
    %1881 = vmatpush1.msra.mxu0 %v523
    %1882 = vmatprep.subr.mxu0 %v527
    %1883 = vmatpush1.msra.mxu0 %v526
    %1884 = vmatprep.subr.mxu0 %v530
    %1885 = vmatpush1.msra.mxu0 %v529
    %1886 = vmatprep.subr.mxu0 0.0
    %1887 = vmatpush1.msra.mxu0 0.0
    %1888 = vmatprep.subr.mxu0 0.0
    %1889 = vmatpush1.msra.mxu0 0.0
    %1890 = vmatprep.subr.mxu0 0.0
    %1891 = vmatpush1.msra.mxu0 0.0
    %1892 = vmatprep.subr.mxu0 0.0
    %1893 = vmatpush1.msra.mxu0 0.0
    %1894 = vmatprep.subr.mxu0 0.0
    %1895 = vmatpush1.msra.mxu0 0.0
    %1896 = vmatprep.subr.mxu0 0.0
    %1897 = vmatpush1.msra.mxu0 0.0
    %1898 = vmatprep.subr.mxu0 0.0
    %1899 = vmatpush1.msra.mxu0 0.0
    %1900 = vmatprep.subr.mxu0 0.0
    %1901 = vmatpush1.msra.mxu0 0.0
    %1902 = vmatprep.subr.mxu0 0.0
    %1903 = vmatpush1.msra.mxu0 0.0
    %1904 = vmatprep.subr.mxu0 0.0
    %1905 = vmatpush1.msra.mxu0 0.0
    %1906 = vmatprep.subr.mxu0 0.0
    %1907 = vmatpush1.msra.mxu0 0.0
    %1908 = vmatprep.subr.mxu0 0.0
    %1909 = vmatpush1.msra.mxu0 0.0
    %1910 = vmatprep.subr.mxu0 0.0
    %1911 = vmatpush1.msra.mxu0 0.0
    %1912 = vmatprep.subr.mxu0 0.0
    %1913 = vmatpush1.msra.mxu0 0.0
    %1914 = vmatprep.subr.mxu0 0.0
    %1915 = vmatpush1.msra.mxu0 0.0
    %1916 = vmatprep.subr.mxu0 0.0
    %1917 = vmatpush1.msra.mxu0 0.0
    %1918 = vmatprep.mubr.f32.mxu0 0.0
    %1919 = vmatmul.mubr.f32.gmra.mrb[0].mxu0 %v1844
    %v1920 = vpop.f32.mrb[0].mxu0
    %v1921 = vadd.f32 0.0, %v1920
    %v1922 = vpop.f32.mrb[0].mxu0
    %v1923 = vadd.f32 0.0, %v1922
    %1924 = vdwg.mxu0
    %1925 = vmatprep.subr.mxu0 0.0
    %1926 = vmatpush1.msra.mxu0 %v486
    %1927 = vmatprep.subr.mxu0 0.0
    %1928 = vmatpush1.msra.mxu0 %v489
    %1929 = vmatprep.subr.mxu0 0.0
    %1930 = vmatpush1.msra.mxu0 %v492
    %1931 = vmatprep.subr.mxu0 0.0
    %1932 = vmatpush1.msra.mxu0 %v495
    %1933 = vmatprep.subr.mxu0 0.0
    %1934 = vmatpush1.msra.mxu0 %v498
    %1935 = vmatprep.subr.mxu0 0.0
    %1936 = vmatpush1.msra.mxu0 %v501
    %1937 = vmatprep.subr.mxu0 0.0
    %1938 = vmatpush1.msra.mxu0 %v504
    %1939 = vmatprep.subr.mxu0 0.0
    %1940 = vmatpush1.msra.mxu0 %v507
    %1941 = vmatprep.subr.mxu0 0.0
    %1942 = vmatpush1.msra.mxu0 %v510
    %1943 = vmatprep.subr.mxu0 0.0
    %1944 = vmatpush1.msra.mxu0 %v513
    %1945 = vmatprep.subr.mxu0 0.0
    %1946 = vmatpush1.msra.mxu0 %v516
    %1947 = vmatprep.subr.mxu0 0.0
    %1948 = vmatpush1.msra.mxu0 %v519
    %1949 = vmatprep.subr.mxu0 0.0
    %1950 = vmatpush1.msra.mxu0 %v522
    %1951 = vmatprep.subr.mxu0 0.0
    %1952 = vmatpush1.msra.mxu0 %v525
    %1953 = vmatprep.subr.mxu0 0.0
    %1954 = vmatpush1.msra.mxu0 %v528
    %1955 = vmatprep.subr.mxu0 0.0
    %1956 = vmatpush1.msra.mxu0 %v531
    %1957 = vmatprep.subr.mxu0 0.0
    %1958 = vmatpush1.msra.mxu0 0.0
    %1959 = vmatprep.subr.mxu0 0.0
    %1960 = vmatpush1.msra.mxu0 0.0
    %1961 = vmatprep.subr.mxu0 0.0
    %1962 = vmatpush1.msra.mxu0 0.0
    %1963 = vmatprep.subr.mxu0 0.0
    %1964 = vmatpush1.msra.mxu0 0.0
    %1965 = vmatprep.subr.mxu0 0.0
    %1966 = vmatpush1.msra.mxu0 0.0
    %1967 = vmatprep.subr.mxu0 0.0
    %1968 = vmatpush1.msra.mxu0 0.0
    %1969 = vmatprep.subr.mxu0 0.0
    %1970 = vmatpush1.msra.mxu0 0.0
    %1971 = vmatprep.subr.mxu0 0.0
    %1972 = vmatpush1.msra.mxu0 0.0
    %1973 = vmatprep.subr.mxu0 0.0
    %1974 = vmatpush1.msra.mxu0 0.0
    %1975 = vmatprep.subr.mxu0 0.0
    %1976 = vmatpush1.msra.mxu0 0.0
    %1977 = vmatprep.subr.mxu0 0.0
    %1978 = vmatpush1.msra.mxu0 0.0
    %1979 = vmatprep.subr.mxu0 0.0
    %1980 = vmatpush1.msra.mxu0 0.0
    %1981 = vmatprep.subr.mxu0 0.0
    %1982 = vmatpush1.msra.mxu0 0.0
    %1983 = vmatprep.subr.mxu0 0.0
    %1984 = vmatpush1.msra.mxu0 0.0
    %1985 = vmatprep.subr.mxu0 0.0
    %1986 = vmatpush1.msra.mxu0 0.0
    %1987 = vmatprep.subr.mxu0 0.0
    %1988 = vmatpush1.msra.mxu0 0.0
    %1989 = vmatprep.mubr.f32.mxu0 0.0
    %1990 = vmatmul.mubr.f32.gmra.mrb[0].mxu0 %v1844
    %v1991 = vpop.f32.mrb[0].mxu0
    %v1992 = vadd.f32 0.0, %v1991
    %v1993 = vpop.f32.mrb[0].mxu0
    %1994 = vdwg.mxu0
    %v1995 = vadd.f32 %v1851, %v1921
    %v1996 = vmul.f32 %v1995, 0.5
    %v1997 = vtanh.pop %v1996
    %v1998 = vmul.f32 %v1997, 0.5
    %v1999 = vadd.f32 %v1998, 0.5
    %v2000 = vadd.f32 %v1852, %v1923
    %v2001 = vmul.f32 %v2000, 0.5
    %v2002 = vtanh.pop %v2001
    %v2003 = vmul.f32 %v2002, 0.5
    %v2004 = vadd.f32 %v2003, 0.5
    %v2005 = vadd.f32 %v1992, %v706
    %v2006 = vmul.f32 %v1999, %v2005
    %v2007 = vadd.f32 %v1853, %v2006
    %v2008 = vtanh.pop %v2007
    %v2009 = vsub.f32 1.0, %v2004
    %v2010 = vmul.f32 %v2009, %v2008
    %v2011 = vmul.f32 %v2004, %v1844
    %v2012 = vadd.f32 %v2010, %v2011
    %vm2013 = vmand %vm719, %vm733
    %vm2014 = vmand %vm728, %vm724
    %vm2015 = vmor %vm2013, %vm2014
    %v2016 = vsel %vm2015, %v2012, %v1844
    %2017 = vst [vmem:[#allocation4] sm:$0xff] %v2016
    %v2018 = vsel %vm2015, %v2012, 0.0
    %s2019 = scalar_lea.vmem [#allocation3], 56
    %2020 = vst [vmem:[%s2019] sm:$0xff] %v2018
    %v2021 = vld [vmem:[#allocation3] sm:$0xff]
    %v2022 = vld [vmem:[#allocation3 + $0x8] sm:$0xff]
    %v2023 = vld [vmem:[#allocation3 + $0x10] sm:$0xff]
    %v2024 = vld [vmem:[#allocation3 + $0x18] sm:$0xff]
    %v2025 = vld [vmem:[#allocation3 + $0x20] sm:$0xff]
    %v2026 = vld [vmem:[#allocation3 + $0x28] sm:$0xff]
    %v2027 = vld [vmem:[#allocation3 + $0x30] sm:$0xff]
    %v2028 = vld [vmem:[#allocation3 + $0x38] sm:$0xff]
    %v2029 = vadd.f32 %v2021, %v2022
    %v2030 = vadd.f32 %v2029, %v2023
    %v2031 = vadd.f32 %v2030, %v2024
    %v2032 = vadd.f32 %v2031, %v2025
    %v2033 = vadd.f32 %v2032, %v2026
    %v2034 = vadd.f32 %v2033, %v2027
    %v2035 = vadd.f32 %v2034, %v2028
    %2037 = vrot.lane.b32.xlu0 %v2035, 64
    %v2038 = vpop.permute.xlu0 %2037
    %v2040 = vadd.f32 %v2035, %v2038
    %v2041 = vmul.f32 %v109, 2.0
    %2043 = vset.pattern.permute.xlu0 0
    %2044 = vperm.xlu0 %2043, %v2041
    %v2045 = vpop.permute.xlu0 %2044
    %v2047 = vrcp.pop %v2045
    %v2048 = vmul.f32 %v2040, %v2047
    %vm2049 = vcmask 523264
    %2050 = vst.msk [vmem:[#allocation18] sm:$0xff] %vm2049, %v2048
    %v2051 = vld [vmem:[#allocation3] sm:$0xff]
    %v2052 = vld [vmem:[#allocation3 + $0x8] sm:$0xff]
    %v2053 = vld [vmem:[#allocation3 + $0x10] sm:$0xff]
    %v2054 = vld [vmem:[#allocation3 + $0x18] sm:$0xff]
    %v2055 = vld [vmem:[#allocation3 + $0x20] sm:$0xff]
    %v2056 = vld [vmem:[#allocation3 + $0x28] sm:$0xff]
    %v2057 = vld [vmem:[#allocation3 + $0x30] sm:$0xff]
    %v2058 = vld [vmem:[#allocation3 + $0x38] sm:$0xff]
    %v2059 = vld [vmem:[#allocation16] sm:$0xff]
    %v2060 = vld [vmem:[#allocation16 + $0x8] sm:$0xff]
    %v2061 = vld [vmem:[#allocation16 + $0x10] sm:$0xff]
    %v2062 = vld [vmem:[#allocation16 + $0x18] sm:$0xff]
    %v2063 = vld [vmem:[#allocation16 + $0x20] sm:$0xff]
    %v2064 = vld [vmem:[#allocation16 + $0x28] sm:$0xff]
    %v2065 = vld [vmem:[#allocation16 + $0x30] sm:$0xff]
    %v2066 = vld [vmem:[#allocation16 + $0x38] sm:$0xff]
    %v2067 = vld [vmem:[#allocation16 + $0x40] sm:$0xff]
    %v2068 = vld [vmem:[#allocation16 + $0x48] sm:$0xff]
    %v2069 = vld [vmem:[#allocation16 + $0x50] sm:$0xff]
    %v2070 = vld [vmem:[#allocation16 + $0x58] sm:$0xff]
    %v2071 = vld [vmem:[#allocation16 + $0x60] sm:$0xff]
    %v2072 = vld [vmem:[#allocation16 + $0x68] sm:$0xff]
    %v2073 = vld [vmem:[#allocation16 + $0x70] sm:$0xff]
    %v2074 = vld [vmem:[#allocation16 + $0x78] sm:$0xff]
    %v2075 = vld [vmem:[%s8] sm:$0x1]
    %v2077 = vlaneseq
    %v2078 = vshrl.u32 %v2077, 7
    %v2079 = vsub.s32 0, %v2078
    %v2080 = vrot.slane %v2075, %v2079
    %2082 = vmatprep.subr.mxu0 0.0
    %2083 = vmatpush1.msra.mxu0 %v2059
    %2084 = vmatprep.subr.mxu0 0.0
    %2085 = vmatpush1.msra.mxu0 %v2060
    %2086 = vmatprep.subr.mxu0 0.0
    %2087 = vmatpush1.msra.mxu0 %v2061
    %2088 = vmatprep.subr.mxu0 0.0
    %2089 = vmatpush1.msra.mxu0 %v2062
    %2090 = vmatprep.subr.mxu0 0.0
    %2091 = vmatpush1.msra.mxu0 %v2063
    %2092 = vmatprep.subr.mxu0 0.0
    %2093 = vmatpush1.msra.mxu0 %v2064
    %2094 = vmatprep.subr.mxu0 0.0
    %2095 = vmatpush1.msra.mxu0 %v2065
    %2096 = vmatprep.subr.mxu0 0.0
    %2097 = vmatpush1.msra.mxu0 %v2066
    %2098 = vmatprep.subr.mxu0 0.0
    %2099 = vmatpush1.msra.mxu0 %v2067
    %2100 = vmatprep.subr.mxu0 0.0
    %2101 = vmatpush1.msra.mxu0 %v2068
    %2102 = vmatprep.subr.mxu0 0.0
    %2103 = vmatpush1.msra.mxu0 %v2069
    %2104 = vmatprep.subr.mxu0 0.0
    %2105 = vmatpush1.msra.mxu0 %v2070
    %2106 = vmatprep.subr.mxu0 0.0
    %2107 = vmatpush1.msra.mxu0 %v2071
    %2108 = vmatprep.subr.mxu0 0.0
    %2109 = vmatpush1.msra.mxu0 %v2072
    %2110 = vmatprep.subr.mxu0 0.0
    %2111 = vmatpush1.msra.mxu0 %v2073
    %2112 = vmatprep.subr.mxu0 0.0
    %2113 = vmatpush1.msra.mxu0 %v2074
    %2114 = vmatprep.subr.mxu0 0.0
    %2115 = vmatpush1.msra.mxu0 0.0
    %2116 = vmatprep.subr.mxu0 0.0
    %2117 = vmatpush1.msra.mxu0 0.0
    %2118 = vmatprep.subr.mxu0 0.0
    %2119 = vmatpush1.msra.mxu0 0.0
    %2120 = vmatprep.subr.mxu0 0.0
    %2121 = vmatpush1.msra.mxu0 0.0
    %2122 = vmatprep.subr.mxu0 0.0
    %2123 = vmatpush1.msra.mxu0 0.0
    %2124 = vmatprep.subr.mxu0 0.0
    %2125 = vmatpush1.msra.mxu0 0.0
    %2126 = vmatprep.subr.mxu0 0.0
    %2127 = vmatpush1.msra.mxu0 0.0
    %2128 = vmatprep.subr.mxu0 0.0
    %2129 = vmatpush1.msra.mxu0 0.0
    %2130 = vmatprep.subr.mxu0 0.0
    %2131 = vmatpush1.msra.mxu0 0.0
    %2132 = vmatprep.subr.mxu0 0.0
    %2133 = vmatpush1.msra.mxu0 0.0
    %2134 = vmatprep.subr.mxu0 0.0
    %2135 = vmatpush1.msra.mxu0 0.0
    %2136 = vmatprep.subr.mxu0 0.0
    %2137 = vmatpush1.msra.mxu0 0.0
    %2138 = vmatprep.subr.mxu0 0.0
    %2139 = vmatpush1.msra.mxu0 0.0
    %2140 = vmatprep.subr.mxu0 0.0
    %2141 = vmatpush1.msra.mxu0 0.0
    %2142 = vmatprep.subr.mxu0 0.0
    %2143 = vmatpush1.msra.mxu0 0.0
    %2144 = vmatprep.subr.mxu0 0.0
    %2145 = vmatpush1.msra.mxu0 0.0
    %2146 = vmatprep.mubr.f32.mxu0 0.0
    %2147 = vmatmul.mubr.f32.gmra.mrb[0].mxu0 %v2051
    %v2148 = vpop.f32.mrb[0].mxu0
    %v2149 = vadd.f32 %v2080, %v2148
    %v2150 = vpop.f32.mrb[0].mxu0
    %2151 = vmatprep.mubr.f32.mxu0 0.0
    %2152 = vmatmul.mubr.f32.gmra.mrb[0].mxu0 %v2052
    %v2153 = vpop.f32.mrb[0].mxu0
    %v2154 = vadd.f32 %v2080, %v2153
    %v2155 = vpop.f32.mrb[0].mxu0
    %2156 = vmatprep.mubr.f32.mxu0 0.0
    %2157 = vmatmul.mubr.f32.gmra.mrb[0].mxu0 %v2053
    %v2158 = vpop.f32.mrb[0].mxu0
    %v2159 = vadd.f32 %v2080, %v2158
    %v2160 = vpop.f32.mrb[0].mxu0
    %2161 = vmatprep.mubr.f32.mxu0 0.0
    %2162 = vmatmul.mubr.f32.gmra.mrb[0].mxu0 %v2054
    %v2163 = vpop.f32.mrb[0].mxu0
    %v2164 = vadd.f32 %v2080, %v2163
    %v2165 = vpop.f32.mrb[0].mxu0
    %2166 = vmatprep.mubr.f32.mxu0 0.0
    %2167 = vmatmul.mubr.f32.gmra.mrb[0].mxu0 %v2055
    %v2168 = vpop.f32.mrb[0].mxu0
    %v2169 = vadd.f32 %v2080, %v2168
    %v2170 = vpop.f32.mrb[0].mxu0
    %2171 = vmatprep.mubr.f32.mxu0 0.0
    %2172 = vmatmul.mubr.f32.gmra.mrb[0].mxu0 %v2056
    %v2173 = vpop.f32.mrb[0].mxu0
    %v2174 = vadd.f32 %v2080, %v2173
    %v2175 = vpop.f32.mrb[0].mxu0
    %2176 = vmatprep.mubr.f32.mxu0 0.0
    %2177 = vmatmul.mubr.f32.gmra.mrb[0].mxu0 %v2057
    %v2178 = vpop.f32.mrb[0].mxu0
    %v2179 = vadd.f32 %v2080, %v2178
    %v2180 = vpop.f32.mrb[0].mxu0
    %2181 = vmatprep.mubr.f32.mxu0 0.0
    %2182 = vmatmul.mubr.f32.gmra.mrb[0].mxu0 %v2058
    %v2183 = vpop.f32.mrb[0].mxu0
    %v2184 = vadd.f32 %v2080, %v2183
    %v2185 = vpop.f32.mrb[0].mxu0
    %2186 = vdwg.mxu0
    %2187 = vst.msk [vmem:[#allocation5] sm:$0xff] %vm2049, %v2149
    %2188 = vst.msk [vmem:[#allocation5 + $0x8] sm:$0xff] %vm2049, %v2154
    %2189 = vst.msk [vmem:[#allocation5 + $0x10] sm:$0xff] %vm2049, %v2159
    %2190 = vst.msk [vmem:[#allocation5 + $0x18] sm:$0xff] %vm2049, %v2164
    %2191 = vst.msk [vmem:[#allocation5 + $0x20] sm:$0xff] %vm2049, %v2169
    %2192 = vst.msk [vmem:[#allocation5 + $0x28] sm:$0xff] %vm2049, %v2174
    %2193 = vst.msk [vmem:[#allocation5 + $0x30] sm:$0xff] %vm2049, %v2179
    %2194 = vst.msk [vmem:[#allocation5 + $0x38] sm:$0xff] %vm2049, %v2184
    %2203 = vrot.lane.b32.xlu0 %v2149, 64
    %v2204 = vpop.permute.xlu0 %2203
    %2205 = vrot.lane.b32.xlu0 %v2154, 64
    %v2206 = vpop.permute.xlu0 %2205
    %2207 = vrot.lane.b32.xlu0 %v2159, 64
    %v2208 = vpop.permute.xlu0 %2207
    %2209 = vrot.lane.b32.xlu0 %v2164, 64
    %v2210 = vpop.permute.xlu0 %2209
    %2211 = vrot.lane.b32.xlu0 %v2169, 64
    %v2212 = vpop.permute.xlu0 %2211
    %2213 = vrot.lane.b32.xlu0 %v2174, 64
    %v2214 = vpop.permute.xlu0 %2213
    %2215 = vrot.lane.b32.xlu0 %v2179, 64
    %v2216 = vpop.permute.xlu0 %2215
    %2217 = vrot.lane.b32.xlu0 %v2184, 64
    %v2218 = vpop.permute.xlu0 %2217
    %2227 = vst.msk [vmem:[#allocation6] sm:$0xff] %vm2049, %v2204
    %2228 = vst.msk [vmem:[#allocation6 + $0x8] sm:$0xff] %vm2049, %v2206
    %2229 = vst.msk [vmem:[#allocation6 + $0x10] sm:$0xff] %vm2049, %v2208
    %2230 = vst.msk [vmem:[#allocation6 + $0x18] sm:$0xff] %vm2049, %v2210
    %2231 = vst.msk [vmem:[#allocation6 + $0x20] sm:$0xff] %vm2049, %v2212
    %2232 = vst.msk [vmem:[#allocation6 + $0x28] sm:$0xff] %vm2049, %v2214
    %2233 = vst.msk [vmem:[#allocation6 + $0x30] sm:$0xff] %vm2049, %v2216
    %2234 = vst.msk [vmem:[#allocation6 + $0x38] sm:$0xff] %vm2049, %v2218
    %v2235 = vld [vmem:[%s9] sm:$0xff]
    %v2236 = vld [vmem:[%s9 + $0x8] sm:$0xff]
    %v2237 = vld [vmem:[%s9 + $0x10] sm:$0xff]
    %v2238 = vld [vmem:[%s9 + $0x18] sm:$0xff]
    %2239 = vst.msk [vmem:[#allocation7] sm:$0xff] %vm217, 0.0
    %v2240 = vld [vmem:[#allocation7] sm:$0xff]
    %v2241 = vld [vmem:[#allocation5] sm:$0xff]
    %s2242 = scalar_lea.vmem [#allocation6], 56
    %v2243 = vld [vmem:[%s2242] sm:$0xff]
    %v2244 = vadd.f32 %v2241, %v2243
    %v2246 = vsel %vm217, %v2240, 0
    %2248 = vmatprep.subr.mxu0 0.0
    %2249 = vmatpush1.msra.mxu0 %v2235
    %2250 = vmatprep.subr.mxu0 0.0
    %2251 = vmatpush1.msra.mxu0 %v2236
    %2252 = vmatprep.subr.mxu0 0.0
    %2253 = vmatpush1.msra.mxu0 %v2237
    %2254 = vmatprep.subr.mxu0 0.0
    %2255 = vmatpush1.msra.mxu0 %v2238
    %2256 = vmatprep.subr.mxu0 0.0
    %2257 = vmatpush1.msra.mxu0 0.0
    %2258 = vmatprep.subr.mxu0 0.0
    %2259 = vmatpush1.msra.mxu0 0.0
    %2260 = vmatprep.subr.mxu0 0.0
    %2261 = vmatpush1.msra.mxu0 0.0
    %2262 = vmatprep.subr.mxu0 0.0
    %2263 = vmatpush1.msra.mxu0 0.0
    %2264 = vmatprep.subr.mxu0 0.0
    %2265 = vmatpush1.msra.mxu0 0.0
    %2266 = vmatprep.subr.mxu0 0.0
    %2267 = vmatpush1.msra.mxu0 0.0
    %2268 = vmatprep.subr.mxu0 0.0
    %2269 = vmatpush1.msra.mxu0 0.0
    %2270 = vmatprep.subr.mxu0 0.0
    %2271 = vmatpush1.msra.mxu0 0.0
    %2272 = vmatprep.subr.mxu0 0.0
    %2273 = vmatpush1.msra.mxu0 0.0
    %2274 = vmatprep.subr.mxu0 0.0
    %2275 = vmatpush1.msra.mxu0 0.0
    %2276 = vmatprep.subr.mxu0 0.0
    %2277 = vmatpush1.msra.mxu0 0.0
    %2278 = vmatprep.subr.mxu0 0.0
    %2279 = vmatpush1.msra.mxu0 0.0
    %2280 = vmatprep.subr.mxu0 0.0
    %2281 = vmatpush1.msra.mxu0 0.0
    %2282 = vmatprep.subr.mxu0 0.0
    %2283 = vmatpush1.msra.mxu0 0.0
    %2284 = vmatprep.subr.mxu0 0.0
    %2285 = vmatpush1.msra.mxu0 0.0
    %2286 = vmatprep.subr.mxu0 0.0
    %2287 = vmatpush1.msra.mxu0 0.0
    %2288 = vmatprep.subr.mxu0 0.0
    %2289 = vmatpush1.msra.mxu0 0.0
    %2290 = vmatprep.subr.mxu0 0.0
    %2291 = vmatpush1.msra.mxu0 0.0
    %2292 = vmatprep.subr.mxu0 0.0
    %2293 = vmatpush1.msra.mxu0 0.0
    %2294 = vmatprep.subr.mxu0 0.0
    %2295 = vmatpush1.msra.mxu0 0.0
    %2296 = vmatprep.subr.mxu0 0.0
    %2297 = vmatpush1.msra.mxu0 0.0
    %2298 = vmatprep.subr.mxu0 0.0
    %2299 = vmatpush1.msra.mxu0 0.0
    %2300 = vmatprep.subr.mxu0 0.0
    %2301 = vmatpush1.msra.mxu0 0.0
    %2302 = vmatprep.subr.mxu0 0.0
    %2303 = vmatpush1.msra.mxu0 0.0
    %2304 = vmatprep.subr.mxu0 0.0
    %2305 = vmatpush1.msra.mxu0 0.0
    %2306 = vmatprep.subr.mxu0 0.0
    %2307 = vmatpush1.msra.mxu0 0.0
    %2308 = vmatprep.subr.mxu0 0.0
    %2309 = vmatpush1.msra.mxu0 0.0
    %2310 = vmatprep.subr.mxu0 0.0
    %2311 = vmatpush1.msra.mxu0 0.0
    %2312 = vmatprep.mubr.f32.mxu0 0.0
    %2313 = vmatmul.mubr.f32.gmra.mrb[0].mxu0 %v2246
    %v2314 = vpop.f32.mrb[0].mxu0
    %v2315 = vadd.f32 0.0, %v2314
    %v2316 = vpop.f32.mrb[0].mxu0
    %2317 = vdwg.mxu0
    %v2318 = vadd.f32 %v2244, %v2315
    %v2319 = vmul.f32 %v2318, 0.5
    %v2320 = vmul.f32 %v2319, 1.442695
    %v2321 = vpow.pop %v2320
    %v2322 = vld [vmem:[#allocation11] sm:$0xff]
    %2324 = vrot.lane.b32.xlu0 %v2321, 96
    %v2325 = vpop.permute.xlu0 %2324
    %v2327 = vmul.f32 %v2322, %v2325
    %v2328 = vadd.f32 %v2318, %v2327
    %p2329 = scmp.gt.s32.totalorder %s135, 0
    %2331 = vrot.lane.b32.xlu0 %v2328, 64
    %v2332 = vpop.permute.xlu0 %2331
    %2334 = vrot.lane.b32.xlu0 %v2321, 64
    %v2335 = vpop.permute.xlu0 %2334
    %v2337 = vsel %vm2049, %v2318, %v2332
    %vm2338 = vcmask 785408
    %v2339 = vsel %vm2338, %v2337, %v2335
    %s2340 = scalar_select %p2329, 1, 0
    %v2341 = vstv %s2340
    %vm2342 = vcmp.eq.s32.totalorder %v2341, 1
    %v2343 = vsel %vm2342, %v2339, 0.0
    %2344 = vst [vmem:[#allocation17] sm:$0xff] %v2343
    %2345 = vst.msk [vmem:[#allocation7] sm:$0xff] %vm217, %v2328
    %v2346 = vld [vmem:[#allocation7] sm:$0xff]
    %s2347 = scalar_lea.vmem [#allocation5], 8
    %v2348 = vld [vmem:[%s2347] sm:$0xff]
    %s2349 = scalar_lea.vmem [#allocation6], 48
    %v2350 = vld [vmem:[%s2349] sm:$0xff]
    %v2351 = vadd.f32 %v2348, %v2350
    %v2353 = vsel %vm217, %v2346, 0
    %2355 = vmatprep.subr.mxu0 0.0
    %2356 = vmatpush1.msra.mxu0 %v2235
    %2357 = vmatprep.subr.mxu0 0.0
    %2358 = vmatpush1.msra.mxu0 %v2236
    %2359 = vmatprep.subr.mxu0 0.0
    %2360 = vmatpush1.msra.mxu0 %v2237
    %2361 = vmatprep.subr.mxu0 0.0
    %2362 = vmatpush1.msra.mxu0 %v2238
    %2363 = vmatprep.subr.mxu0 0.0
    %2364 = vmatpush1.msra.mxu0 0.0
    %2365 = vmatprep.subr.mxu0 0.0
    %2366 = vmatpush1.msra.mxu0 0.0
    %2367 = vmatprep.subr.mxu0 0.0
    %2368 = vmatpush1.msra.mxu0 0.0
    %2369 = vmatprep.subr.mxu0 0.0
    %2370 = vmatpush1.msra.mxu0 0.0
    %2371 = vmatprep.subr.mxu0 0.0
    %2372 = vmatpush1.msra.mxu0 0.0
    %2373 = vmatprep.subr.mxu0 0.0
    %2374 = vmatpush1.msra.mxu0 0.0
    %2375 = vmatprep.subr.mxu0 0.0
    %2376 = vmatpush1.msra.mxu0 0.0
    %2377 = vmatprep.subr.mxu0 0.0
    %2378 = vmatpush1.msra.mxu0 0.0
    %2379 = vmatprep.subr.mxu0 0.0
    %2380 = vmatpush1.msra.mxu0 0.0
    %2381 = vmatprep.subr.mxu0 0.0
    %2382 = vmatpush1.msra.mxu0 0.0
    %2383 = vmatprep.subr.mxu0 0.0
    %2384 = vmatpush1.msra.mxu0 0.0
    %2385 = vmatprep.subr.mxu0 0.0
    %2386 = vmatpush1.msra.mxu0 0.0
    %2387 = vmatprep.subr.mxu0 0.0
    %2388 = vmatpush1.msra.mxu0 0.0
    %2389 = vmatprep.subr.mxu0 0.0
    %2390 = vmatpush1.msra.mxu0 0.0
    %2391 = vmatprep.subr.mxu0 0.0
    %2392 = vmatpush1.msra.mxu0 0.0
    %2393 = vmatprep.subr.mxu0 0.0
    %2394 = vmatpush1.msra.mxu0 0.0
    %2395 = vmatprep.subr.mxu0 0.0
    %2396 = vmatpush1.msra.mxu0 0.0
    %2397 = vmatprep.subr.mxu0 0.0
    %2398 = vmatpush1.msra.mxu0 0.0
    %2399 = vmatprep.subr.mxu0 0.0
    %2400 = vmatpush1.msra.mxu0 0.0
    %2401 = vmatprep.subr.mxu0 0.0
    %2402 = vmatpush1.msra.mxu0 0.0
    %2403 = vmatprep.subr.mxu0 0.0
    %2404 = vmatpush1.msra.mxu0 0.0
    %2405 = vmatprep.subr.mxu0 0.0
    %2406 = vmatpush1.msra.mxu0 0.0
    %2407 = vmatprep.subr.mxu0 0.0
    %2408 = vmatpush1.msra.mxu0 0.0
    %2409 = vmatprep.subr.mxu0 0.0
    %2410 = vmatpush1.msra.mxu0 0.0
    %2411 = vmatprep.subr.mxu0 0.0
    %2412 = vmatpush1.msra.mxu0 0.0
    %2413 = vmatprep.subr.mxu0 0.0
    %2414 = vmatpush1.msra.mxu0 0.0
    %2415 = vmatprep.subr.mxu0 0.0
    %2416 = vmatpush1.msra.mxu0 0.0
    %2417 = vmatprep.subr.mxu0 0.0
    %2418 = vmatpush1.msra.mxu0 0.0
    %2419 = vmatprep.mubr.f32.mxu0 0.0
    %2420 = vmatmul.mubr.f32.gmra.mrb[0].mxu0 %v2353
    %v2421 = vpop.f32.mrb[0].mxu0
    %v2422 = vadd.f32 0.0, %v2421
    %v2423 = vpop.f32.mrb[0].mxu0
    %2424 = vdwg.mxu0
    %v2425 = vadd.f32 %v2351, %v2422
    %v2426 = vmul.f32 %v2425, 0.5
    %v2427 = vmul.f32 %v2426, 1.442695
    %v2428 = vpow.pop %v2427
    %s2429 = scalar_lea.vmem [#allocation11], 8
    %v2430 = vld [vmem:[%s2429] sm:$0xff]
    %2432 = vrot.lane.b32.xlu0 %v2428, 96
    %v2433 = vpop.permute.xlu0 %2432
    %v2435 = vmul.f32 %v2430, %v2433
    %v2436 = vadd.f32 %v2425, %v2435
    %p2437 = scmp.gt.s32.totalorder %s135, 1
    %2439 = vrot.lane.b32.xlu0 %v2436, 64
    %v2440 = vpop.permute.xlu0 %2439
    %2442 = vrot.lane.b32.xlu0 %v2428, 64
    %v2443 = vpop.permute.xlu0 %2442
    %v2445 = vsel %vm2049, %v2425, %v2440
    %v2446 = vsel %vm2338, %v2445, %v2443
    %s2447 = scalar_select %p2437, 1, 0
    %v2448 = vstv %s2447
    %vm2449 = vcmp.eq.s32.totalorder %v2448, 1
    %v2450 = vsel %vm2449, %v2446, 0.0
    %s2451 = scalar_lea.vmem [#allocation17], 8
    %2452 = vst [vmem:[%s2451] sm:$0xff] %v2450
    %2453 = vst.msk [vmem:[#allocation7] sm:$0xff] %vm217, %v2436
    %v2454 = vld [vmem:[#allocation7] sm:$0xff]
    %s2455 = scalar_lea.vmem [#allocation5], 16
    %v2456 = vld [vmem:[%s2455] sm:$0xff]
    %s2457 = scalar_lea.vmem [#allocation6], 40
    %v2458 = vld [vmem:[%s2457] sm:$0xff]
    %v2459 = vadd.f32 %v2456, %v2458
    %v2461 = vsel %vm217, %v2454, 0
    %2463 = vmatprep.subr.mxu0 0.0
    %2464 = vmatpush1.msra.mxu0 %v2235
    %2465 = vmatprep.subr.mxu0 0.0
    %2466 = vmatpush1.msra.mxu0 %v2236
    %2467 = vmatprep.subr.mxu0 0.0
    %2468 = vmatpush1.msra.mxu0 %v2237
    %2469 = vmatprep.subr.mxu0 0.0
    %2470 = vmatpush1.msra.mxu0 %v2238
    %2471 = vmatprep.subr.mxu0 0.0
    %2472 = vmatpush1.msra.mxu0 0.0
    %2473 = vmatprep.subr.mxu0 0.0
    %2474 = vmatpush1.msra.mxu0 0.0
    %2475 = vmatprep.subr.mxu0 0.0
    %2476 = vmatpush1.msra.mxu0 0.0
    %2477 = vmatprep.subr.mxu0 0.0
    %2478 = vmatpush1.msra.mxu0 0.0
    %2479 = vmatprep.subr.mxu0 0.0
    %2480 = vmatpush1.msra.mxu0 0.0
    %2481 = vmatprep.subr.mxu0 0.0
    %2482 = vmatpush1.msra.mxu0 0.0
    %2483 = vmatprep.subr.mxu0 0.0
    %2484 = vmatpush1.msra.mxu0 0.0
    %2485 = vmatprep.subr.mxu0 0.0
    %2486 = vmatpush1.msra.mxu0 0.0
    %2487 = vmatprep.subr.mxu0 0.0
    %2488 = vmatpush1.msra.mxu0 0.0
    %2489 = vmatprep.subr.mxu0 0.0
    %2490 = vmatpush1.msra.mxu0 0.0
    %2491 = vmatprep.subr.mxu0 0.0
    %2492 = vmatpush1.msra.mxu0 0.0
    %2493 = vmatprep.subr.mxu0 0.0
    %2494 = vmatpush1.msra.mxu0 0.0
    %2495 = vmatprep.subr.mxu0 0.0
    %2496 = vmatpush1.msra.mxu0 0.0
    %2497 = vmatprep.subr.mxu0 0.0
    %2498 = vmatpush1.msra.mxu0 0.0
    %2499 = vmatprep.subr.mxu0 0.0
    %2500 = vmatpush1.msra.mxu0 0.0
    %2501 = vmatprep.subr.mxu0 0.0
    %2502 = vmatpush1.msra.mxu0 0.0
    %2503 = vmatprep.subr.mxu0 0.0
    %2504 = vmatpush1.msra.mxu0 0.0
    %2505 = vmatprep.subr.mxu0 0.0
    %2506 = vmatpush1.msra.mxu0 0.0
    %2507 = vmatprep.subr.mxu0 0.0
    %2508 = vmatpush1.msra.mxu0 0.0
    %2509 = vmatprep.subr.mxu0 0.0
    %2510 = vmatpush1.msra.mxu0 0.0
    %2511 = vmatprep.subr.mxu0 0.0
    %2512 = vmatpush1.msra.mxu0 0.0
    %2513 = vmatprep.subr.mxu0 0.0
    %2514 = vmatpush1.msra.mxu0 0.0
    %2515 = vmatprep.subr.mxu0 0.0
    %2516 = vmatpush1.msra.mxu0 0.0
    %2517 = vmatprep.subr.mxu0 0.0
    %2518 = vmatpush1.msra.mxu0 0.0
    %2519 = vmatprep.subr.mxu0 0.0
    %2520 = vmatpush1.msra.mxu0 0.0
    %2521 = vmatprep.subr.mxu0 0.0
    %2522 = vmatpush1.msra.mxu0 0.0
    %2523 = vmatprep.subr.mxu0 0.0
    %2524 = vmatpush1.msra.mxu0 0.0
    %2525 = vmatprep.subr.mxu0 0.0
    %2526 = vmatpush1.msra.mxu0 0.0
    %2527 = vmatprep.mubr.f32.mxu0 0.0
    %2528 = vmatmul.mubr.f32.gmra.mrb[0].mxu0 %v2461
    %v2529 = vpop.f32.mrb[0].mxu0
    %v2530 = vadd.f32 0.0, %v2529
    %v2531 = vpop.f32.mrb[0].mxu0
    %2532 = vdwg.mxu0
    %v2533 = vadd.f32 %v2459, %v2530
    %v2534 = vmul.f32 %v2533, 0.5
    %v2535 = vmul.f32 %v2534, 1.442695
    %v2536 = vpow.pop %v2535
    %s2537 = scalar_lea.vmem [#allocation11], 16
    %v2538 = vld [vmem:[%s2537] sm:$0xff]
    %2540 = vrot.lane.b32.xlu0 %v2536, 96
    %v2541 = vpop.permute.xlu0 %2540
    %v2543 = vmul.f32 %v2538, %v2541
    %v2544 = vadd.f32 %v2533, %v2543
    %p2545 = scmp.gt.s32.totalorder %s135, 2
    %2547 = vrot.lane.b32.xlu0 %v2544, 64
    %v2548 = vpop.permute.xlu0 %2547
    %2550 = vrot.lane.b32.xlu0 %v2536, 64
    %v2551 = vpop.permute.xlu0 %2550
    %v2553 = vsel %vm2049, %v2533, %v2548
    %v2554 = vsel %vm2338, %v2553, %v2551
    %s2555 = scalar_select %p2545, 1, 0
    %v2556 = vstv %s2555
    %vm2557 = vcmp.eq.s32.totalorder %v2556, 1
    %v2558 = vsel %vm2557, %v2554, 0.0
    %s2559 = scalar_lea.vmem [#allocation17], 16
    %2560 = vst [vmem:[%s2559] sm:$0xff] %v2558
    %2561 = vst.msk [vmem:[#allocation7] sm:$0xff] %vm217, %v2544
    %v2562 = vld [vmem:[#allocation7] sm:$0xff]
    %s2563 = scalar_lea.vmem [#allocation5], 24
    %v2564 = vld [vmem:[%s2563] sm:$0xff]
    %s2565 = scalar_lea.vmem [#allocation6], 32
    %v2566 = vld [vmem:[%s2565] sm:$0xff]
    %v2567 = vadd.f32 %v2564, %v2566
    %v2569 = vsel %vm217, %v2562, 0
    %2571 = vmatprep.subr.mxu0 0.0
    %2572 = vmatpush1.msra.mxu0 %v2235
    %2573 = vmatprep.subr.mxu0 0.0
    %2574 = vmatpush1.msra.mxu0 %v2236
    %2575 = vmatprep.subr.mxu0 0.0
    %2576 = vmatpush1.msra.mxu0 %v2237
    %2577 = vmatprep.subr.mxu0 0.0
    %2578 = vmatpush1.msra.mxu0 %v2238
    %2579 = vmatprep.subr.mxu0 0.0
    %2580 = vmatpush1.msra.mxu0 0.0
    %2581 = vmatprep.subr.mxu0 0.0
    %2582 = vmatpush1.msra.mxu0 0.0
    %2583 = vmatprep.subr.mxu0 0.0
    %2584 = vmatpush1.msra.mxu0 0.0
    %2585 = vmatprep.subr.mxu0 0.0
    %2586 = vmatpush1.msra.mxu0 0.0
    %2587 = vmatprep.subr.mxu0 0.0
    %2588 = vmatpush1.msra.mxu0 0.0
    %2589 = vmatprep.subr.mxu0 0.0
    %2590 = vmatpush1.msra.mxu0 0.0
    %2591 = vmatprep.subr.mxu0 0.0
    %2592 = vmatpush1.msra.mxu0 0.0
    %2593 = vmatprep.subr.mxu0 0.0
    %2594 = vmatpush1.msra.mxu0 0.0
    %2595 = vmatprep.subr.mxu0 0.0
    %2596 = vmatpush1.msra.mxu0 0.0
    %2597 = vmatprep.subr.mxu0 0.0
    %2598 = vmatpush1.msra.mxu0 0.0
    %2599 = vmatprep.subr.mxu0 0.0
    %2600 = vmatpush1.msra.mxu0 0.0
    %2601 = vmatprep.subr.mxu0 0.0
    %2602 = vmatpush1.msra.mxu0 0.0
    %2603 = vmatprep.subr.mxu0 0.0
    %2604 = vmatpush1.msra.mxu0 0.0
    %2605 = vmatprep.subr.mxu0 0.0
    %2606 = vmatpush1.msra.mxu0 0.0
    %2607 = vmatprep.subr.mxu0 0.0
    %2608 = vmatpush1.msra.mxu0 0.0
    %2609 = vmatprep.subr.mxu0 0.0
    %2610 = vmatpush1.msra.mxu0 0.0
    %2611 = vmatprep.subr.mxu0 0.0
    %2612 = vmatpush1.msra.mxu0 0.0
    %2613 = vmatprep.subr.mxu0 0.0
    %2614 = vmatpush1.msra.mxu0 0.0
    %2615 = vmatprep.subr.mxu0 0.0
    %2616 = vmatpush1.msra.mxu0 0.0
    %2617 = vmatprep.subr.mxu0 0.0
    %2618 = vmatpush1.msra.mxu0 0.0
    %2619 = vmatprep.subr.mxu0 0.0
    %2620 = vmatpush1.msra.mxu0 0.0
    %2621 = vmatprep.subr.mxu0 0.0
    %2622 = vmatpush1.msra.mxu0 0.0
    %2623 = vmatprep.subr.mxu0 0.0
    %2624 = vmatpush1.msra.mxu0 0.0
    %2625 = vmatprep.subr.mxu0 0.0
    %2626 = vmatpush1.msra.mxu0 0.0
    %2627 = vmatprep.subr.mxu0 0.0
    %2628 = vmatpush1.msra.mxu0 0.0
    %2629 = vmatprep.subr.mxu0 0.0
    %2630 = vmatpush1.msra.mxu0 0.0
    %2631 = vmatprep.subr.mxu0 0.0
    %2632 = vmatpush1.msra.mxu0 0.0
    %2633 = vmatprep.subr.mxu0 0.0
    %2634 = vmatpush1.msra.mxu0 0.0
    %2635 = vmatprep.mubr.f32.mxu0 0.0
    %2636 = vmatmul.mubr.f32.gmra.mrb[0].mxu0 %v2569
    %v2637 = vpop.f32.mrb[0].mxu0
    %v2638 = vadd.f32 0.0, %v2637
    %v2639 = vpop.f32.mrb[0].mxu0
    %2640 = vdwg.mxu0
    %v2641 = vadd.f32 %v2567, %v2638
    %v2642 = vmul.f32 %v2641, 0.5
    %v2643 = vmul.f32 %v2642, 1.442695
    %v2644 = vpow.pop %v2643
    %s2645 = scalar_lea.vmem [#allocation11], 24
    %v2646 = vld [vmem:[%s2645] sm:$0xff]
    %2648 = vrot.lane.b32.xlu0 %v2644, 96
    %v2649 = vpop.permute.xlu0 %2648
    %v2651 = vmul.f32 %v2646, %v2649
    %v2652 = vadd.f32 %v2641, %v2651
    %p2653 = scmp.gt.s32.totalorder %s135, 3
    %2655 = vrot.lane.b32.xlu0 %v2652, 64
    %v2656 = vpop.permute.xlu0 %2655
    %2658 = vrot.lane.b32.xlu0 %v2644, 64
    %v2659 = vpop.permute.xlu0 %2658
    %v2661 = vsel %vm2049, %v2641, %v2656
    %v2662 = vsel %vm2338, %v2661, %v2659
    %s2663 = scalar_select %p2653, 1, 0
    %v2664 = vstv %s2663
    %vm2665 = vcmp.eq.s32.totalorder %v2664, 1
    %v2666 = vsel %vm2665, %v2662, 0.0
    %s2667 = scalar_lea.vmem [#allocation17], 24
    %2668 = vst [vmem:[%s2667] sm:$0xff] %v2666
    %2669 = vst.msk [vmem:[#allocation7] sm:$0xff] %vm217, %v2652
    %v2670 = vld [vmem:[#allocation7] sm:$0xff]
    %s2671 = scalar_lea.vmem [#allocation5], 32
    %v2672 = vld [vmem:[%s2671] sm:$0xff]
    %s2673 = scalar_lea.vmem [#allocation6], 24
    %v2674 = vld [vmem:[%s2673] sm:$0xff]
    %v2675 = vadd.f32 %v2672, %v2674
    %v2677 = vsel %vm217, %v2670, 0
    %2679 = vmatprep.subr.mxu0 0.0
    %2680 = vmatpush1.msra.mxu0 %v2235
    %2681 = vmatprep.subr.mxu0 0.0
    %2682 = vmatpush1.msra.mxu0 %v2236
    %2683 = vmatprep.subr.mxu0 0.0
    %2684 = vmatpush1.msra.mxu0 %v2237
    %2685 = vmatprep.subr.mxu0 0.0
    %2686 = vmatpush1.msra.mxu0 %v2238
    %2687 = vmatprep.subr.mxu0 0.0
    %2688 = vmatpush1.msra.mxu0 0.0
    %2689 = vmatprep.subr.mxu0 0.0
    %2690 = vmatpush1.msra.mxu0 0.0
    %2691 = vmatprep.subr.mxu0 0.0
    %2692 = vmatpush1.msra.mxu0 0.0
    %2693 = vmatprep.subr.mxu0 0.0
    %2694 = vmatpush1.msra.mxu0 0.0
    %2695 = vmatprep.subr.mxu0 0.0
    %2696 = vmatpush1.msra.mxu0 0.0
    %2697 = vmatprep.subr.mxu0 0.0
    %2698 = vmatpush1.msra.mxu0 0.0
    %2699 = vmatprep.subr.mxu0 0.0
    %2700 = vmatpush1.msra.mxu0 0.0
    %2701 = vmatprep.subr.mxu0 0.0
    %2702 = vmatpush1.msra.mxu0 0.0
    %2703 = vmatprep.subr.mxu0 0.0
    %2704 = vmatpush1.msra.mxu0 0.0
    %2705 = vmatprep.subr.mxu0 0.0
    %2706 = vmatpush1.msra.mxu0 0.0
    %2707 = vmatprep.subr.mxu0 0.0
    %2708 = vmatpush1.msra.mxu0 0.0
    %2709 = vmatprep.subr.mxu0 0.0
    %2710 = vmatpush1.msra.mxu0 0.0
    %2711 = vmatprep.subr.mxu0 0.0
    %2712 = vmatpush1.msra.mxu0 0.0
    %2713 = vmatprep.subr.mxu0 0.0
    %2714 = vmatpush1.msra.mxu0 0.0
    %2715 = vmatprep.subr.mxu0 0.0
    %2716 = vmatpush1.msra.mxu0 0.0
    %2717 = vmatprep.subr.mxu0 0.0
    %2718 = vmatpush1.msra.mxu0 0.0
    %2719 = vmatprep.subr.mxu0 0.0
    %2720 = vmatpush1.msra.mxu0 0.0
    %2721 = vmatprep.subr.mxu0 0.0
    %2722 = vmatpush1.msra.mxu0 0.0
    %2723 = vmatprep.subr.mxu0 0.0
    %2724 = vmatpush1.msra.mxu0 0.0
    %2725 = vmatprep.subr.mxu0 0.0
    %2726 = vmatpush1.msra.mxu0 0.0
    %2727 = vmatprep.subr.mxu0 0.0
    %2728 = vmatpush1.msra.mxu0 0.0
    %2729 = vmatprep.subr.mxu0 0.0
    %2730 = vmatpush1.msra.mxu0 0.0
    %2731 = vmatprep.subr.mxu0 0.0
    %2732 = vmatpush1.msra.mxu0 0.0
    %2733 = vmatprep.subr.mxu0 0.0
    %2734 = vmatpush1.msra.mxu0 0.0
    %2735 = vmatprep.subr.mxu0 0.0
    %2736 = vmatpush1.msra.mxu0 0.0
    %2737 = vmatprep.subr.mxu0 0.0
    %2738 = vmatpush1.msra.mxu0 0.0
    %2739 = vmatprep.subr.mxu0 0.0
    %2740 = vmatpush1.msra.mxu0 0.0
    %2741 = vmatprep.subr.mxu0 0.0
    %2742 = vmatpush1.msra.mxu0 0.0
    %2743 = vmatprep.mubr.f32.mxu0 0.0
    %2744 = vmatmul.mubr.f32.gmra.mrb[0].mxu0 %v2677
    %v2745 = vpop.f32.mrb[0].mxu0
    %v2746 = vadd.f32 0.0, %v2745
    %v2747 = vpop.f32.mrb[0].mxu0
    %2748 = vdwg.mxu0
    %v2749 = vadd.f32 %v2675, %v2746
    %v2750 = vmul.f32 %v2749, 0.5
    %v2751 = vmul.f32 %v2750, 1.442695
    %v2752 = vpow.pop %v2751
    %s2753 = scalar_lea.vmem [#allocation11], 32
    %v2754 = vld [vmem:[%s2753] sm:$0xff]
    %2756 = vrot.lane.b32.xlu0 %v2752, 96
    %v2757 = vpop.permute.xlu0 %2756
    %v2759 = vmul.f32 %v2754, %v2757
    %v2760 = vadd.f32 %v2749, %v2759
    %p2761 = scmp.gt.s32.totalorder %s135, 4
    %2763 = vrot.lane.b32.xlu0 %v2760, 64
    %v2764 = vpop.permute.xlu0 %2763
    %2766 = vrot.lane.b32.xlu0 %v2752, 64
    %v2767 = vpop.permute.xlu0 %2766
    %v2769 = vsel %vm2049, %v2749, %v2764
    %v2770 = vsel %vm2338, %v2769, %v2767
    %s2771 = scalar_select %p2761, 1, 0
    %v2772 = vstv %s2771
    %vm2773 = vcmp.eq.s32.totalorder %v2772, 1
    %v2774 = vsel %vm2773, %v2770, 0.0
    %s2775 = scalar_lea.vmem [#allocation17], 32
    %2776 = vst [vmem:[%s2775] sm:$0xff] %v2774
    %2777 = vst.msk [vmem:[#allocation7] sm:$0xff] %vm217, %v2760
    %v2778 = vld [vmem:[#allocation7] sm:$0xff]
    %s2779 = scalar_lea.vmem [#allocation5], 40
    %v2780 = vld [vmem:[%s2779] sm:$0xff]
    %s2781 = scalar_lea.vmem [#allocation6], 16
    %v2782 = vld [vmem:[%s2781] sm:$0xff]
    %v2783 = vadd.f32 %v2780, %v2782
    %v2785 = vsel %vm217, %v2778, 0
    %2787 = vmatprep.subr.mxu0 0.0
    %2788 = vmatpush1.msra.mxu0 %v2235
    %2789 = vmatprep.subr.mxu0 0.0
    %2790 = vmatpush1.msra.mxu0 %v2236
    %2791 = vmatprep.subr.mxu0 0.0
    %2792 = vmatpush1.msra.mxu0 %v2237
    %2793 = vmatprep.subr.mxu0 0.0
    %2794 = vmatpush1.msra.mxu0 %v2238
    %2795 = vmatprep.subr.mxu0 0.0
    %2796 = vmatpush1.msra.mxu0 0.0
    %2797 = vmatprep.subr.mxu0 0.0
    %2798 = vmatpush1.msra.mxu0 0.0
    %2799 = vmatprep.subr.mxu0 0.0
    %2800 = vmatpush1.msra.mxu0 0.0
    %2801 = vmatprep.subr.mxu0 0.0
    %2802 = vmatpush1.msra.mxu0 0.0
    %2803 = vmatprep.subr.mxu0 0.0
    %2804 = vmatpush1.msra.mxu0 0.0
    %2805 = vmatprep.subr.mxu0 0.0
    %2806 = vmatpush1.msra.mxu0 0.0
    %2807 = vmatprep.subr.mxu0 0.0
    %2808 = vmatpush1.msra.mxu0 0.0
    %2809 = vmatprep.subr.mxu0 0.0
    %2810 = vmatpush1.msra.mxu0 0.0
    %2811 = vmatprep.subr.mxu0 0.0
    %2812 = vmatpush1.msra.mxu0 0.0
    %2813 = vmatprep.subr.mxu0 0.0
    %2814 = vmatpush1.msra.mxu0 0.0
    %2815 = vmatprep.subr.mxu0 0.0
    %2816 = vmatpush1.msra.mxu0 0.0
    %2817 = vmatprep.subr.mxu0 0.0
    %2818 = vmatpush1.msra.mxu0 0.0
    %2819 = vmatprep.subr.mxu0 0.0
    %2820 = vmatpush1.msra.mxu0 0.0
    %2821 = vmatprep.subr.mxu0 0.0
    %2822 = vmatpush1.msra.mxu0 0.0
    %2823 = vmatprep.subr.mxu0 0.0
    %2824 = vmatpush1.msra.mxu0 0.0
    %2825 = vmatprep.subr.mxu0 0.0
    %2826 = vmatpush1.msra.mxu0 0.0
    %2827 = vmatprep.subr.mxu0 0.0
    %2828 = vmatpush1.msra.mxu0 0.0
    %2829 = vmatprep.subr.mxu0 0.0
    %2830 = vmatpush1.msra.mxu0 0.0
    %2831 = vmatprep.subr.mxu0 0.0
    %2832 = vmatpush1.msra.mxu0 0.0
    %2833 = vmatprep.subr.mxu0 0.0
    %2834 = vmatpush1.msra.mxu0 0.0
    %2835 = vmatprep.subr.mxu0 0.0
    %2836 = vmatpush1.msra.mxu0 0.0
    %2837 = vmatprep.subr.mxu0 0.0
    %2838 = vmatpush1.msra.mxu0 0.0
    %2839 = vmatprep.subr.mxu0 0.0
    %2840 = vmatpush1.msra.mxu0 0.0
    %2841 = vmatprep.subr.mxu0 0.0
    %2842 = vmatpush1.msra.mxu0 0.0
    %2843 = vmatprep.subr.mxu0 0.0
    %2844 = vmatpush1.msra.mxu0 0.0
    %2845 = vmatprep.subr.mxu0 0.0
    %2846 = vmatpush1.msra.mxu0 0.0
    %2847 = vmatprep.subr.mxu0 0.0
    %2848 = vmatpush1.msra.mxu0 0.0
    %2849 = vmatprep.subr.mxu0 0.0
    %2850 = vmatpush1.msra.mxu0 0.0
    %2851 = vmatprep.mubr.f32.mxu0 0.0
    %2852 = vmatmul.mubr.f32.gmra.mrb[0].mxu0 %v2785
    %v2853 = vpop.f32.mrb[0].mxu0
    %v2854 = vadd.f32 0.0, %v2853
    %v2855 = vpop.f32.mrb[0].mxu0
    %2856 = vdwg.mxu0
    %v2857 = vadd.f32 %v2783, %v2854
    %v2858 = vmul.f32 %v2857, 0.5
    %v2859 = vmul.f32 %v2858, 1.442695
    %v2860 = vpow.pop %v2859
    %s2861 = scalar_lea.vmem [#allocation11], 40
    %v2862 = vld [vmem:[%s2861] sm:$0xff]
    %2864 = vrot.lane.b32.xlu0 %v2860, 96
    %v2865 = vpop.permute.xlu0 %2864
    %v2867 = vmul.f32 %v2862, %v2865
    %v2868 = vadd.f32 %v2857, %v2867
    %p2869 = scmp.gt.s32.totalorder %s135, 5
    %2871 = vrot.lane.b32.xlu0 %v2868, 64
    %v2872 = vpop.permute.xlu0 %2871
    %2874 = vrot.lane.b32.xlu0 %v2860, 64
    %v2875 = vpop.permute.xlu0 %2874
    %v2877 = vsel %vm2049, %v2857, %v2872
    %v2878 = vsel %vm2338, %v2877, %v2875
    %s2879 = scalar_select %p2869, 1, 0
    %v2880 = vstv %s2879
    %vm2881 = vcmp.eq.s32.totalorder %v2880, 1
    %v2882 = vsel %vm2881, %v2878, 0.0
    %s2883 = scalar_lea.vmem [#allocation17], 40
    %2884 = vst [vmem:[%s2883] sm:$0xff] %v2882
    %2885 = vst.msk [vmem:[#allocation7] sm:$0xff] %vm217, %v2868
    %v2886 = vld [vmem:[#allocation7] sm:$0xff]
    %s2887 = scalar_lea.vmem [#allocation5], 48
    %v2888 = vld [vmem:[%s2887] sm:$0xff]
    %s2889 = scalar_lea.vmem [#allocation6], 8
    %v2890 = vld [vmem:[%s2889] sm:$0xff]
    %v2891 = vadd.f32 %v2888, %v2890
    %v2893 = vsel %vm217, %v2886, 0
    %2895 = vmatprep.subr.mxu0 0.0
    %2896 = vmatpush1.msra.mxu0 %v2235
    %2897 = vmatprep.subr.mxu0 0.0
    %2898 = vmatpush1.msra.mxu0 %v2236
    %2899 = vmatprep.subr.mxu0 0.0
    %2900 = vmatpush1.msra.mxu0 %v2237
    %2901 = vmatprep.subr.mxu0 0.0
    %2902 = vmatpush1.msra.mxu0 %v2238
    %2903 = vmatprep.subr.mxu0 0.0
    %2904 = vmatpush1.msra.mxu0 0.0
    %2905 = vmatprep.subr.mxu0 0.0
    %2906 = vmatpush1.msra.mxu0 0.0
    %2907 = vmatprep.subr.mxu0 0.0
    %2908 = vmatpush1.msra.mxu0 0.0
    %2909 = vmatprep.subr.mxu0 0.0
    %2910 = vmatpush1.msra.mxu0 0.0
    %2911 = vmatprep.subr.mxu0 0.0
    %2912 = vmatpush1.msra.mxu0 0.0
    %2913 = vmatprep.subr.mxu0 0.0
    %2914 = vmatpush1.msra.mxu0 0.0
    %2915 = vmatprep.subr.mxu0 0.0
    %2916 = vmatpush1.msra.mxu0 0.0
    %2917 = vmatprep.subr.mxu0 0.0
    %2918 = vmatpush1.msra.mxu0 0.0
    %2919 = vmatprep.subr.mxu0 0.0
    %2920 = vmatpush1.msra.mxu0 0.0
    %2921 = vmatprep.subr.mxu0 0.0
    %2922 = vmatpush1.msra.mxu0 0.0
    %2923 = vmatprep.subr.mxu0 0.0
    %2924 = vmatpush1.msra.mxu0 0.0
    %2925 = vmatprep.subr.mxu0 0.0
    %2926 = vmatpush1.msra.mxu0 0.0
    %2927 = vmatprep.subr.mxu0 0.0
    %2928 = vmatpush1.msra.mxu0 0.0
    %2929 = vmatprep.subr.mxu0 0.0
    %2930 = vmatpush1.msra.mxu0 0.0
    %2931 = vmatprep.subr.mxu0 0.0
    %2932 = vmatpush1.msra.mxu0 0.0
    %2933 = vmatprep.subr.mxu0 0.0
    %2934 = vmatpush1.msra.mxu0 0.0
    %2935 = vmatprep.subr.mxu0 0.0
    %2936 = vmatpush1.msra.mxu0 0.0
    %2937 = vmatprep.subr.mxu0 0.0
    %2938 = vmatpush1.msra.mxu0 0.0
    %2939 = vmatprep.subr.mxu0 0.0
    %2940 = vmatpush1.msra.mxu0 0.0
    %2941 = vmatprep.subr.mxu0 0.0
    %2942 = vmatpush1.msra.mxu0 0.0
    %2943 = vmatprep.subr.mxu0 0.0
    %2944 = vmatpush1.msra.mxu0 0.0
    %2945 = vmatprep.subr.mxu0 0.0
    %2946 = vmatpush1.msra.mxu0 0.0
    %2947 = vmatprep.subr.mxu0 0.0
    %2948 = vmatpush1.msra.mxu0 0.0
    %2949 = vmatprep.subr.mxu0 0.0
    %2950 = vmatpush1.msra.mxu0 0.0
    %2951 = vmatprep.subr.mxu0 0.0
    %2952 = vmatpush1.msra.mxu0 0.0
    %2953 = vmatprep.subr.mxu0 0.0
    %2954 = vmatpush1.msra.mxu0 0.0
    %2955 = vmatprep.subr.mxu0 0.0
    %2956 = vmatpush1.msra.mxu0 0.0
    %2957 = vmatprep.subr.mxu0 0.0
    %2958 = vmatpush1.msra.mxu0 0.0
    %2959 = vmatprep.mubr.f32.mxu0 0.0
    %2960 = vmatmul.mubr.f32.gmra.mrb[0].mxu0 %v2893
    %v2961 = vpop.f32.mrb[0].mxu0
    %v2962 = vadd.f32 0.0, %v2961
    %v2963 = vpop.f32.mrb[0].mxu0
    %2964 = vdwg.mxu0
    %v2965 = vadd.f32 %v2891, %v2962
    %v2966 = vmul.f32 %v2965, 0.5
    %v2967 = vmul.f32 %v2966, 1.442695
    %v2968 = vpow.pop %v2967
    %s2969 = scalar_lea.vmem [#allocation11], 48
    %v2970 = vld [vmem:[%s2969] sm:$0xff]
    %2972 = vrot.lane.b32.xlu0 %v2968, 96
    %v2973 = vpop.permute.xlu0 %2972
    %v2975 = vmul.f32 %v2970, %v2973
    %v2976 = vadd.f32 %v2965, %v2975
    %p2977 = scmp.gt.s32.totalorder %s135, 6
    %2979 = vrot.lane.b32.xlu0 %v2976, 64
    %v2980 = vpop.permute.xlu0 %2979
    %2982 = vrot.lane.b32.xlu0 %v2968, 64
    %v2983 = vpop.permute.xlu0 %2982
    %v2985 = vsel %vm2049, %v2965, %v2980
    %v2986 = vsel %vm2338, %v2985, %v2983
    %s2987 = scalar_select %p2977, 1, 0
    %v2988 = vstv %s2987
    %vm2989 = vcmp.eq.s32.totalorder %v2988, 1
    %v2990 = vsel %vm2989, %v2986, 0.0
    %s2991 = scalar_lea.vmem [#allocation17], 48
    %2992 = vst [vmem:[%s2991] sm:$0xff] %v2990
    %2993 = vst.msk [vmem:[#allocation7] sm:$0xff] %vm217, %v2976
    %v2994 = vld [vmem:[#allocation7] sm:$0xff]
    %s2995 = scalar_lea.vmem [#allocation5], 56
    %v2996 = vld [vmem:[%s2995] sm:$0xff]
    %v2997 = vld [vmem:[#allocation6] sm:$0xff]
    %v2998 = vadd.f32 %v2996, %v2997
    %v3000 = vsel %vm217, %v2994, 0
    %3002 = vmatprep.subr.mxu0 0.0
    %3003 = vmatpush1.msra.mxu0 %v2235
    %3004 = vmatprep.subr.mxu0 0.0
    %3005 = vmatpush1.msra.mxu0 %v2236
    %3006 = vmatprep.subr.mxu0 0.0
    %3007 = vmatpush1.msra.mxu0 %v2237
    %3008 = vmatprep.subr.mxu0 0.0
    %3009 = vmatpush1.msra.mxu0 %v2238
    %3010 = vmatprep.subr.mxu0 0.0
    %3011 = vmatpush1.msra.mxu0 0.0
    %3012 = vmatprep.subr.mxu0 0.0
    %3013 = vmatpush1.msra.mxu0 0.0
    %3014 = vmatprep.subr.mxu0 0.0
    %3015 = vmatpush1.msra.mxu0 0.0
    %3016 = vmatprep.subr.mxu0 0.0
    %3017 = vmatpush1.msra.mxu0 0.0
    %3018 = vmatprep.subr.mxu0 0.0
    %3019 = vmatpush1.msra.mxu0 0.0
    %3020 = vmatprep.subr.mxu0 0.0
    %3021 = vmatpush1.msra.mxu0 0.0
    %3022 = vmatprep.subr.mxu0 0.0
    %3023 = vmatpush1.msra.mxu0 0.0
    %3024 = vmatprep.subr.mxu0 0.0
    %3025 = vmatpush1.msra.mxu0 0.0
    %3026 = vmatprep.subr.mxu0 0.0
    %3027 = vmatpush1.msra.mxu0 0.0
    %3028 = vmatprep.subr.mxu0 0.0
    %3029 = vmatpush1.msra.mxu0 0.0
    %3030 = vmatprep.subr.mxu0 0.0
    %3031 = vmatpush1.msra.mxu0 0.0
    %3032 = vmatprep.subr.mxu0 0.0
    %3033 = vmatpush1.msra.mxu0 0.0
    %3034 = vmatprep.subr.mxu0 0.0
    %3035 = vmatpush1.msra.mxu0 0.0
    %3036 = vmatprep.subr.mxu0 0.0
    %3037 = vmatpush1.msra.mxu0 0.0
    %3038 = vmatprep.subr.mxu0 0.0
    %3039 = vmatpush1.msra.mxu0 0.0
    %3040 = vmatprep.subr.mxu0 0.0
    %3041 = vmatpush1.msra.mxu0 0.0
    %3042 = vmatprep.subr.mxu0 0.0
    %3043 = vmatpush1.msra.mxu0 0.0
    %3044 = vmatprep.subr.mxu0 0.0
    %3045 = vmatpush1.msra.mxu0 0.0
    %3046 = vmatprep.subr.mxu0 0.0
    %3047 = vmatpush1.msra.mxu0 0.0
    %3048 = vmatprep.subr.mxu0 0.0
    %3049 = vmatpush1.msra.mxu0 0.0
    %3050 = vmatprep.subr.mxu0 0.0
    %3051 = vmatpush1.msra.mxu0 0.0
    %3052 = vmatprep.subr.mxu0 0.0
    %3053 = vmatpush1.msra.mxu0 0.0
    %3054 = vmatprep.subr.mxu0 0.0
    %3055 = vmatpush1.msra.mxu0 0.0
    %3056 = vmatprep.subr.mxu0 0.0
    %3057 = vmatpush1.msra.mxu0 0.0
    %3058 = vmatprep.subr.mxu0 0.0
    %3059 = vmatpush1.msra.mxu0 0.0
    %3060 = vmatprep.subr.mxu0 0.0
    %3061 = vmatpush1.msra.mxu0 0.0
    %3062 = vmatprep.subr.mxu0 0.0
    %3063 = vmatpush1.msra.mxu0 0.0
    %3064 = vmatprep.subr.mxu0 0.0
    %3065 = vmatpush1.msra.mxu0 0.0
    %3066 = vmatprep.mubr.f32.mxu0 0.0
    %3067 = vmatmul.mubr.f32.gmra.mrb[0].mxu0 %v3000
    %v3068 = vpop.f32.mrb[0].mxu0
    %v3069 = vadd.f32 0.0, %v3068
    %v3070 = vpop.f32.mrb[0].mxu0
    %3071 = vdwg.mxu0
    %v3072 = vadd.f32 %v2998, %v3069
    %v3073 = vmul.f32 %v3072, 0.5
    %v3074 = vmul.f32 %v3073, 1.442695
    %v3075 = vpow.pop %v3074
    %s3076 = scalar_lea.vmem [#allocation11], 56
    %v3077 = vld [vmem:[%s3076] sm:$0xff]
    %3079 = vrot.lane.b32.xlu0 %v3075, 96
    %v3080 = vpop.permute.xlu0 %3079
    %v3082 = vmul.f32 %v3077, %v3080
    %v3083 = vadd.f32 %v3072, %v3082
    %p3084 = scmp.gt.s32.totalorder %s135, 7
    %3086 = vrot.lane.b32.xlu0 %v3083, 64
    %v3087 = vpop.permute.xlu0 %3086
    %3089 = vrot.lane.b32.xlu0 %v3075, 64
    %v3090 = vpop.permute.xlu0 %3089
    %v3092 = vsel %vm2049, %v3072, %v3087
    %v3093 = vsel %vm2338, %v3092, %v3090
    %s3094 = scalar_select %p3084, 1, 0
    %v3095 = vstv %s3094
    %vm3096 = vcmp.eq.s32.totalorder %v3095, 1
    %v3097 = vsel %vm3096, %v3093, 0.0
    %s3098 = scalar_lea.vmem [#allocation17], 56
    %3099 = vst [vmem:[%s3098] sm:$0xff] %v3097
    %3100 = vst.msk [vmem:[#allocation7] sm:$0xff] %vm217, %v3083
    // Predicated region
    $region62: #{tpu_custom_call.1} parent=1 // pred_check
      _
    $region63: #{tpu_custom_call.1} parent=1 // pred_check_branch
      %3102 = sbr.rel (0) target = $region65
    $region64: #{tpu_custom_call.1} parent=1 // pred_region
      %s3104 = ssub.s32 1024, 1024
      %3105 = vsyncadd [#allocation10], %s3104
      %s3106 = sshll.u32 [#allocation17], 4
      %s3107 = int_to_ptr.vmem [resolvable:$true] %s3106
      %3112 = dma.vmem_to_hbm [thread:$0]  %s3107, 1024, %s10, [#allocation10], 128, 128, 8
    $region65: #{tpu_custom_call.1} parent=1 // pred_fallthru
      _
    // Predicated region
    $region66: #{tpu_custom_call.1} parent=1 // pred_check
      _
    $region67: #{tpu_custom_call.1} parent=1 // pred_check_branch
      %3114 = sbr.rel (0) target = $region69
    $region68: #{tpu_custom_call.1} parent=1 // pred_region
      %s3116 = ssub.s32 128, 128
      %3117 = vsyncadd [#allocation19], %s3116
      %s3119 = sshll.u32 [#allocation18], 4
      %s3120 = int_to_ptr.vmem [resolvable:$true] %s3119
      %3122 = dma.vmem_to_hbm [thread:$0]  %s3120, 128, %s11, [#allocation19]
    $region69: #{tpu_custom_call.1} parent=1 // pred_fallthru
      _
    // Predicated region
    $region70: #{tpu_custom_call.1} parent=1 // pred_check
      _
    $region71: #{tpu_custom_call.1} parent=1 // pred_check_branch
      %3124 = sbr.rel (0) target = $region73
    $region72: #{tpu_custom_call.1} parent=1 // pred_region
      %3125 = dma.done [#allocation10], 1024
    $region73: #{tpu_custom_call.1} parent=1 // pred_fallthru
      _
    // Predicated region
    $region74: #{tpu_custom_call.1} parent=1 // pred_check
      _
    $region75: #{tpu_custom_call.1} parent=1 // pred_check_branch
      %3127 = sbr.rel (0) target = $region77
    $region76: #{tpu_custom_call.1} parent=1 // pred_region
      %3128 = dma.done [#allocation19], 128
    $region77: #{tpu_custom_call.1} parent=1 // pred_fallthru
      _
    %3129 = vsyncpa [#allocation9], 1
    %3130 = vsyncpa [#allocation12], 1
    %3131 = vsyncpa [#allocation15], 1
    %3132 = vsyncpa [#allocation10], 1
    %3133 = vsyncpa [#allocation19], 1

</llo_original>
